<compile_context>
chip_gen: v7x
topology: tpu7x:2x2x1
jax: 0.10.0
libtpu: 0.0.40
codegen_flags: <defaults>
</compile_context>

<pallas_src>
import functools

import jax
import jax.numpy as jnp
from jax import lax
from jax.experimental import pallas as pl
from jax.experimental.pallas import tpu as pltpu


# --------------------------------------------------------------------------- #
# Kernels
# --------------------------------------------------------------------------- #
def _dot_nt_f32(a, b):
    # (M, C) x (K, C) -> (M, K), contracting the shared C axis, f32 accumulation.
    return lax.dot_general(
        a.astype(jnp.float32), b.astype(jnp.float32),
        dimension_numbers=(((1,), (1,)), ((), ())),
        preferred_element_type=jnp.float32)


def _single_chunk_kernel(x_ref, w_ref, b_ref, o_ref, *, inv_hw):
    # x_ref: (n_blk, C, HW)   feature slab for n_blk samples
    # w_ref: (K, C)           resident fc weight (nn.Linear layout)
    # b_ref: (1, K)           fc bias
    # o_ref: (n_blk, K)       sigmoid(fc(avg_pool(x)))
    pooled = jnp.sum(x_ref[...].astype(jnp.float32), axis=-1)         # (n_blk, C)
    logits = _dot_nt_f32(pooled, w_ref[...]) * inv_hw + b_ref[...]    # (n_blk, K)
    o_ref[...] = jax.nn.sigmoid(logits)


def _multi_chunk_kernel(x_ref, w_ref, b_ref, o_ref, acc_ref, *, c_block, inv_hw):
    # x_ref  : (n_blk, c_block, HW)  feature chunk for n_blk samples
    # w_ref  : (K, C)                resident fc weight
    # b_ref  : (1, K)                fc bias
    # o_ref  : (n_blk, K)            output slab
    # acc_ref: (n_blk, K) f32        running sum over channel chunks
    ci = pl.program_id(1)

    @pl.when(ci == 0)
    def _init():
        acc_ref[...] = jnp.zeros_like(acc_ref)

    pooled = jnp.sum(x_ref[...].astype(jnp.float32), axis=-1)         # (n_blk, c_block)
    start = pl.multiple_of(ci * c_block, 128)
    w_chunk = w_ref[:, pl.ds(start, c_block)]                         # (K, c_block)
    acc_ref[...] += _dot_nt_f32(pooled, w_chunk)                      # (n_blk, K)

    @pl.when(ci == pl.num_programs(1) - 1)
    def _finalize():
        o_ref[...] = jax.nn.sigmoid(acc_ref[...] * inv_hw + b_ref[...])


# --------------------------------------------------------------------------- #
# Block-size selection
# --------------------------------------------------------------------------- #
def _round_up(x, m):
    return ((x + m - 1) // m) * m


def _largest_divisor_leq(n, cap):
    best = 1
    for d in range(1, n + 1):
        if d > cap:
            break
        if n % d == 0:
            best = d
    return best


def _block_bytes(n_blk, c_blk, hw, itemsize):
    sub = max(1, 32 // itemsize)                  # sublane packing: 8/16/32
    return n_blk * _round_up(c_blk, sub) * _round_up(hw, 128) * itemsize


def _pick_c_block(c, hw, itemsize, budget):
    """Prefer full C; otherwise the largest halving that stays a multiple of 128."""
    c_block = c
    while (c_block % 2 == 0 and (c_block // 2) % 128 == 0
           and _block_bytes(1, c_block, hw, itemsize) > budget):
        c_block //= 2
    return c_block


def _pick_n_block(n, c_block, hw, itemsize, budget):
    cap = max(1, budget // max(1, _block_bytes(1, c_block, hw, itemsize)))
    return _largest_divisor_leq(n, cap)


# --------------------------------------------------------------------------- #
# Wrapper
# --------------------------------------------------------------------------- #
def classifier_forward(feature, weight, bias, *, c_block=None, n_block=None,
                       target_block_bytes=8 * 1024 * 1024,
                       vmem_limit_bytes=None):
    """feature: (N, C, H, W) NCHW (f32 or bf16); weight: (K, C); bias: (K,).

    Returns (sigmoid(fc(global_avg_pool(feature))), {})  -- eval-mode forward.
    """
    n, c, h, w = feature.shape
    k, c_w = weight.shape
    assert c_w == c, "fc weight in_features must match feature channels"
    assert c == 2048, "ClassifierModule.fc expects 2048 input channels"
    assert bias.shape == (k,)
    hw = h * w
    itemsize = jnp.dtype(feature.dtype).itemsize

    if c_block is None:
        c_block = _pick_c_block(c, hw, itemsize, target_block_bytes)
    assert c % c_block == 0 and (c_block == c or c_block % 128 == 0), \
        "c_block must divide C and be a multiple of 128 (or equal C)"
    if n_block is None:
        n_block = _pick_n_block(n, c_block, hw, itemsize, target_block_bytes)
    assert n % n_block == 0, "n_block must divide the batch size"
    n_chunks = c // c_block

    if vmem_limit_bytes is None:
        feat_block = _block_bytes(n_block, c_block, hw, itemsize)
        w_bytes = (_round_up(k, 8) * _round_up(c, 128)
                   * jnp.dtype(weight.dtype).itemsize)
        # 2x feature (double buffer) + resident weight + headroom for bias/out/acc.
        vmem_limit_bytes = min(64 * 1024 * 1024,
                               max(32 * 1024 * 1024,
                                   2 * feat_block + w_bytes + 4 * 1024 * 1024))

    x = feature.reshape(n, c, hw)                     # free reshape, keeps NCHW order
    b_row = bias.reshape(1, k).astype(jnp.float32)
    inv_hw = 1.0 / float(hw)

    cost = pl.CostEstimate(
        flops=2 * n * k * c + n * c * hw,             # matmul + pooling adds
        transcendentals=n * k,                        # sigmoid
        bytes_accessed=int(n * c * hw * itemsize      # feature (read once)
                           + weight.size * jnp.dtype(weight.dtype).itemsize
                           + k * 4 + n * k * 4),
    )

    if n_chunks == 1:
        kernel = functools.partial(_single_chunk_kernel, inv_hw=inv_hw)
        grid = (n // n_block,)
        in_specs = [
            pl.BlockSpec((n_block, c, hw), lambda ni: (ni, 0, 0)),
            pl.BlockSpec((k, c), lambda ni: (0, 0)),        # resident weight
            pl.BlockSpec((1, k), lambda ni: (0, 0)),        # resident bias
        ]
        out_specs = pl.BlockSpec((n_block, k), lambda ni: (ni, 0))
        scratch = []
        dims = ("parallel",)
    else:
        kernel = functools.partial(_multi_chunk_kernel, c_block=c_block,
                                   inv_hw=inv_hw)
        grid = (n // n_block, n_chunks)
        in_specs = [
            pl.BlockSpec((n_block, c_block, hw), lambda ni, ci: (ni, ci, 0)),
            pl.BlockSpec((k, c), lambda ni, ci: (0, 0)),    # resident weight
            pl.BlockSpec((1, k), lambda ni, ci: (0, 0)),    # resident bias
        ]
        out_specs = pl.BlockSpec((n_block, k), lambda ni, ci: (ni, 0))
        scratch = [pltpu.VMEM((n_block, k), jnp.float32)]
        dims = ("parallel", "arbitrary")

    out = pl.pallas_call(
        kernel,
        out_shape=jax.ShapeDtypeStruct((n, k), jnp.float32),
        grid_spec=pltpu.PrefetchScalarGridSpec(
            num_scalar_prefetch=0,
            grid=grid,
            in_specs=in_specs,
            out_specs=out_specs,
            scratch_shapes=scratch,
        ),
        compiler_params=pltpu.CompilerParams(
            dimension_semantics=dims,
            vmem_limit_bytes=int(vmem_limit_bytes),
        ),
        cost_estimate=cost,
    )(x, weight, b_row)

    return out, {}                                     # (output, classifier_losses)


def reference_forward(feature, weight, bias):
    pooled = jnp.mean(feature.astype(jnp.float32), axis=(2, 3))
    logits = pooled @ weight.astype(jnp.float32).T + bias
    return jax.nn.sigmoid(logits)


if __name__ == "__main__":
    key = jax.random.PRNGKey(0)
    k_feat, k_w, k_b = jax.random.split(key, 3)

    N, C, H, W = 2, 2048, 8, 8        # C fixed at 2048 by the module's fc layer
    NUM_CLASSES = 8

    feature = jax.random.normal(k_feat, (N, C, H, W), dtype=jnp.float32)
    # Deterministic nn.Linear-style params: (K, C) weight and (K,) bias.
    fc_weight = jax.random.normal(k_w, (NUM_CLASSES, C), dtype=jnp.float32) * 0.02
    fc_bias = jax.random.normal(k_b, (NUM_CLASSES,), dtype=jnp.float32) * 0.02

    ref = reference_forward(feature, fc_weight, fc_bias)

    # 1) Default path: full-C single chunk, sample-batched grid, resident weight.
    out, losses = classifier_forward(feature, fc_weight, fc_bias)
    out = jax.block_until_ready(out)
    assert out.shape == (N, NUM_CLASSES)
    assert isinstance(losses, dict) and not losses
    assert jnp.allclose(out, ref, atol=1e-4, rtol=1e-4)

    # 2) Forced channel chunking: exercises the multi-chunk accumulator path.
    out_tiled, _ = classifier_forward(feature, fc_weight, fc_bias, c_block=256)
    out_tiled = jax.block_until_ready(out_tiled)
    assert jnp.allclose(out_tiled, ref, atol=1e-4, rtol=1e-4)

    # 3) bf16 feature/weight: HBM bytes halved, f32 accumulation kept in-kernel.
    out_bf16, _ = classifier_forward(feature.astype(jnp.bfloat16),
                                     fc_weight.astype(jnp.bfloat16), fc_bias)
    out_bf16 = jax.block_until_ready(out_bf16)
    assert jnp.allclose(out_bf16, ref, atol=1e-2, rtol=1e-2)

    print("KERNEL_OK")
</pallas_src>

<mosaic_0001>
module attributes {stable_mosaic.version = 11 : i64} {
  func.func @_single_chunk_kernel(%arg0: i32, %arg1: memref<2x2048x64xf32, #tpu.memory_space<vmem>>, %arg2: memref<8x2048xf32, #tpu.memory_space<vmem>>, %arg3: memref<1x8xf32, #tpu.memory_space<vmem>>, %arg4: memref<2x8xf32, #tpu.memory_space<vmem>>) attributes {dimension_semantics = [#tpu.dimension_semantics<parallel>], iteration_bounds = array<i64: 1>, scalar_prefetch = 0 : i64, scratch_operands = 0 : i64, tpu.core_type = #tpu.core_type<tc>, window_params = [{transform_indices = @transform_0, window_bounds = array<i64: 2, 2048, 64>}, {pipeline_mode = #tpu.pipeline_mode<synchronous>, transform_indices = @transform_1, window_bounds = array<i64: 8, 2048>}, {pipeline_mode = #tpu.pipeline_mode<synchronous>, transform_indices = @transform_2, window_bounds = array<i64: 1, 8>}, {transform_indices = @transform_3, window_bounds = array<i64: 2, 8>}]} {
    %c0 = arith.constant 0 : index
    %c0_0 = arith.constant 0 : index
    %c0_1 = arith.constant 0 : index
    %0 = vector.load %arg1[%c0, %c0_0, %c0_1] : memref<2x2048x64xf32, #tpu.memory_space<vmem>>, vector<2x2048x64xf32>
    %cst = arith.constant dense<0.000000e+00> : vector<2x2048xf32>
    %1 = vector.multi_reduction <add>, %0, %cst [2] : vector<2x2048x64xf32> to vector<2x2048xf32>
    %c0_2 = arith.constant 0 : index
    %c0_3 = arith.constant 0 : index
    %2 = vector.load %arg2[%c0_2, %c0_3] : memref<8x2048xf32, #tpu.memory_space<vmem>>, vector<8x2048xf32>
    %cst_4 = arith.constant dense<0.000000e+00> : vector<2x8xf32>
    %3 = tpu.matmul %1, %2, %cst_4 {dimension_numbers = #tpu.dot_dimension_numbers<[1], [1], [0], [0], [0, 0, 1, 0], [], []>} : vector<2x2048xf32>, vector<8x2048xf32>, vector<2x8xf32> -> vector<2x8xf32>
    %cst_5 = arith.constant 1.562500e-02 : f32
    %4 = vector.broadcast %cst_5 : f32 to vector<2x8xf32>
    %5 = arith.mulf %3, %4 : vector<2x8xf32>
    %c0_6 = arith.constant 0 : index
    %c0_7 = arith.constant 0 : index
    %6 = vector.load %arg3[%c0_6, %c0_7] : memref<1x8xf32, #tpu.memory_space<vmem>>, vector<1x8xf32>
    %7 = vector.broadcast %6 : vector<1x8xf32> to vector<2x8xf32>
    %8 = arith.addf %5, %7 : vector<2x8xf32>
    %9 = arith.negf %8 : vector<2x8xf32>
    %10 = math.exp %9 : vector<2x8xf32>
    %cst_8 = arith.constant 1.000000e+00 : f32
    %11 = vector.broadcast %cst_8 : f32 to vector<2x8xf32>
    %12 = arith.addf %11, %10 : vector<2x8xf32>
    %13 = arith.divf %11, %12 : vector<2x8xf32>
    %c0_9 = arith.constant 0 : index
    %c0_10 = arith.constant 0 : index
    %14 = vector.load %arg4[%c0_9, %c0_10] : memref<2x8xf32, #tpu.memory_space<vmem>>, vector<2x8xf32>
    tpu.vector_store %arg4[%c0_9, %c0_10], %13 {strides = array<i32>} : memref<2x8xf32, #tpu.memory_space<vmem>>, vector<2x8xf32>,
    return
  }
  func.func @transform_0(%arg0: i32) -> (i32, i32, i32) {
    %c0_i32 = arith.constant 0 : i32
    %c0_i32_0 = arith.constant 0 : i32
    %c0_i32_1 = arith.constant 0 : i32
    return %arg0, %c0_i32, %c0_i32_0 : i32, i32, i32
  }
  func.func @transform_1(%arg0: i32) -> (i32, i32) {
    %c0_i32 = arith.constant 0 : i32
    %c0_i32_0 = arith.constant 0 : i32
    %c0_i32_1 = arith.constant 0 : i32
    return %c0_i32, %c0_i32_0 : i32, i32
  }
  func.func @transform_2(%arg0: i32) -> (i32, i32) {
    %c0_i32 = arith.constant 0 : i32
    %c0_i32_0 = arith.constant 0 : i32
    %c0_i32_1 = arith.constant 0 : i32
    return %c0_i32, %c0_i32_0 : i32, i32
  }
  func.func @transform_3(%arg0: i32) -> (i32, i32) {
    %c0_i32 = arith.constant 0 : i32
    %c0_i32_0 = arith.constant 0 : i32
    return %arg0, %c0_i32 : i32, i32
  }
}

</mosaic_0001>

<llo_original>
// kernel: tpu_custom_call.1
$region0: #{tpu_custom_call.1}
  #allocation0 [shape = 'u32[]', space=smem, size = 0x4, offset = 0x4, fixed_abs, tag = 'smem constant byte address 0x4 - core index']
  #allocation1 [shape = 'u32[144,128]{1,0:T(1,128)}', space=vmem, size = 0x12000, scoped, tag = 'internal scratch']
  %s0 = inlined_call_operand.vmem [shape: f32[2,2048,64], index: 0, kind: input, shape index: {}]
  %s1 = inlined_call_operand.vmem [shape: f32[8,2048], index: 1, kind: input, shape index: {}]
  %s2 = inlined_call_operand.vmem [shape: f32[1,8], index: 2, kind: input, shape index: {}]
  %s3 = inlined_call_operand.hbm [shape: f32[2,8], index: 3, kind: output, shape index: {}]
  %s4 = sld [smem:[#allocation0]]
  $region22: #{tpu_custom_call.1} parent=0
    _
  %s6 = ssub.s32 1, %s4
  %s7 = scalar_select 0, %s6, %s4
  $region1: #{tpu_custom_call.1} parent=0
    #allocation2 [shape = 'u8[1024]{0}', space=vmem, size = 0x400, scoped, tag = 'output window, operand 0, single buffered']
    #allocation3 [shape = 's32[1]{0}', space=sflag, size = 0x4, scoped, tag = 'scoped memory for tpu_custom_call.1']
    %8 = vsyncpa [#allocation3], 0
    // Predicated region
    $region2: #{tpu_custom_call.1} parent=1 // pred_check
      _
    $region3: #{tpu_custom_call.1} parent=1 // pred_check_branch
      %10 = sbr.rel (0) target = $region5
    $region4: #{tpu_custom_call.1} parent=1 // pred_region
      _
    $region5: #{tpu_custom_call.1} parent=1 // pred_fallthru
      _
    // Predicated region
    $region6: #{tpu_custom_call.1} parent=1 // pred_check
      _
    $region7: #{tpu_custom_call.1} parent=1 // pred_check_branch
      %12 = sbr.rel (0) target = $region9
    $region8: #{tpu_custom_call.1} parent=1 // pred_region
      _
    $region9: #{tpu_custom_call.1} parent=1 // pred_fallthru
      _
    // Predicated region
    $region10: #{tpu_custom_call.1} parent=1 // pred_check
      _
    $region11: #{tpu_custom_call.1} parent=1 // pred_check_branch
      %14 = sbr.rel (0) target = $region13
    $region12: #{tpu_custom_call.1} parent=1 // pred_region
      _
    $region13: #{tpu_custom_call.1} parent=1 // pred_fallthru
      _
    %v15 = vld [vmem:[%s0] sm:$0xff]
    %v16 = vld [vmem:[%s0 + $0x8] sm:$0xff]
    %v17 = vld [vmem:[%s0 + $0x10] sm:$0xff]
    %v18 = vld [vmem:[%s0 + $0x18] sm:$0xff]
    %v19 = vld [vmem:[%s0 + $0x20] sm:$0xff]
    %v20 = vld [vmem:[%s0 + $0x28] sm:$0xff]
    %v21 = vld [vmem:[%s0 + $0x30] sm:$0xff]
    %v22 = vld [vmem:[%s0 + $0x38] sm:$0xff]
    %v23 = vld [vmem:[%s0 + $0x40] sm:$0xff]
    %v24 = vld [vmem:[%s0 + $0x48] sm:$0xff]
    %v25 = vld [vmem:[%s0 + $0x50] sm:$0xff]
    %v26 = vld [vmem:[%s0 + $0x58] sm:$0xff]
    %v27 = vld [vmem:[%s0 + $0x60] sm:$0xff]
    %v28 = vld [vmem:[%s0 + $0x68] sm:$0xff]
    %v29 = vld [vmem:[%s0 + $0x70] sm:$0xff]
    %v30 = vld [vmem:[%s0 + $0x78] sm:$0xff]
    %v31 = vld [vmem:[%s0 + $0x80] sm:$0xff]
    %v32 = vld [vmem:[%s0 + $0x88] sm:$0xff]
    %v33 = vld [vmem:[%s0 + $0x90] sm:$0xff]
    %v34 = vld [vmem:[%s0 + $0x98] sm:$0xff]
    %v35 = vld [vmem:[%s0 + $0xa0] sm:$0xff]
    %v36 = vld [vmem:[%s0 + $0xa8] sm:$0xff]
    %v37 = vld [vmem:[%s0 + $0xb0] sm:$0xff]
    %v38 = vld [vmem:[%s0 + $0xb8] sm:$0xff]
    %v39 = vld [vmem:[%s0 + $0xc0] sm:$0xff]
    %v40 = vld [vmem:[%s0 + $0xc8] sm:$0xff]
    %v41 = vld [vmem:[%s0 + $0xd0] sm:$0xff]
    %v42 = vld [vmem:[%s0 + $0xd8] sm:$0xff]
    %v43 = vld [vmem:[%s0 + $0xe0] sm:$0xff]
    %v44 = vld [vmem:[%s0 + $0xe8] sm:$0xff]
    %v45 = vld [vmem:[%s0 + $0xf0] sm:$0xff]
    %v46 = vld [vmem:[%s0 + $0xf8] sm:$0xff]
    %v47 = vld [vmem:[%s0 + $0x100] sm:$0xff]
    %v48 = vld [vmem:[%s0 + $0x108] sm:$0xff]
    %v49 = vld [vmem:[%s0 + $0x110] sm:$0xff]
    %v50 = vld [vmem:[%s0 + $0x118] sm:$0xff]
    %v51 = vld [vmem:[%s0 + $0x120] sm:$0xff]
    %v52 = vld [vmem:[%s0 + $0x128] sm:$0xff]
    %v53 = vld [vmem:[%s0 + $0x130] sm:$0xff]
    %v54 = vld [vmem:[%s0 + $0x138] sm:$0xff]
    %v55 = vld [vmem:[%s0 + $0x140] sm:$0xff]
    %v56 = vld [vmem:[%s0 + $0x148] sm:$0xff]
    %v57 = vld [vmem:[%s0 + $0x150] sm:$0xff]
    %v58 = vld [vmem:[%s0 + $0x158] sm:$0xff]
    %v59 = vld [vmem:[%s0 + $0x160] sm:$0xff]
    %v60 = vld [vmem:[%s0 + $0x168] sm:$0xff]
    %v61 = vld [vmem:[%s0 + $0x170] sm:$0xff]
    %v62 = vld [vmem:[%s0 + $0x178] sm:$0xff]
    %v63 = vld [vmem:[%s0 + $0x180] sm:$0xff]
    %v64 = vld [vmem:[%s0 + $0x188] sm:$0xff]
    %v65 = vld [vmem:[%s0 + $0x190] sm:$0xff]
    %v66 = vld [vmem:[%s0 + $0x198] sm:$0xff]
    %v67 = vld [vmem:[%s0 + $0x1a0] sm:$0xff]
    %v68 = vld [vmem:[%s0 + $0x1a8] sm:$0xff]
    %v69 = vld [vmem:[%s0 + $0x1b0] sm:$0xff]
    %v70 = vld [vmem:[%s0 + $0x1b8] sm:$0xff]
    %v71 = vld [vmem:[%s0 + $0x1c0] sm:$0xff]
    %v72 = vld [vmem:[%s0 + $0x1c8] sm:$0xff]
    %v73 = vld [vmem:[%s0 + $0x1d0] sm:$0xff]
    %v74 = vld [vmem:[%s0 + $0x1d8] sm:$0xff]
    %v75 = vld [vmem:[%s0 + $0x1e0] sm:$0xff]
    %v76 = vld [vmem:[%s0 + $0x1e8] sm:$0xff]
    %v77 = vld [vmem:[%s0 + $0x1f0] sm:$0xff]
    %v78 = vld [vmem:[%s0 + $0x1f8] sm:$0xff]
    %v79 = vld [vmem:[%s0 + $0x200] sm:$0xff]
    %v80 = vld [vmem:[%s0 + $0x208] sm:$0xff]
    %v81 = vld [vmem:[%s0 + $0x210] sm:$0xff]
    %v82 = vld [vmem:[%s0 + $0x218] sm:$0xff]
    %v83 = vld [vmem:[%s0 + $0x220] sm:$0xff]
    %v84 = vld [vmem:[%s0 + $0x228] sm:$0xff]
    %v85 = vld [vmem:[%s0 + $0x230] sm:$0xff]
    %v86 = vld [vmem:[%s0 + $0x238] sm:$0xff]
    %v87 = vld [vmem:[%s0 + $0x240] sm:$0xff]
    %v88 = vld [vmem:[%s0 + $0x248] sm:$0xff]
    %v89 = vld [vmem:[%s0 + $0x250] sm:$0xff]
    %v90 = vld [vmem:[%s0 + $0x258] sm:$0xff]
    %v91 = vld [vmem:[%s0 + $0x260] sm:$0xff]
    %v92 = vld [vmem:[%s0 + $0x268] sm:$0xff]
    %v93 = vld [vmem:[%s0 + $0x270] sm:$0xff]
    %v94 = vld [vmem:[%s0 + $0x278] sm:$0xff]
    %v95 = vld [vmem:[%s0 + $0x280] sm:$0xff]
    %v96 = vld [vmem:[%s0 + $0x288] sm:$0xff]
    %v97 = vld [vmem:[%s0 + $0x290] sm:$0xff]
    %v98 = vld [vmem:[%s0 + $0x298] sm:$0xff]
    %v99 = vld [vmem:[%s0 + $0x2a0] sm:$0xff]
    %v100 = vld [vmem:[%s0 + $0x2a8] sm:$0xff]
    %v101 = vld [vmem:[%s0 + $0x2b0] sm:$0xff]
    %v102 = vld [vmem:[%s0 + $0x2b8] sm:$0xff]
    %v103 = vld [vmem:[%s0 + $0x2c0] sm:$0xff]
    %v104 = vld [vmem:[%s0 + $0x2c8] sm:$0xff]
    %v105 = vld [vmem:[%s0 + $0x2d0] sm:$0xff]
    %v106 = vld [vmem:[%s0 + $0x2d8] sm:$0xff]
    %v107 = vld [vmem:[%s0 + $0x2e0] sm:$0xff]
    %v108 = vld [vmem:[%s0 + $0x2e8] sm:$0xff]
    %v109 = vld [vmem:[%s0 + $0x2f0] sm:$0xff]
    %v110 = vld [vmem:[%s0 + $0x2f8] sm:$0xff]
    %v111 = vld [vmem:[%s0 + $0x300] sm:$0xff]
    %v112 = vld [vmem:[%s0 + $0x308] sm:$0xff]
    %v113 = vld [vmem:[%s0 + $0x310] sm:$0xff]
    %v114 = vld [vmem:[%s0 + $0x318] sm:$0xff]
    %v115 = vld [vmem:[%s0 + $0x320] sm:$0xff]
    %v116 = vld [vmem:[%s0 + $0x328] sm:$0xff]
    %v117 = vld [vmem:[%s0 + $0x330] sm:$0xff]
    %v118 = vld [vmem:[%s0 + $0x338] sm:$0xff]
    %v119 = vld [vmem:[%s0 + $0x340] sm:$0xff]
    %v120 = vld [vmem:[%s0 + $0x348] sm:$0xff]
    %v121 = vld [vmem:[%s0 + $0x350] sm:$0xff]
    %v122 = vld [vmem:[%s0 + $0x358] sm:$0xff]
    %v123 = vld [vmem:[%s0 + $0x360] sm:$0xff]
    %v124 = vld [vmem:[%s0 + $0x368] sm:$0xff]
    %v125 = vld [vmem:[%s0 + $0x370] sm:$0xff]
    %v126 = vld [vmem:[%s0 + $0x378] sm:$0xff]
    %v127 = vld [vmem:[%s0 + $0x380] sm:$0xff]
    %v128 = vld [vmem:[%s0 + $0x388] sm:$0xff]
    %v129 = vld [vmem:[%s0 + $0x390] sm:$0xff]
    %v130 = vld [vmem:[%s0 + $0x398] sm:$0xff]
    %v131 = vld [vmem:[%s0 + $0x3a0] sm:$0xff]
    %v132 = vld [vmem:[%s0 + $0x3a8] sm:$0xff]
    %v133 = vld [vmem:[%s0 + $0x3b0] sm:$0xff]
    %v134 = vld [vmem:[%s0 + $0x3b8] sm:$0xff]
    %v135 = vld [vmem:[%s0 + $0x3c0] sm:$0xff]
    %v136 = vld [vmem:[%s0 + $0x3c8] sm:$0xff]
    %v137 = vld [vmem:[%s0 + $0x3d0] sm:$0xff]
    %v138 = vld [vmem:[%s0 + $0x3d8] sm:$0xff]
    %v139 = vld [vmem:[%s0 + $0x3e0] sm:$0xff]
    %v140 = vld [vmem:[%s0 + $0x3e8] sm:$0xff]
    %v141 = vld [vmem:[%s0 + $0x3f0] sm:$0xff]
    %v142 = vld [vmem:[%s0 + $0x3f8] sm:$0xff]
    %v143 = vld [vmem:[%s0 + $0x400] sm:$0xff]
    %v144 = vld [vmem:[%s0 + $0x408] sm:$0xff]
    %v145 = vld [vmem:[%s0 + $0x410] sm:$0xff]
    %v146 = vld [vmem:[%s0 + $0x418] sm:$0xff]
    %v147 = vld [vmem:[%s0 + $0x420] sm:$0xff]
    %v148 = vld [vmem:[%s0 + $0x428] sm:$0xff]
    %v149 = vld [vmem:[%s0 + $0x430] sm:$0xff]
    %v150 = vld [vmem:[%s0 + $0x438] sm:$0xff]
    %v151 = vld [vmem:[%s0 + $0x440] sm:$0xff]
    %v152 = vld [vmem:[%s0 + $0x448] sm:$0xff]
    %v153 = vld [vmem:[%s0 + $0x450] sm:$0xff]
    %v154 = vld [vmem:[%s0 + $0x458] sm:$0xff]
    %v155 = vld [vmem:[%s0 + $0x460] sm:$0xff]
    %v156 = vld [vmem:[%s0 + $0x468] sm:$0xff]
    %v157 = vld [vmem:[%s0 + $0x470] sm:$0xff]
    %v158 = vld [vmem:[%s0 + $0x478] sm:$0xff]
    %v159 = vld [vmem:[%s0 + $0x480] sm:$0xff]
    %v160 = vld [vmem:[%s0 + $0x488] sm:$0xff]
    %v161 = vld [vmem:[%s0 + $0x490] sm:$0xff]
    %v162 = vld [vmem:[%s0 + $0x498] sm:$0xff]
    %v163 = vld [vmem:[%s0 + $0x4a0] sm:$0xff]
    %v164 = vld [vmem:[%s0 + $0x4a8] sm:$0xff]
    %v165 = vld [vmem:[%s0 + $0x4b0] sm:$0xff]
    %v166 = vld [vmem:[%s0 + $0x4b8] sm:$0xff]
    %v167 = vld [vmem:[%s0 + $0x4c0] sm:$0xff]
    %v168 = vld [vmem:[%s0 + $0x4c8] sm:$0xff]
    %v169 = vld [vmem:[%s0 + $0x4d0] sm:$0xff]
    %v170 = vld [vmem:[%s0 + $0x4d8] sm:$0xff]
    %v171 = vld [vmem:[%s0 + $0x4e0] sm:$0xff]
    %v172 = vld [vmem:[%s0 + $0x4e8] sm:$0xff]
    %v173 = vld [vmem:[%s0 + $0x4f0] sm:$0xff]
    %v174 = vld [vmem:[%s0 + $0x4f8] sm:$0xff]
    %v175 = vld [vmem:[%s0 + $0x500] sm:$0xff]
    %v176 = vld [vmem:[%s0 + $0x508] sm:$0xff]
    %v177 = vld [vmem:[%s0 + $0x510] sm:$0xff]
    %v178 = vld [vmem:[%s0 + $0x518] sm:$0xff]
    %v179 = vld [vmem:[%s0 + $0x520] sm:$0xff]
    %v180 = vld [vmem:[%s0 + $0x528] sm:$0xff]
    %v181 = vld [vmem:[%s0 + $0x530] sm:$0xff]
    %v182 = vld [vmem:[%s0 + $0x538] sm:$0xff]
    %v183 = vld [vmem:[%s0 + $0x540] sm:$0xff]
    %v184 = vld [vmem:[%s0 + $0x548] sm:$0xff]
    %v185 = vld [vmem:[%s0 + $0x550] sm:$0xff]
    %v186 = vld [vmem:[%s0 + $0x558] sm:$0xff]
    %v187 = vld [vmem:[%s0 + $0x560] sm:$0xff]
    %v188 = vld [vmem:[%s0 + $0x568] sm:$0xff]
    %v189 = vld [vmem:[%s0 + $0x570] sm:$0xff]
    %v190 = vld [vmem:[%s0 + $0x578] sm:$0xff]
    %v191 = vld [vmem:[%s0 + $0x580] sm:$0xff]
    %v192 = vld [vmem:[%s0 + $0x588] sm:$0xff]
    %v193 = vld [vmem:[%s0 + $0x590] sm:$0xff]
    %v194 = vld [vmem:[%s0 + $0x598] sm:$0xff]
    %v195 = vld [vmem:[%s0 + $0x5a0] sm:$0xff]
    %v196 = vld [vmem:[%s0 + $0x5a8] sm:$0xff]
    %v197 = vld [vmem:[%s0 + $0x5b0] sm:$0xff]
    %v198 = vld [vmem:[%s0 + $0x5b8] sm:$0xff]
    %v199 = vld [vmem:[%s0 + $0x5c0] sm:$0xff]
    %v200 = vld [vmem:[%s0 + $0x5c8] sm:$0xff]
    %v201 = vld [vmem:[%s0 + $0x5d0] sm:$0xff]
    %v202 = vld [vmem:[%s0 + $0x5d8] sm:$0xff]
    %v203 = vld [vmem:[%s0 + $0x5e0] sm:$0xff]
    %v204 = vld [vmem:[%s0 + $0x5e8] sm:$0xff]
    %v205 = vld [vmem:[%s0 + $0x5f0] sm:$0xff]
    %v206 = vld [vmem:[%s0 + $0x5f8] sm:$0xff]
    %v207 = vld [vmem:[%s0 + $0x600] sm:$0xff]
    %v208 = vld [vmem:[%s0 + $0x608] sm:$0xff]
    %v209 = vld [vmem:[%s0 + $0x610] sm:$0xff]
    %v210 = vld [vmem:[%s0 + $0x618] sm:$0xff]
    %v211 = vld [vmem:[%s0 + $0x620] sm:$0xff]
    %v212 = vld [vmem:[%s0 + $0x628] sm:$0xff]
    %v213 = vld [vmem:[%s0 + $0x630] sm:$0xff]
    %v214 = vld [vmem:[%s0 + $0x638] sm:$0xff]
    %v215 = vld [vmem:[%s0 + $0x640] sm:$0xff]
    %v216 = vld [vmem:[%s0 + $0x648] sm:$0xff]
    %v217 = vld [vmem:[%s0 + $0x650] sm:$0xff]
    %v218 = vld [vmem:[%s0 + $0x658] sm:$0xff]
    %v219 = vld [vmem:[%s0 + $0x660] sm:$0xff]
    %v220 = vld [vmem:[%s0 + $0x668] sm:$0xff]
    %v221 = vld [vmem:[%s0 + $0x670] sm:$0xff]
    %v222 = vld [vmem:[%s0 + $0x678] sm:$0xff]
    %v223 = vld [vmem:[%s0 + $0x680] sm:$0xff]
    %v224 = vld [vmem:[%s0 + $0x688] sm:$0xff]
    %v225 = vld [vmem:[%s0 + $0x690] sm:$0xff]
    %v226 = vld [vmem:[%s0 + $0x698] sm:$0xff]
    %v227 = vld [vmem:[%s0 + $0x6a0] sm:$0xff]
    %v228 = vld [vmem:[%s0 + $0x6a8] sm:$0xff]
    %v229 = vld [vmem:[%s0 + $0x6b0] sm:$0xff]
    %v230 = vld [vmem:[%s0 + $0x6b8] sm:$0xff]
    %v231 = vld [vmem:[%s0 + $0x6c0] sm:$0xff]
    %v232 = vld [vmem:[%s0 + $0x6c8] sm:$0xff]
    %v233 = vld [vmem:[%s0 + $0x6d0] sm:$0xff]
    %v234 = vld [vmem:[%s0 + $0x6d8] sm:$0xff]
    %v235 = vld [vmem:[%s0 + $0x6e0] sm:$0xff]
    %v236 = vld [vmem:[%s0 + $0x6e8] sm:$0xff]
    %v237 = vld [vmem:[%s0 + $0x6f0] sm:$0xff]
    %v238 = vld [vmem:[%s0 + $0x6f8] sm:$0xff]
    %v239 = vld [vmem:[%s0 + $0x700] sm:$0xff]
    %v240 = vld [vmem:[%s0 + $0x708] sm:$0xff]
    %v241 = vld [vmem:[%s0 + $0x710] sm:$0xff]
    %v242 = vld [vmem:[%s0 + $0x718] sm:$0xff]
    %v243 = vld [vmem:[%s0 + $0x720] sm:$0xff]
    %v244 = vld [vmem:[%s0 + $0x728] sm:$0xff]
    %v245 = vld [vmem:[%s0 + $0x730] sm:$0xff]
    %v246 = vld [vmem:[%s0 + $0x738] sm:$0xff]
    %v247 = vld [vmem:[%s0 + $0x740] sm:$0xff]
    %v248 = vld [vmem:[%s0 + $0x748] sm:$0xff]
    %v249 = vld [vmem:[%s0 + $0x750] sm:$0xff]
    %v250 = vld [vmem:[%s0 + $0x758] sm:$0xff]
    %v251 = vld [vmem:[%s0 + $0x760] sm:$0xff]
    %v252 = vld [vmem:[%s0 + $0x768] sm:$0xff]
    %v253 = vld [vmem:[%s0 + $0x770] sm:$0xff]
    %v254 = vld [vmem:[%s0 + $0x778] sm:$0xff]
    %v255 = vld [vmem:[%s0 + $0x780] sm:$0xff]
    %v256 = vld [vmem:[%s0 + $0x788] sm:$0xff]
    %v257 = vld [vmem:[%s0 + $0x790] sm:$0xff]
    %v258 = vld [vmem:[%s0 + $0x798] sm:$0xff]
    %v259 = vld [vmem:[%s0 + $0x7a0] sm:$0xff]
    %v260 = vld [vmem:[%s0 + $0x7a8] sm:$0xff]
    %v261 = vld [vmem:[%s0 + $0x7b0] sm:$0xff]
    %v262 = vld [vmem:[%s0 + $0x7b8] sm:$0xff]
    %v263 = vld [vmem:[%s0 + $0x7c0] sm:$0xff]
    %v264 = vld [vmem:[%s0 + $0x7c8] sm:$0xff]
    %v265 = vld [vmem:[%s0 + $0x7d0] sm:$0xff]
    %v266 = vld [vmem:[%s0 + $0x7d8] sm:$0xff]
    %v267 = vld [vmem:[%s0 + $0x7e0] sm:$0xff]
    %v268 = vld [vmem:[%s0 + $0x7e8] sm:$0xff]
    %v269 = vld [vmem:[%s0 + $0x7f0] sm:$0xff]
    %v270 = vld [vmem:[%s0 + $0x7f8] sm:$0xff]
    %v271 = vld [vmem:[%s0 + $0x800] sm:$0xff]
    %v272 = vld [vmem:[%s0 + $0x808] sm:$0xff]
    %v273 = vld [vmem:[%s0 + $0x810] sm:$0xff]
    %v274 = vld [vmem:[%s0 + $0x818] sm:$0xff]
    %v275 = vld [vmem:[%s0 + $0x820] sm:$0xff]
    %v276 = vld [vmem:[%s0 + $0x828] sm:$0xff]
    %v277 = vld [vmem:[%s0 + $0x830] sm:$0xff]
    %v278 = vld [vmem:[%s0 + $0x838] sm:$0xff]
    %v279 = vld [vmem:[%s0 + $0x840] sm:$0xff]
    %v280 = vld [vmem:[%s0 + $0x848] sm:$0xff]
    %v281 = vld [vmem:[%s0 + $0x850] sm:$0xff]
    %v282 = vld [vmem:[%s0 + $0x858] sm:$0xff]
    %v283 = vld [vmem:[%s0 + $0x860] sm:$0xff]
    %v284 = vld [vmem:[%s0 + $0x868] sm:$0xff]
    %v285 = vld [vmem:[%s0 + $0x870] sm:$0xff]
    %v286 = vld [vmem:[%s0 + $0x878] sm:$0xff]
    %v287 = vld [vmem:[%s0 + $0x880] sm:$0xff]
    %v288 = vld [vmem:[%s0 + $0x888] sm:$0xff]
    %v289 = vld [vmem:[%s0 + $0x890] sm:$0xff]
    %v290 = vld [vmem:[%s0 + $0x898] sm:$0xff]
    %v291 = vld [vmem:[%s0 + $0x8a0] sm:$0xff]
    %v292 = vld [vmem:[%s0 + $0x8a8] sm:$0xff]
    %v293 = vld [vmem:[%s0 + $0x8b0] sm:$0xff]
    %v294 = vld [vmem:[%s0 + $0x8b8] sm:$0xff]
    %v295 = vld [vmem:[%s0 + $0x8c0] sm:$0xff]
    %v296 = vld [vmem:[%s0 + $0x8c8] sm:$0xff]
    %v297 = vld [vmem:[%s0 + $0x8d0] sm:$0xff]
    %v298 = vld [vmem:[%s0 + $0x8d8] sm:$0xff]
    %v299 = vld [vmem:[%s0 + $0x8e0] sm:$0xff]
    %v300 = vld [vmem:[%s0 + $0x8e8] sm:$0xff]
    %v301 = vld [vmem:[%s0 + $0x8f0] sm:$0xff]
    %v302 = vld [vmem:[%s0 + $0x8f8] sm:$0xff]
    %v303 = vld [vmem:[%s0 + $0x900] sm:$0xff]
    %v304 = vld [vmem:[%s0 + $0x908] sm:$0xff]
    %v305 = vld [vmem:[%s0 + $0x910] sm:$0xff]
    %v306 = vld [vmem:[%s0 + $0x918] sm:$0xff]
    %v307 = vld [vmem:[%s0 + $0x920] sm:$0xff]
    %v308 = vld [vmem:[%s0 + $0x928] sm:$0xff]
    %v309 = vld [vmem:[%s0 + $0x930] sm:$0xff]
    %v310 = vld [vmem:[%s0 + $0x938] sm:$0xff]
    %v311 = vld [vmem:[%s0 + $0x940] sm:$0xff]
    %v312 = vld [vmem:[%s0 + $0x948] sm:$0xff]
    %v313 = vld [vmem:[%s0 + $0x950] sm:$0xff]
    %v314 = vld [vmem:[%s0 + $0x958] sm:$0xff]
    %v315 = vld [vmem:[%s0 + $0x960] sm:$0xff]
    %v316 = vld [vmem:[%s0 + $0x968] sm:$0xff]
    %v317 = vld [vmem:[%s0 + $0x970] sm:$0xff]
    %v318 = vld [vmem:[%s0 + $0x978] sm:$0xff]
    %v319 = vld [vmem:[%s0 + $0x980] sm:$0xff]
    %v320 = vld [vmem:[%s0 + $0x988] sm:$0xff]
    %v321 = vld [vmem:[%s0 + $0x990] sm:$0xff]
    %v322 = vld [vmem:[%s0 + $0x998] sm:$0xff]
    %v323 = vld [vmem:[%s0 + $0x9a0] sm:$0xff]
    %v324 = vld [vmem:[%s0 + $0x9a8] sm:$0xff]
    %v325 = vld [vmem:[%s0 + $0x9b0] sm:$0xff]
    %v326 = vld [vmem:[%s0 + $0x9b8] sm:$0xff]
    %v327 = vld [vmem:[%s0 + $0x9c0] sm:$0xff]
    %v328 = vld [vmem:[%s0 + $0x9c8] sm:$0xff]
    %v329 = vld [vmem:[%s0 + $0x9d0] sm:$0xff]
    %v330 = vld [vmem:[%s0 + $0x9d8] sm:$0xff]
    %v331 = vld [vmem:[%s0 + $0x9e0] sm:$0xff]
    %v332 = vld [vmem:[%s0 + $0x9e8] sm:$0xff]
    %v333 = vld [vmem:[%s0 + $0x9f0] sm:$0xff]
    %v334 = vld [vmem:[%s0 + $0x9f8] sm:$0xff]
    %v335 = vld [vmem:[%s0 + $0xa00] sm:$0xff]
    %v336 = vld [vmem:[%s0 + $0xa08] sm:$0xff]
    %v337 = vld [vmem:[%s0 + $0xa10] sm:$0xff]
    %v338 = vld [vmem:[%s0 + $0xa18] sm:$0xff]
    %v339 = vld [vmem:[%s0 + $0xa20] sm:$0xff]
    %v340 = vld [vmem:[%s0 + $0xa28] sm:$0xff]
    %v341 = vld [vmem:[%s0 + $0xa30] sm:$0xff]
    %v342 = vld [vmem:[%s0 + $0xa38] sm:$0xff]
    %v343 = vld [vmem:[%s0 + $0xa40] sm:$0xff]
    %v344 = vld [vmem:[%s0 + $0xa48] sm:$0xff]
    %v345 = vld [vmem:[%s0 + $0xa50] sm:$0xff]
    %v346 = vld [vmem:[%s0 + $0xa58] sm:$0xff]
    %v347 = vld [vmem:[%s0 + $0xa60] sm:$0xff]
    %v348 = vld [vmem:[%s0 + $0xa68] sm:$0xff]
    %v349 = vld [vmem:[%s0 + $0xa70] sm:$0xff]
    %v350 = vld [vmem:[%s0 + $0xa78] sm:$0xff]
    %v351 = vld [vmem:[%s0 + $0xa80] sm:$0xff]
    %v352 = vld [vmem:[%s0 + $0xa88] sm:$0xff]
    %v353 = vld [vmem:[%s0 + $0xa90] sm:$0xff]
    %v354 = vld [vmem:[%s0 + $0xa98] sm:$0xff]
    %v355 = vld [vmem:[%s0 + $0xaa0] sm:$0xff]
    %v356 = vld [vmem:[%s0 + $0xaa8] sm:$0xff]
    %v357 = vld [vmem:[%s0 + $0xab0] sm:$0xff]
    %v358 = vld [vmem:[%s0 + $0xab8] sm:$0xff]
    %v359 = vld [vmem:[%s0 + $0xac0] sm:$0xff]
    %v360 = vld [vmem:[%s0 + $0xac8] sm:$0xff]
    %v361 = vld [vmem:[%s0 + $0xad0] sm:$0xff]
    %v362 = vld [vmem:[%s0 + $0xad8] sm:$0xff]
    %v363 = vld [vmem:[%s0 + $0xae0] sm:$0xff]
    %v364 = vld [vmem:[%s0 + $0xae8] sm:$0xff]
    %v365 = vld [vmem:[%s0 + $0xaf0] sm:$0xff]
    %v366 = vld [vmem:[%s0 + $0xaf8] sm:$0xff]
    %v367 = vld [vmem:[%s0 + $0xb00] sm:$0xff]
    %v368 = vld [vmem:[%s0 + $0xb08] sm:$0xff]
    %v369 = vld [vmem:[%s0 + $0xb10] sm:$0xff]
    %v370 = vld [vmem:[%s0 + $0xb18] sm:$0xff]
    %v371 = vld [vmem:[%s0 + $0xb20] sm:$0xff]
    %v372 = vld [vmem:[%s0 + $0xb28] sm:$0xff]
    %v373 = vld [vmem:[%s0 + $0xb30] sm:$0xff]
    %v374 = vld [vmem:[%s0 + $0xb38] sm:$0xff]
    %v375 = vld [vmem:[%s0 + $0xb40] sm:$0xff]
    %v376 = vld [vmem:[%s0 + $0xb48] sm:$0xff]
    %v377 = vld [vmem:[%s0 + $0xb50] sm:$0xff]
    %v378 = vld [vmem:[%s0 + $0xb58] sm:$0xff]
    %v379 = vld [vmem:[%s0 + $0xb60] sm:$0xff]
    %v380 = vld [vmem:[%s0 + $0xb68] sm:$0xff]
    %v381 = vld [vmem:[%s0 + $0xb70] sm:$0xff]
    %v382 = vld [vmem:[%s0 + $0xb78] sm:$0xff]
    %v383 = vld [vmem:[%s0 + $0xb80] sm:$0xff]
    %v384 = vld [vmem:[%s0 + $0xb88] sm:$0xff]
    %v385 = vld [vmem:[%s0 + $0xb90] sm:$0xff]
    %v386 = vld [vmem:[%s0 + $0xb98] sm:$0xff]
    %v387 = vld [vmem:[%s0 + $0xba0] sm:$0xff]
    %v388 = vld [vmem:[%s0 + $0xba8] sm:$0xff]
    %v389 = vld [vmem:[%s0 + $0xbb0] sm:$0xff]
    %v390 = vld [vmem:[%s0 + $0xbb8] sm:$0xff]
    %v391 = vld [vmem:[%s0 + $0xbc0] sm:$0xff]
    %v392 = vld [vmem:[%s0 + $0xbc8] sm:$0xff]
    %v393 = vld [vmem:[%s0 + $0xbd0] sm:$0xff]
    %v394 = vld [vmem:[%s0 + $0xbd8] sm:$0xff]
    %v395 = vld [vmem:[%s0 + $0xbe0] sm:$0xff]
    %v396 = vld [vmem:[%s0 + $0xbe8] sm:$0xff]
    %v397 = vld [vmem:[%s0 + $0xbf0] sm:$0xff]
    %v398 = vld [vmem:[%s0 + $0xbf8] sm:$0xff]
    %v399 = vld [vmem:[%s0 + $0xc00] sm:$0xff]
    %v400 = vld [vmem:[%s0 + $0xc08] sm:$0xff]
    %v401 = vld [vmem:[%s0 + $0xc10] sm:$0xff]
    %v402 = vld [vmem:[%s0 + $0xc18] sm:$0xff]
    %v403 = vld [vmem:[%s0 + $0xc20] sm:$0xff]
    %v404 = vld [vmem:[%s0 + $0xc28] sm:$0xff]
    %v405 = vld [vmem:[%s0 + $0xc30] sm:$0xff]
    %v406 = vld [vmem:[%s0 + $0xc38] sm:$0xff]
    %v407 = vld [vmem:[%s0 + $0xc40] sm:$0xff]
    %v408 = vld [vmem:[%s0 + $0xc48] sm:$0xff]
    %v409 = vld [vmem:[%s0 + $0xc50] sm:$0xff]
    %v410 = vld [vmem:[%s0 + $0xc58] sm:$0xff]
    %v411 = vld [vmem:[%s0 + $0xc60] sm:$0xff]
    %v412 = vld [vmem:[%s0 + $0xc68] sm:$0xff]
    %v413 = vld [vmem:[%s0 + $0xc70] sm:$0xff]
    %v414 = vld [vmem:[%s0 + $0xc78] sm:$0xff]
    %v415 = vld [vmem:[%s0 + $0xc80] sm:$0xff]
    %v416 = vld [vmem:[%s0 + $0xc88] sm:$0xff]
    %v417 = vld [vmem:[%s0 + $0xc90] sm:$0xff]
    %v418 = vld [vmem:[%s0 + $0xc98] sm:$0xff]
    %v419 = vld [vmem:[%s0 + $0xca0] sm:$0xff]
    %v420 = vld [vmem:[%s0 + $0xca8] sm:$0xff]
    %v421 = vld [vmem:[%s0 + $0xcb0] sm:$0xff]
    %v422 = vld [vmem:[%s0 + $0xcb8] sm:$0xff]
    %v423 = vld [vmem:[%s0 + $0xcc0] sm:$0xff]
    %v424 = vld [vmem:[%s0 + $0xcc8] sm:$0xff]
    %v425 = vld [vmem:[%s0 + $0xcd0] sm:$0xff]
    %v426 = vld [vmem:[%s0 + $0xcd8] sm:$0xff]
    %v427 = vld [vmem:[%s0 + $0xce0] sm:$0xff]
    %v428 = vld [vmem:[%s0 + $0xce8] sm:$0xff]
    %v429 = vld [vmem:[%s0 + $0xcf0] sm:$0xff]
    %v430 = vld [vmem:[%s0 + $0xcf8] sm:$0xff]
    %v431 = vld [vmem:[%s0 + $0xd00] sm:$0xff]
    %v432 = vld [vmem:[%s0 + $0xd08] sm:$0xff]
    %v433 = vld [vmem:[%s0 + $0xd10] sm:$0xff]
    %v434 = vld [vmem:[%s0 + $0xd18] sm:$0xff]
    %v435 = vld [vmem:[%s0 + $0xd20] sm:$0xff]
    %v436 = vld [vmem:[%s0 + $0xd28] sm:$0xff]
    %v437 = vld [vmem:[%s0 + $0xd30] sm:$0xff]
    %v438 = vld [vmem:[%s0 + $0xd38] sm:$0xff]
    %v439 = vld [vmem:[%s0 + $0xd40] sm:$0xff]
    %v440 = vld [vmem:[%s0 + $0xd48] sm:$0xff]
    %v441 = vld [vmem:[%s0 + $0xd50] sm:$0xff]
    %v442 = vld [vmem:[%s0 + $0xd58] sm:$0xff]
    %v443 = vld [vmem:[%s0 + $0xd60] sm:$0xff]
    %v444 = vld [vmem:[%s0 + $0xd68] sm:$0xff]
    %v445 = vld [vmem:[%s0 + $0xd70] sm:$0xff]
    %v446 = vld [vmem:[%s0 + $0xd78] sm:$0xff]
    %v447 = vld [vmem:[%s0 + $0xd80] sm:$0xff]
    %v448 = vld [vmem:[%s0 + $0xd88] sm:$0xff]
    %v449 = vld [vmem:[%s0 + $0xd90] sm:$0xff]
    %v450 = vld [vmem:[%s0 + $0xd98] sm:$0xff]
    %v451 = vld [vmem:[%s0 + $0xda0] sm:$0xff]
    %v452 = vld [vmem:[%s0 + $0xda8] sm:$0xff]
    %v453 = vld [vmem:[%s0 + $0xdb0] sm:$0xff]
    %v454 = vld [vmem:[%s0 + $0xdb8] sm:$0xff]
    %v455 = vld [vmem:[%s0 + $0xdc0] sm:$0xff]
    %v456 = vld [vmem:[%s0 + $0xdc8] sm:$0xff]
    %v457 = vld [vmem:[%s0 + $0xdd0] sm:$0xff]
    %v458 = vld [vmem:[%s0 + $0xdd8] sm:$0xff]
    %v459 = vld [vmem:[%s0 + $0xde0] sm:$0xff]
    %v460 = vld [vmem:[%s0 + $0xde8] sm:$0xff]
    %v461 = vld [vmem:[%s0 + $0xdf0] sm:$0xff]
    %v462 = vld [vmem:[%s0 + $0xdf8] sm:$0xff]
    %v463 = vld [vmem:[%s0 + $0xe00] sm:$0xff]
    %v464 = vld [vmem:[%s0 + $0xe08] sm:$0xff]
    %v465 = vld [vmem:[%s0 + $0xe10] sm:$0xff]
    %v466 = vld [vmem:[%s0 + $0xe18] sm:$0xff]
    %v467 = vld [vmem:[%s0 + $0xe20] sm:$0xff]
    %v468 = vld [vmem:[%s0 + $0xe28] sm:$0xff]
    %v469 = vld [vmem:[%s0 + $0xe30] sm:$0xff]
    %v470 = vld [vmem:[%s0 + $0xe38] sm:$0xff]
    %v471 = vld [vmem:[%s0 + $0xe40] sm:$0xff]
    %v472 = vld [vmem:[%s0 + $0xe48] sm:$0xff]
    %v473 = vld [vmem:[%s0 + $0xe50] sm:$0xff]
    %v474 = vld [vmem:[%s0 + $0xe58] sm:$0xff]
    %v475 = vld [vmem:[%s0 + $0xe60] sm:$0xff]
    %v476 = vld [vmem:[%s0 + $0xe68] sm:$0xff]
    %v477 = vld [vmem:[%s0 + $0xe70] sm:$0xff]
    %v478 = vld [vmem:[%s0 + $0xe78] sm:$0xff]
    %v479 = vld [vmem:[%s0 + $0xe80] sm:$0xff]
    %v480 = vld [vmem:[%s0 + $0xe88] sm:$0xff]
    %v481 = vld [vmem:[%s0 + $0xe90] sm:$0xff]
    %v482 = vld [vmem:[%s0 + $0xe98] sm:$0xff]
    %v483 = vld [vmem:[%s0 + $0xea0] sm:$0xff]
    %v484 = vld [vmem:[%s0 + $0xea8] sm:$0xff]
    %v485 = vld [vmem:[%s0 + $0xeb0] sm:$0xff]
    %v486 = vld [vmem:[%s0 + $0xeb8] sm:$0xff]
    %v487 = vld [vmem:[%s0 + $0xec0] sm:$0xff]
    %v488 = vld [vmem:[%s0 + $0xec8] sm:$0xff]
    %v489 = vld [vmem:[%s0 + $0xed0] sm:$0xff]
    %v490 = vld [vmem:[%s0 + $0xed8] sm:$0xff]
    %v491 = vld [vmem:[%s0 + $0xee0] sm:$0xff]
    %v492 = vld [vmem:[%s0 + $0xee8] sm:$0xff]
    %v493 = vld [vmem:[%s0 + $0xef0] sm:$0xff]
    %v494 = vld [vmem:[%s0 + $0xef8] sm:$0xff]
    %v495 = vld [vmem:[%s0 + $0xf00] sm:$0xff]
    %v496 = vld [vmem:[%s0 + $0xf08] sm:$0xff]
    %v497 = vld [vmem:[%s0 + $0xf10] sm:$0xff]
    %v498 = vld [vmem:[%s0 + $0xf18] sm:$0xff]
    %v499 = vld [vmem:[%s0 + $0xf20] sm:$0xff]
    %v500 = vld [vmem:[%s0 + $0xf28] sm:$0xff]
    %v501 = vld [vmem:[%s0 + $0xf30] sm:$0xff]
    %v502 = vld [vmem:[%s0 + $0xf38] sm:$0xff]
    %v503 = vld [vmem:[%s0 + $0xf40] sm:$0xff]
    %v504 = vld [vmem:[%s0 + $0xf48] sm:$0xff]
    %v505 = vld [vmem:[%s0 + $0xf50] sm:$0xff]
    %v506 = vld [vmem:[%s0 + $0xf58] sm:$0xff]
    %v507 = vld [vmem:[%s0 + $0xf60] sm:$0xff]
    %v508 = vld [vmem:[%s0 + $0xf68] sm:$0xff]
    %v509 = vld [vmem:[%s0 + $0xf70] sm:$0xff]
    %v510 = vld [vmem:[%s0 + $0xf78] sm:$0xff]
    %v511 = vld [vmem:[%s0 + $0xf80] sm:$0xff]
    %v512 = vld [vmem:[%s0 + $0xf88] sm:$0xff]
    %v513 = vld [vmem:[%s0 + $0xf90] sm:$0xff]
    %v514 = vld [vmem:[%s0 + $0xf98] sm:$0xff]
    %v515 = vld [vmem:[%s0 + $0xfa0] sm:$0xff]
    %v516 = vld [vmem:[%s0 + $0xfa8] sm:$0xff]
    %v517 = vld [vmem:[%s0 + $0xfb0] sm:$0xff]
    %v518 = vld [vmem:[%s0 + $0xfb8] sm:$0xff]
    %v519 = vld [vmem:[%s0 + $0xfc0] sm:$0xff]
    %v520 = vld [vmem:[%s0 + $0xfc8] sm:$0xff]
    %v521 = vld [vmem:[%s0 + $0xfd0] sm:$0xff]
    %v522 = vld [vmem:[%s0 + $0xfd8] sm:$0xff]
    %v523 = vld [vmem:[%s0 + $0xfe0] sm:$0xff]
    %v524 = vld [vmem:[%s0 + $0xfe8] sm:$0xff]
    %v525 = vld [vmem:[%s0 + $0xff0] sm:$0xff]
    %v526 = vld [vmem:[%s0 + $0xff8] sm:$0xff]
    %vm527 = vcmask 523264
    %v528 = vsel %vm527, %v15, 0.0
    %529 = vadd.xlane.f32.xlu0 %v528
    %v530 = vpop.xlane.xlu0 %529
    %v531 = vsel %vm527, %v16, 0.0
    %532 = vadd.xlane.f32.xlu0 %v531
    %v533 = vpop.xlane.xlu0 %532
    %v534 = vsel %vm527, %v17, 0.0
    %535 = vadd.xlane.f32.xlu0 %v534
    %v536 = vpop.xlane.xlu0 %535
    %v537 = vsel %vm527, %v18, 0.0
    %538 = vadd.xlane.f32.xlu0 %v537
    %v539 = vpop.xlane.xlu0 %538
    %v540 = vsel %vm527, %v19, 0.0
    %541 = vadd.xlane.f32.xlu0 %v540
    %v542 = vpop.xlane.xlu0 %541
    %v543 = vsel %vm527, %v20, 0.0
    %544 = vadd.xlane.f32.xlu0 %v543
    %v545 = vpop.xlane.xlu0 %544
    %v546 = vsel %vm527, %v21, 0.0
    %547 = vadd.xlane.f32.xlu0 %v546
    %v548 = vpop.xlane.xlu0 %547
    %v549 = vsel %vm527, %v22, 0.0
    %550 = vadd.xlane.f32.xlu0 %v549
    %v551 = vpop.xlane.xlu0 %550
    %v552 = vsel %vm527, %v23, 0.0
    %553 = vadd.xlane.f32.xlu0 %v552
    %v554 = vpop.xlane.xlu0 %553
    %v555 = vsel %vm527, %v24, 0.0
    %556 = vadd.xlane.f32.xlu0 %v555
    %v557 = vpop.xlane.xlu0 %556
    %v558 = vsel %vm527, %v25, 0.0
    %559 = vadd.xlane.f32.xlu0 %v558
    %v560 = vpop.xlane.xlu0 %559
    %v561 = vsel %vm527, %v26, 0.0
    %562 = vadd.xlane.f32.xlu0 %v561
    %v563 = vpop.xlane.xlu0 %562
    %v564 = vsel %vm527, %v27, 0.0
    %565 = vadd.xlane.f32.xlu0 %v564
    %v566 = vpop.xlane.xlu0 %565
    %v567 = vsel %vm527, %v28, 0.0
    %568 = vadd.xlane.f32.xlu0 %v567
    %v569 = vpop.xlane.xlu0 %568
    %v570 = vsel %vm527, %v29, 0.0
    %571 = vadd.xlane.f32.xlu0 %v570
    %v572 = vpop.xlane.xlu0 %571
    %v573 = vsel %vm527, %v30, 0.0
    %574 = vadd.xlane.f32.xlu0 %v573
    %v575 = vpop.xlane.xlu0 %574
    %v576 = vsel %vm527, %v31, 0.0
    %577 = vadd.xlane.f32.xlu0 %v576
    %v578 = vpop.xlane.xlu0 %577
    %v579 = vsel %vm527, %v32, 0.0
    %580 = vadd.xlane.f32.xlu0 %v579
    %v581 = vpop.xlane.xlu0 %580
    %v582 = vsel %vm527, %v33, 0.0
    %583 = vadd.xlane.f32.xlu0 %v582
    %v584 = vpop.xlane.xlu0 %583
    %v585 = vsel %vm527, %v34, 0.0
    %586 = vadd.xlane.f32.xlu0 %v585
    %v587 = vpop.xlane.xlu0 %586
    %v588 = vsel %vm527, %v35, 0.0
    %589 = vadd.xlane.f32.xlu0 %v588
    %v590 = vpop.xlane.xlu0 %589
    %v591 = vsel %vm527, %v36, 0.0
    %592 = vadd.xlane.f32.xlu0 %v591
    %v593 = vpop.xlane.xlu0 %592
    %v594 = vsel %vm527, %v37, 0.0
    %595 = vadd.xlane.f32.xlu0 %v594
    %v596 = vpop.xlane.xlu0 %595
    %v597 = vsel %vm527, %v38, 0.0
    %598 = vadd.xlane.f32.xlu0 %v597
    %v599 = vpop.xlane.xlu0 %598
    %v600 = vsel %vm527, %v39, 0.0
    %601 = vadd.xlane.f32.xlu0 %v600
    %v602 = vpop.xlane.xlu0 %601
    %v603 = vsel %vm527, %v40, 0.0
    %604 = vadd.xlane.f32.xlu0 %v603
    %v605 = vpop.xlane.xlu0 %604
    %v606 = vsel %vm527, %v41, 0.0
    %607 = vadd.xlane.f32.xlu0 %v606
    %v608 = vpop.xlane.xlu0 %607
    %v609 = vsel %vm527, %v42, 0.0
    %610 = vadd.xlane.f32.xlu0 %v609
    %v611 = vpop.xlane.xlu0 %610
    %v612 = vsel %vm527, %v43, 0.0
    %613 = vadd.xlane.f32.xlu0 %v612
    %v614 = vpop.xlane.xlu0 %613
    %v615 = vsel %vm527, %v44, 0.0
    %616 = vadd.xlane.f32.xlu0 %v615
    %v617 = vpop.xlane.xlu0 %616
    %v618 = vsel %vm527, %v45, 0.0
    %619 = vadd.xlane.f32.xlu0 %v618
    %v620 = vpop.xlane.xlu0 %619
    %v621 = vsel %vm527, %v46, 0.0
    %622 = vadd.xlane.f32.xlu0 %v621
    %v623 = vpop.xlane.xlu0 %622
    %v624 = vsel %vm527, %v47, 0.0
    %625 = vadd.xlane.f32.xlu0 %v624
    %v626 = vpop.xlane.xlu0 %625
    %v627 = vsel %vm527, %v48, 0.0
    %628 = vadd.xlane.f32.xlu0 %v627
    %v629 = vpop.xlane.xlu0 %628
    %v630 = vsel %vm527, %v49, 0.0
    %631 = vadd.xlane.f32.xlu0 %v630
    %v632 = vpop.xlane.xlu0 %631
    %v633 = vsel %vm527, %v50, 0.0
    %634 = vadd.xlane.f32.xlu0 %v633
    %v635 = vpop.xlane.xlu0 %634
    %v636 = vsel %vm527, %v51, 0.0
    %637 = vadd.xlane.f32.xlu0 %v636
    %v638 = vpop.xlane.xlu0 %637
    %v639 = vsel %vm527, %v52, 0.0
    %640 = vadd.xlane.f32.xlu0 %v639
    %v641 = vpop.xlane.xlu0 %640
    %v642 = vsel %vm527, %v53, 0.0
    %643 = vadd.xlane.f32.xlu0 %v642
    %v644 = vpop.xlane.xlu0 %643
    %v645 = vsel %vm527, %v54, 0.0
    %646 = vadd.xlane.f32.xlu0 %v645
    %v647 = vpop.xlane.xlu0 %646
    %v648 = vsel %vm527, %v55, 0.0
    %649 = vadd.xlane.f32.xlu0 %v648
    %v650 = vpop.xlane.xlu0 %649
    %v651 = vsel %vm527, %v56, 0.0
    %652 = vadd.xlane.f32.xlu0 %v651
    %v653 = vpop.xlane.xlu0 %652
    %v654 = vsel %vm527, %v57, 0.0
    %655 = vadd.xlane.f32.xlu0 %v654
    %v656 = vpop.xlane.xlu0 %655
    %v657 = vsel %vm527, %v58, 0.0
    %658 = vadd.xlane.f32.xlu0 %v657
    %v659 = vpop.xlane.xlu0 %658
    %v660 = vsel %vm527, %v59, 0.0
    %661 = vadd.xlane.f32.xlu0 %v660
    %v662 = vpop.xlane.xlu0 %661
    %v663 = vsel %vm527, %v60, 0.0
    %664 = vadd.xlane.f32.xlu0 %v663
    %v665 = vpop.xlane.xlu0 %664
    %v666 = vsel %vm527, %v61, 0.0
    %667 = vadd.xlane.f32.xlu0 %v666
    %v668 = vpop.xlane.xlu0 %667
    %v669 = vsel %vm527, %v62, 0.0
    %670 = vadd.xlane.f32.xlu0 %v669
    %v671 = vpop.xlane.xlu0 %670
    %v672 = vsel %vm527, %v63, 0.0
    %673 = vadd.xlane.f32.xlu0 %v672
    %v674 = vpop.xlane.xlu0 %673
    %v675 = vsel %vm527, %v64, 0.0
    %676 = vadd.xlane.f32.xlu0 %v675
    %v677 = vpop.xlane.xlu0 %676
    %v678 = vsel %vm527, %v65, 0.0
    %679 = vadd.xlane.f32.xlu0 %v678
    %v680 = vpop.xlane.xlu0 %679
    %v681 = vsel %vm527, %v66, 0.0
    %682 = vadd.xlane.f32.xlu0 %v681
    %v683 = vpop.xlane.xlu0 %682
    %v684 = vsel %vm527, %v67, 0.0
    %685 = vadd.xlane.f32.xlu0 %v684
    %v686 = vpop.xlane.xlu0 %685
    %v687 = vsel %vm527, %v68, 0.0
    %688 = vadd.xlane.f32.xlu0 %v687
    %v689 = vpop.xlane.xlu0 %688
    %v690 = vsel %vm527, %v69, 0.0
    %691 = vadd.xlane.f32.xlu0 %v690
    %v692 = vpop.xlane.xlu0 %691
    %v693 = vsel %vm527, %v70, 0.0
    %694 = vadd.xlane.f32.xlu0 %v693
    %v695 = vpop.xlane.xlu0 %694
    %v696 = vsel %vm527, %v71, 0.0
    %697 = vadd.xlane.f32.xlu0 %v696
    %v698 = vpop.xlane.xlu0 %697
    %v699 = vsel %vm527, %v72, 0.0
    %700 = vadd.xlane.f32.xlu0 %v699
    %v701 = vpop.xlane.xlu0 %700
    %v702 = vsel %vm527, %v73, 0.0
    %703 = vadd.xlane.f32.xlu0 %v702
    %v704 = vpop.xlane.xlu0 %703
    %v705 = vsel %vm527, %v74, 0.0
    %706 = vadd.xlane.f32.xlu0 %v705
    %v707 = vpop.xlane.xlu0 %706
    %v708 = vsel %vm527, %v75, 0.0
    %709 = vadd.xlane.f32.xlu0 %v708
    %v710 = vpop.xlane.xlu0 %709
    %v711 = vsel %vm527, %v76, 0.0
    %712 = vadd.xlane.f32.xlu0 %v711
    %v713 = vpop.xlane.xlu0 %712
    %v714 = vsel %vm527, %v77, 0.0
    %715 = vadd.xlane.f32.xlu0 %v714
    %v716 = vpop.xlane.xlu0 %715
    %v717 = vsel %vm527, %v78, 0.0
    %718 = vadd.xlane.f32.xlu0 %v717
    %v719 = vpop.xlane.xlu0 %718
    %v720 = vsel %vm527, %v79, 0.0
    %721 = vadd.xlane.f32.xlu0 %v720
    %v722 = vpop.xlane.xlu0 %721
    %v723 = vsel %vm527, %v80, 0.0
    %724 = vadd.xlane.f32.xlu0 %v723
    %v725 = vpop.xlane.xlu0 %724
    %v726 = vsel %vm527, %v81, 0.0
    %727 = vadd.xlane.f32.xlu0 %v726
    %v728 = vpop.xlane.xlu0 %727
    %v729 = vsel %vm527, %v82, 0.0
    %730 = vadd.xlane.f32.xlu0 %v729
    %v731 = vpop.xlane.xlu0 %730
    %v732 = vsel %vm527, %v83, 0.0
    %733 = vadd.xlane.f32.xlu0 %v732
    %v734 = vpop.xlane.xlu0 %733
    %v735 = vsel %vm527, %v84, 0.0
    %736 = vadd.xlane.f32.xlu0 %v735
    %v737 = vpop.xlane.xlu0 %736
    %v738 = vsel %vm527, %v85, 0.0
    %739 = vadd.xlane.f32.xlu0 %v738
    %v740 = vpop.xlane.xlu0 %739
    %v741 = vsel %vm527, %v86, 0.0
    %742 = vadd.xlane.f32.xlu0 %v741
    %v743 = vpop.xlane.xlu0 %742
    %v744 = vsel %vm527, %v87, 0.0
    %745 = vadd.xlane.f32.xlu0 %v744
    %v746 = vpop.xlane.xlu0 %745
    %v747 = vsel %vm527, %v88, 0.0
    %748 = vadd.xlane.f32.xlu0 %v747
    %v749 = vpop.xlane.xlu0 %748
    %v750 = vsel %vm527, %v89, 0.0
    %751 = vadd.xlane.f32.xlu0 %v750
    %v752 = vpop.xlane.xlu0 %751
    %v753 = vsel %vm527, %v90, 0.0
    %754 = vadd.xlane.f32.xlu0 %v753
    %v755 = vpop.xlane.xlu0 %754
    %v756 = vsel %vm527, %v91, 0.0
    %757 = vadd.xlane.f32.xlu0 %v756
    %v758 = vpop.xlane.xlu0 %757
    %v759 = vsel %vm527, %v92, 0.0
    %760 = vadd.xlane.f32.xlu0 %v759
    %v761 = vpop.xlane.xlu0 %760
    %v762 = vsel %vm527, %v93, 0.0
    %763 = vadd.xlane.f32.xlu0 %v762
    %v764 = vpop.xlane.xlu0 %763
    %v765 = vsel %vm527, %v94, 0.0
    %766 = vadd.xlane.f32.xlu0 %v765
    %v767 = vpop.xlane.xlu0 %766
    %v768 = vsel %vm527, %v95, 0.0
    %769 = vadd.xlane.f32.xlu0 %v768
    %v770 = vpop.xlane.xlu0 %769
    %v771 = vsel %vm527, %v96, 0.0
    %772 = vadd.xlane.f32.xlu0 %v771
    %v773 = vpop.xlane.xlu0 %772
    %v774 = vsel %vm527, %v97, 0.0
    %775 = vadd.xlane.f32.xlu0 %v774
    %v776 = vpop.xlane.xlu0 %775
    %v777 = vsel %vm527, %v98, 0.0
    %778 = vadd.xlane.f32.xlu0 %v777
    %v779 = vpop.xlane.xlu0 %778
    %v780 = vsel %vm527, %v99, 0.0
    %781 = vadd.xlane.f32.xlu0 %v780
    %v782 = vpop.xlane.xlu0 %781
    %v783 = vsel %vm527, %v100, 0.0
    %784 = vadd.xlane.f32.xlu0 %v783
    %v785 = vpop.xlane.xlu0 %784
    %v786 = vsel %vm527, %v101, 0.0
    %787 = vadd.xlane.f32.xlu0 %v786
    %v788 = vpop.xlane.xlu0 %787
    %v789 = vsel %vm527, %v102, 0.0
    %790 = vadd.xlane.f32.xlu0 %v789
    %v791 = vpop.xlane.xlu0 %790
    %v792 = vsel %vm527, %v103, 0.0
    %793 = vadd.xlane.f32.xlu0 %v792
    %v794 = vpop.xlane.xlu0 %793
    %v795 = vsel %vm527, %v104, 0.0
    %796 = vadd.xlane.f32.xlu0 %v795
    %v797 = vpop.xlane.xlu0 %796
    %v798 = vsel %vm527, %v105, 0.0
    %799 = vadd.xlane.f32.xlu0 %v798
    %v800 = vpop.xlane.xlu0 %799
    %v801 = vsel %vm527, %v106, 0.0
    %802 = vadd.xlane.f32.xlu0 %v801
    %v803 = vpop.xlane.xlu0 %802
    %v804 = vsel %vm527, %v107, 0.0
    %805 = vadd.xlane.f32.xlu0 %v804
    %v806 = vpop.xlane.xlu0 %805
    %v807 = vsel %vm527, %v108, 0.0
    %808 = vadd.xlane.f32.xlu0 %v807
    %v809 = vpop.xlane.xlu0 %808
    %v810 = vsel %vm527, %v109, 0.0
    %811 = vadd.xlane.f32.xlu0 %v810
    %v812 = vpop.xlane.xlu0 %811
    %v813 = vsel %vm527, %v110, 0.0
    %814 = vadd.xlane.f32.xlu0 %v813
    %v815 = vpop.xlane.xlu0 %814
    %v816 = vsel %vm527, %v111, 0.0
    %817 = vadd.xlane.f32.xlu0 %v816
    %v818 = vpop.xlane.xlu0 %817
    %v819 = vsel %vm527, %v112, 0.0
    %820 = vadd.xlane.f32.xlu0 %v819
    %v821 = vpop.xlane.xlu0 %820
    %v822 = vsel %vm527, %v113, 0.0
    %823 = vadd.xlane.f32.xlu0 %v822
    %v824 = vpop.xlane.xlu0 %823
    %v825 = vsel %vm527, %v114, 0.0
    %826 = vadd.xlane.f32.xlu0 %v825
    %v827 = vpop.xlane.xlu0 %826
    %v828 = vsel %vm527, %v115, 0.0
    %829 = vadd.xlane.f32.xlu0 %v828
    %v830 = vpop.xlane.xlu0 %829
    %v831 = vsel %vm527, %v116, 0.0
    %832 = vadd.xlane.f32.xlu0 %v831
    %v833 = vpop.xlane.xlu0 %832
    %v834 = vsel %vm527, %v117, 0.0
    %835 = vadd.xlane.f32.xlu0 %v834
    %v836 = vpop.xlane.xlu0 %835
    %v837 = vsel %vm527, %v118, 0.0
    %838 = vadd.xlane.f32.xlu0 %v837
    %v839 = vpop.xlane.xlu0 %838
    %v840 = vsel %vm527, %v119, 0.0
    %841 = vadd.xlane.f32.xlu0 %v840
    %v842 = vpop.xlane.xlu0 %841
    %v843 = vsel %vm527, %v120, 0.0
    %844 = vadd.xlane.f32.xlu0 %v843
    %v845 = vpop.xlane.xlu0 %844
    %v846 = vsel %vm527, %v121, 0.0
    %847 = vadd.xlane.f32.xlu0 %v846
    %v848 = vpop.xlane.xlu0 %847
    %v849 = vsel %vm527, %v122, 0.0
    %850 = vadd.xlane.f32.xlu0 %v849
    %v851 = vpop.xlane.xlu0 %850
    %v852 = vsel %vm527, %v123, 0.0
    %853 = vadd.xlane.f32.xlu0 %v852
    %v854 = vpop.xlane.xlu0 %853
    %v855 = vsel %vm527, %v124, 0.0
    %856 = vadd.xlane.f32.xlu0 %v855
    %v857 = vpop.xlane.xlu0 %856
    %v858 = vsel %vm527, %v125, 0.0
    %859 = vadd.xlane.f32.xlu0 %v858
    %v860 = vpop.xlane.xlu0 %859
    %v861 = vsel %vm527, %v126, 0.0
    %862 = vadd.xlane.f32.xlu0 %v861
    %v863 = vpop.xlane.xlu0 %862
    %v864 = vsel %vm527, %v127, 0.0
    %865 = vadd.xlane.f32.xlu0 %v864
    %v866 = vpop.xlane.xlu0 %865
    %v867 = vsel %vm527, %v128, 0.0
    %868 = vadd.xlane.f32.xlu0 %v867
    %v869 = vpop.xlane.xlu0 %868
    %v870 = vsel %vm527, %v129, 0.0
    %871 = vadd.xlane.f32.xlu0 %v870
    %v872 = vpop.xlane.xlu0 %871
    %v873 = vsel %vm527, %v130, 0.0
    %874 = vadd.xlane.f32.xlu0 %v873
    %v875 = vpop.xlane.xlu0 %874
    %v876 = vsel %vm527, %v131, 0.0
    %877 = vadd.xlane.f32.xlu0 %v876
    %v878 = vpop.xlane.xlu0 %877
    %v879 = vsel %vm527, %v132, 0.0
    %880 = vadd.xlane.f32.xlu0 %v879
    %v881 = vpop.xlane.xlu0 %880
    %v882 = vsel %vm527, %v133, 0.0
    %883 = vadd.xlane.f32.xlu0 %v882
    %v884 = vpop.xlane.xlu0 %883
    %v885 = vsel %vm527, %v134, 0.0
    %886 = vadd.xlane.f32.xlu0 %v885
    %v887 = vpop.xlane.xlu0 %886
    %v888 = vsel %vm527, %v135, 0.0
    %889 = vadd.xlane.f32.xlu0 %v888
    %v890 = vpop.xlane.xlu0 %889
    %v891 = vsel %vm527, %v136, 0.0
    %892 = vadd.xlane.f32.xlu0 %v891
    %v893 = vpop.xlane.xlu0 %892
    %v894 = vsel %vm527, %v137, 0.0
    %895 = vadd.xlane.f32.xlu0 %v894
    %v896 = vpop.xlane.xlu0 %895
    %v897 = vsel %vm527, %v138, 0.0
    %898 = vadd.xlane.f32.xlu0 %v897
    %v899 = vpop.xlane.xlu0 %898
    %v900 = vsel %vm527, %v139, 0.0
    %901 = vadd.xlane.f32.xlu0 %v900
    %v902 = vpop.xlane.xlu0 %901
    %v903 = vsel %vm527, %v140, 0.0
    %904 = vadd.xlane.f32.xlu0 %v903
    %v905 = vpop.xlane.xlu0 %904
    %v906 = vsel %vm527, %v141, 0.0
    %907 = vadd.xlane.f32.xlu0 %v906
    %v908 = vpop.xlane.xlu0 %907
    %v909 = vsel %vm527, %v142, 0.0
    %910 = vadd.xlane.f32.xlu0 %v909
    %v911 = vpop.xlane.xlu0 %910
    %v912 = vsel %vm527, %v143, 0.0
    %913 = vadd.xlane.f32.xlu0 %v912
    %v914 = vpop.xlane.xlu0 %913
    %v915 = vsel %vm527, %v144, 0.0
    %916 = vadd.xlane.f32.xlu0 %v915
    %v917 = vpop.xlane.xlu0 %916
    %v918 = vsel %vm527, %v145, 0.0
    %919 = vadd.xlane.f32.xlu0 %v918
    %v920 = vpop.xlane.xlu0 %919
    %v921 = vsel %vm527, %v146, 0.0
    %922 = vadd.xlane.f32.xlu0 %v921
    %v923 = vpop.xlane.xlu0 %922
    %v924 = vsel %vm527, %v147, 0.0
    %925 = vadd.xlane.f32.xlu0 %v924
    %v926 = vpop.xlane.xlu0 %925
    %v927 = vsel %vm527, %v148, 0.0
    %928 = vadd.xlane.f32.xlu0 %v927
    %v929 = vpop.xlane.xlu0 %928
    %v930 = vsel %vm527, %v149, 0.0
    %931 = vadd.xlane.f32.xlu0 %v930
    %v932 = vpop.xlane.xlu0 %931
    %v933 = vsel %vm527, %v150, 0.0
    %934 = vadd.xlane.f32.xlu0 %v933
    %v935 = vpop.xlane.xlu0 %934
    %v936 = vsel %vm527, %v151, 0.0
    %937 = vadd.xlane.f32.xlu0 %v936
    %v938 = vpop.xlane.xlu0 %937
    %v939 = vsel %vm527, %v152, 0.0
    %940 = vadd.xlane.f32.xlu0 %v939
    %v941 = vpop.xlane.xlu0 %940
    %v942 = vsel %vm527, %v153, 0.0
    %943 = vadd.xlane.f32.xlu0 %v942
    %v944 = vpop.xlane.xlu0 %943
    %v945 = vsel %vm527, %v154, 0.0
    %946 = vadd.xlane.f32.xlu0 %v945
    %v947 = vpop.xlane.xlu0 %946
    %v948 = vsel %vm527, %v155, 0.0
    %949 = vadd.xlane.f32.xlu0 %v948
    %v950 = vpop.xlane.xlu0 %949
    %v951 = vsel %vm527, %v156, 0.0
    %952 = vadd.xlane.f32.xlu0 %v951
    %v953 = vpop.xlane.xlu0 %952
    %v954 = vsel %vm527, %v157, 0.0
    %955 = vadd.xlane.f32.xlu0 %v954
    %v956 = vpop.xlane.xlu0 %955
    %v957 = vsel %vm527, %v158, 0.0
    %958 = vadd.xlane.f32.xlu0 %v957
    %v959 = vpop.xlane.xlu0 %958
    %v960 = vsel %vm527, %v159, 0.0
    %961 = vadd.xlane.f32.xlu0 %v960
    %v962 = vpop.xlane.xlu0 %961
    %v963 = vsel %vm527, %v160, 0.0
    %964 = vadd.xlane.f32.xlu0 %v963
    %v965 = vpop.xlane.xlu0 %964
    %v966 = vsel %vm527, %v161, 0.0
    %967 = vadd.xlane.f32.xlu0 %v966
    %v968 = vpop.xlane.xlu0 %967
    %v969 = vsel %vm527, %v162, 0.0
    %970 = vadd.xlane.f32.xlu0 %v969
    %v971 = vpop.xlane.xlu0 %970
    %v972 = vsel %vm527, %v163, 0.0
    %973 = vadd.xlane.f32.xlu0 %v972
    %v974 = vpop.xlane.xlu0 %973
    %v975 = vsel %vm527, %v164, 0.0
    %976 = vadd.xlane.f32.xlu0 %v975
    %v977 = vpop.xlane.xlu0 %976
    %v978 = vsel %vm527, %v165, 0.0
    %979 = vadd.xlane.f32.xlu0 %v978
    %v980 = vpop.xlane.xlu0 %979
    %v981 = vsel %vm527, %v166, 0.0
    %982 = vadd.xlane.f32.xlu0 %v981
    %v983 = vpop.xlane.xlu0 %982
    %v984 = vsel %vm527, %v167, 0.0
    %985 = vadd.xlane.f32.xlu0 %v984
    %v986 = vpop.xlane.xlu0 %985
    %v987 = vsel %vm527, %v168, 0.0
    %988 = vadd.xlane.f32.xlu0 %v987
    %v989 = vpop.xlane.xlu0 %988
    %v990 = vsel %vm527, %v169, 0.0
    %991 = vadd.xlane.f32.xlu0 %v990
    %v992 = vpop.xlane.xlu0 %991
    %v993 = vsel %vm527, %v170, 0.0
    %994 = vadd.xlane.f32.xlu0 %v993
    %v995 = vpop.xlane.xlu0 %994
    %v996 = vsel %vm527, %v171, 0.0
    %997 = vadd.xlane.f32.xlu0 %v996
    %v998 = vpop.xlane.xlu0 %997
    %v999 = vsel %vm527, %v172, 0.0
    %1000 = vadd.xlane.f32.xlu0 %v999
    %v1001 = vpop.xlane.xlu0 %1000
    %v1002 = vsel %vm527, %v173, 0.0
    %1003 = vadd.xlane.f32.xlu0 %v1002
    %v1004 = vpop.xlane.xlu0 %1003
    %v1005 = vsel %vm527, %v174, 0.0
    %1006 = vadd.xlane.f32.xlu0 %v1005
    %v1007 = vpop.xlane.xlu0 %1006
    %v1008 = vsel %vm527, %v175, 0.0
    %1009 = vadd.xlane.f32.xlu0 %v1008
    %v1010 = vpop.xlane.xlu0 %1009
    %v1011 = vsel %vm527, %v176, 0.0
    %1012 = vadd.xlane.f32.xlu0 %v1011
    %v1013 = vpop.xlane.xlu0 %1012
    %v1014 = vsel %vm527, %v177, 0.0
    %1015 = vadd.xlane.f32.xlu0 %v1014
    %v1016 = vpop.xlane.xlu0 %1015
    %v1017 = vsel %vm527, %v178, 0.0
    %1018 = vadd.xlane.f32.xlu0 %v1017
    %v1019 = vpop.xlane.xlu0 %1018
    %v1020 = vsel %vm527, %v179, 0.0
    %1021 = vadd.xlane.f32.xlu0 %v1020
    %v1022 = vpop.xlane.xlu0 %1021
    %v1023 = vsel %vm527, %v180, 0.0
    %1024 = vadd.xlane.f32.xlu0 %v1023
    %v1025 = vpop.xlane.xlu0 %1024
    %v1026 = vsel %vm527, %v181, 0.0
    %1027 = vadd.xlane.f32.xlu0 %v1026
    %v1028 = vpop.xlane.xlu0 %1027
    %v1029 = vsel %vm527, %v182, 0.0
    %1030 = vadd.xlane.f32.xlu0 %v1029
    %v1031 = vpop.xlane.xlu0 %1030
    %v1032 = vsel %vm527, %v183, 0.0
    %1033 = vadd.xlane.f32.xlu0 %v1032
    %v1034 = vpop.xlane.xlu0 %1033
    %v1035 = vsel %vm527, %v184, 0.0
    %1036 = vadd.xlane.f32.xlu0 %v1035
    %v1037 = vpop.xlane.xlu0 %1036
    %v1038 = vsel %vm527, %v185, 0.0
    %1039 = vadd.xlane.f32.xlu0 %v1038
    %v1040 = vpop.xlane.xlu0 %1039
    %v1041 = vsel %vm527, %v186, 0.0
    %1042 = vadd.xlane.f32.xlu0 %v1041
    %v1043 = vpop.xlane.xlu0 %1042
    %v1044 = vsel %vm527, %v187, 0.0
    %1045 = vadd.xlane.f32.xlu0 %v1044
    %v1046 = vpop.xlane.xlu0 %1045
    %v1047 = vsel %vm527, %v188, 0.0
    %1048 = vadd.xlane.f32.xlu0 %v1047
    %v1049 = vpop.xlane.xlu0 %1048
    %v1050 = vsel %vm527, %v189, 0.0
    %1051 = vadd.xlane.f32.xlu0 %v1050
    %v1052 = vpop.xlane.xlu0 %1051
    %v1053 = vsel %vm527, %v190, 0.0
    %1054 = vadd.xlane.f32.xlu0 %v1053
    %v1055 = vpop.xlane.xlu0 %1054
    %v1056 = vsel %vm527, %v191, 0.0
    %1057 = vadd.xlane.f32.xlu0 %v1056
    %v1058 = vpop.xlane.xlu0 %1057
    %v1059 = vsel %vm527, %v192, 0.0
    %1060 = vadd.xlane.f32.xlu0 %v1059
    %v1061 = vpop.xlane.xlu0 %1060
    %v1062 = vsel %vm527, %v193, 0.0
    %1063 = vadd.xlane.f32.xlu0 %v1062
    %v1064 = vpop.xlane.xlu0 %1063
    %v1065 = vsel %vm527, %v194, 0.0
    %1066 = vadd.xlane.f32.xlu0 %v1065
    %v1067 = vpop.xlane.xlu0 %1066
    %v1068 = vsel %vm527, %v195, 0.0
    %1069 = vadd.xlane.f32.xlu0 %v1068
    %v1070 = vpop.xlane.xlu0 %1069
    %v1071 = vsel %vm527, %v196, 0.0
    %1072 = vadd.xlane.f32.xlu0 %v1071
    %v1073 = vpop.xlane.xlu0 %1072
    %v1074 = vsel %vm527, %v197, 0.0
    %1075 = vadd.xlane.f32.xlu0 %v1074
    %v1076 = vpop.xlane.xlu0 %1075
    %v1077 = vsel %vm527, %v198, 0.0
    %1078 = vadd.xlane.f32.xlu0 %v1077
    %v1079 = vpop.xlane.xlu0 %1078
    %v1080 = vsel %vm527, %v199, 0.0
    %1081 = vadd.xlane.f32.xlu0 %v1080
    %v1082 = vpop.xlane.xlu0 %1081
    %v1083 = vsel %vm527, %v200, 0.0
    %1084 = vadd.xlane.f32.xlu0 %v1083
    %v1085 = vpop.xlane.xlu0 %1084
    %v1086 = vsel %vm527, %v201, 0.0
    %1087 = vadd.xlane.f32.xlu0 %v1086
    %v1088 = vpop.xlane.xlu0 %1087
    %v1089 = vsel %vm527, %v202, 0.0
    %1090 = vadd.xlane.f32.xlu0 %v1089
    %v1091 = vpop.xlane.xlu0 %1090
    %v1092 = vsel %vm527, %v203, 0.0
    %1093 = vadd.xlane.f32.xlu0 %v1092
    %v1094 = vpop.xlane.xlu0 %1093
    %v1095 = vsel %vm527, %v204, 0.0
    %1096 = vadd.xlane.f32.xlu0 %v1095
    %v1097 = vpop.xlane.xlu0 %1096
    %v1098 = vsel %vm527, %v205, 0.0
    %1099 = vadd.xlane.f32.xlu0 %v1098
    %v1100 = vpop.xlane.xlu0 %1099
    %v1101 = vsel %vm527, %v206, 0.0
    %1102 = vadd.xlane.f32.xlu0 %v1101
    %v1103 = vpop.xlane.xlu0 %1102
    %v1104 = vsel %vm527, %v207, 0.0
    %1105 = vadd.xlane.f32.xlu0 %v1104
    %v1106 = vpop.xlane.xlu0 %1105
    %v1107 = vsel %vm527, %v208, 0.0
    %1108 = vadd.xlane.f32.xlu0 %v1107
    %v1109 = vpop.xlane.xlu0 %1108
    %v1110 = vsel %vm527, %v209, 0.0
    %1111 = vadd.xlane.f32.xlu0 %v1110
    %v1112 = vpop.xlane.xlu0 %1111
    %v1113 = vsel %vm527, %v210, 0.0
    %1114 = vadd.xlane.f32.xlu0 %v1113
    %v1115 = vpop.xlane.xlu0 %1114
    %v1116 = vsel %vm527, %v211, 0.0
    %1117 = vadd.xlane.f32.xlu0 %v1116
    %v1118 = vpop.xlane.xlu0 %1117
    %v1119 = vsel %vm527, %v212, 0.0
    %1120 = vadd.xlane.f32.xlu0 %v1119
    %v1121 = vpop.xlane.xlu0 %1120
    %v1122 = vsel %vm527, %v213, 0.0
    %1123 = vadd.xlane.f32.xlu0 %v1122
    %v1124 = vpop.xlane.xlu0 %1123
    %v1125 = vsel %vm527, %v214, 0.0
    %1126 = vadd.xlane.f32.xlu0 %v1125
    %v1127 = vpop.xlane.xlu0 %1126
    %v1128 = vsel %vm527, %v215, 0.0
    %1129 = vadd.xlane.f32.xlu0 %v1128
    %v1130 = vpop.xlane.xlu0 %1129
    %v1131 = vsel %vm527, %v216, 0.0
    %1132 = vadd.xlane.f32.xlu0 %v1131
    %v1133 = vpop.xlane.xlu0 %1132
    %v1134 = vsel %vm527, %v217, 0.0
    %1135 = vadd.xlane.f32.xlu0 %v1134
    %v1136 = vpop.xlane.xlu0 %1135
    %v1137 = vsel %vm527, %v218, 0.0
    %1138 = vadd.xlane.f32.xlu0 %v1137
    %v1139 = vpop.xlane.xlu0 %1138
    %v1140 = vsel %vm527, %v219, 0.0
    %1141 = vadd.xlane.f32.xlu0 %v1140
    %v1142 = vpop.xlane.xlu0 %1141
    %v1143 = vsel %vm527, %v220, 0.0
    %1144 = vadd.xlane.f32.xlu0 %v1143
    %v1145 = vpop.xlane.xlu0 %1144
    %v1146 = vsel %vm527, %v221, 0.0
    %1147 = vadd.xlane.f32.xlu0 %v1146
    %v1148 = vpop.xlane.xlu0 %1147
    %v1149 = vsel %vm527, %v222, 0.0
    %1150 = vadd.xlane.f32.xlu0 %v1149
    %v1151 = vpop.xlane.xlu0 %1150
    %v1152 = vsel %vm527, %v223, 0.0
    %1153 = vadd.xlane.f32.xlu0 %v1152
    %v1154 = vpop.xlane.xlu0 %1153
    %v1155 = vsel %vm527, %v224, 0.0
    %1156 = vadd.xlane.f32.xlu0 %v1155
    %v1157 = vpop.xlane.xlu0 %1156
    %v1158 = vsel %vm527, %v225, 0.0
    %1159 = vadd.xlane.f32.xlu0 %v1158
    %v1160 = vpop.xlane.xlu0 %1159
    %v1161 = vsel %vm527, %v226, 0.0
    %1162 = vadd.xlane.f32.xlu0 %v1161
    %v1163 = vpop.xlane.xlu0 %1162
    %v1164 = vsel %vm527, %v227, 0.0
    %1165 = vadd.xlane.f32.xlu0 %v1164
    %v1166 = vpop.xlane.xlu0 %1165
    %v1167 = vsel %vm527, %v228, 0.0
    %1168 = vadd.xlane.f32.xlu0 %v1167
    %v1169 = vpop.xlane.xlu0 %1168
    %v1170 = vsel %vm527, %v229, 0.0
    %1171 = vadd.xlane.f32.xlu0 %v1170
    %v1172 = vpop.xlane.xlu0 %1171
    %v1173 = vsel %vm527, %v230, 0.0
    %1174 = vadd.xlane.f32.xlu0 %v1173
    %v1175 = vpop.xlane.xlu0 %1174
    %v1176 = vsel %vm527, %v231, 0.0
    %1177 = vadd.xlane.f32.xlu0 %v1176
    %v1178 = vpop.xlane.xlu0 %1177
    %v1179 = vsel %vm527, %v232, 0.0
    %1180 = vadd.xlane.f32.xlu0 %v1179
    %v1181 = vpop.xlane.xlu0 %1180
    %v1182 = vsel %vm527, %v233, 0.0
    %1183 = vadd.xlane.f32.xlu0 %v1182
    %v1184 = vpop.xlane.xlu0 %1183
    %v1185 = vsel %vm527, %v234, 0.0
    %1186 = vadd.xlane.f32.xlu0 %v1185
    %v1187 = vpop.xlane.xlu0 %1186
    %v1188 = vsel %vm527, %v235, 0.0
    %1189 = vadd.xlane.f32.xlu0 %v1188
    %v1190 = vpop.xlane.xlu0 %1189
    %v1191 = vsel %vm527, %v236, 0.0
    %1192 = vadd.xlane.f32.xlu0 %v1191
    %v1193 = vpop.xlane.xlu0 %1192
    %v1194 = vsel %vm527, %v237, 0.0
    %1195 = vadd.xlane.f32.xlu0 %v1194
    %v1196 = vpop.xlane.xlu0 %1195
    %v1197 = vsel %vm527, %v238, 0.0
    %1198 = vadd.xlane.f32.xlu0 %v1197
    %v1199 = vpop.xlane.xlu0 %1198
    %v1200 = vsel %vm527, %v239, 0.0
    %1201 = vadd.xlane.f32.xlu0 %v1200
    %v1202 = vpop.xlane.xlu0 %1201
    %v1203 = vsel %vm527, %v240, 0.0
    %1204 = vadd.xlane.f32.xlu0 %v1203
    %v1205 = vpop.xlane.xlu0 %1204
    %v1206 = vsel %vm527, %v241, 0.0
    %1207 = vadd.xlane.f32.xlu0 %v1206
    %v1208 = vpop.xlane.xlu0 %1207
    %v1209 = vsel %vm527, %v242, 0.0
    %1210 = vadd.xlane.f32.xlu0 %v1209
    %v1211 = vpop.xlane.xlu0 %1210
    %v1212 = vsel %vm527, %v243, 0.0
    %1213 = vadd.xlane.f32.xlu0 %v1212
    %v1214 = vpop.xlane.xlu0 %1213
    %v1215 = vsel %vm527, %v244, 0.0
    %1216 = vadd.xlane.f32.xlu0 %v1215
    %v1217 = vpop.xlane.xlu0 %1216
    %v1218 = vsel %vm527, %v245, 0.0
    %1219 = vadd.xlane.f32.xlu0 %v1218
    %v1220 = vpop.xlane.xlu0 %1219
    %v1221 = vsel %vm527, %v246, 0.0
    %1222 = vadd.xlane.f32.xlu0 %v1221
    %v1223 = vpop.xlane.xlu0 %1222
    %v1224 = vsel %vm527, %v247, 0.0
    %1225 = vadd.xlane.f32.xlu0 %v1224
    %v1226 = vpop.xlane.xlu0 %1225
    %v1227 = vsel %vm527, %v248, 0.0
    %1228 = vadd.xlane.f32.xlu0 %v1227
    %v1229 = vpop.xlane.xlu0 %1228
    %v1230 = vsel %vm527, %v249, 0.0
    %1231 = vadd.xlane.f32.xlu0 %v1230
    %v1232 = vpop.xlane.xlu0 %1231
    %v1233 = vsel %vm527, %v250, 0.0
    %1234 = vadd.xlane.f32.xlu0 %v1233
    %v1235 = vpop.xlane.xlu0 %1234
    %v1236 = vsel %vm527, %v251, 0.0
    %1237 = vadd.xlane.f32.xlu0 %v1236
    %v1238 = vpop.xlane.xlu0 %1237
    %v1239 = vsel %vm527, %v252, 0.0
    %1240 = vadd.xlane.f32.xlu0 %v1239
    %v1241 = vpop.xlane.xlu0 %1240
    %v1242 = vsel %vm527, %v253, 0.0
    %1243 = vadd.xlane.f32.xlu0 %v1242
    %v1244 = vpop.xlane.xlu0 %1243
    %v1245 = vsel %vm527, %v254, 0.0
    %1246 = vadd.xlane.f32.xlu0 %v1245
    %v1247 = vpop.xlane.xlu0 %1246
    %v1248 = vsel %vm527, %v255, 0.0
    %1249 = vadd.xlane.f32.xlu0 %v1248
    %v1250 = vpop.xlane.xlu0 %1249
    %v1251 = vsel %vm527, %v256, 0.0
    %1252 = vadd.xlane.f32.xlu0 %v1251
    %v1253 = vpop.xlane.xlu0 %1252
    %v1254 = vsel %vm527, %v257, 0.0
    %1255 = vadd.xlane.f32.xlu0 %v1254
    %v1256 = vpop.xlane.xlu0 %1255
    %v1257 = vsel %vm527, %v258, 0.0
    %1258 = vadd.xlane.f32.xlu0 %v1257
    %v1259 = vpop.xlane.xlu0 %1258
    %v1260 = vsel %vm527, %v259, 0.0
    %1261 = vadd.xlane.f32.xlu0 %v1260
    %v1262 = vpop.xlane.xlu0 %1261
    %v1263 = vsel %vm527, %v260, 0.0
    %1264 = vadd.xlane.f32.xlu0 %v1263
    %v1265 = vpop.xlane.xlu0 %1264
    %v1266 = vsel %vm527, %v261, 0.0
    %1267 = vadd.xlane.f32.xlu0 %v1266
    %v1268 = vpop.xlane.xlu0 %1267
    %v1269 = vsel %vm527, %v262, 0.0
    %1270 = vadd.xlane.f32.xlu0 %v1269
    %v1271 = vpop.xlane.xlu0 %1270
    %v1272 = vsel %vm527, %v263, 0.0
    %1273 = vadd.xlane.f32.xlu0 %v1272
    %v1274 = vpop.xlane.xlu0 %1273
    %v1275 = vsel %vm527, %v264, 0.0
    %1276 = vadd.xlane.f32.xlu0 %v1275
    %v1277 = vpop.xlane.xlu0 %1276
    %v1278 = vsel %vm527, %v265, 0.0
    %1279 = vadd.xlane.f32.xlu0 %v1278
    %v1280 = vpop.xlane.xlu0 %1279
    %v1281 = vsel %vm527, %v266, 0.0
    %1282 = vadd.xlane.f32.xlu0 %v1281
    %v1283 = vpop.xlane.xlu0 %1282
    %v1284 = vsel %vm527, %v267, 0.0
    %1285 = vadd.xlane.f32.xlu0 %v1284
    %v1286 = vpop.xlane.xlu0 %1285
    %v1287 = vsel %vm527, %v268, 0.0
    %1288 = vadd.xlane.f32.xlu0 %v1287
    %v1289 = vpop.xlane.xlu0 %1288
    %v1290 = vsel %vm527, %v269, 0.0
    %1291 = vadd.xlane.f32.xlu0 %v1290
    %v1292 = vpop.xlane.xlu0 %1291
    %v1293 = vsel %vm527, %v270, 0.0
    %1294 = vadd.xlane.f32.xlu0 %v1293
    %v1295 = vpop.xlane.xlu0 %1294
    %v1296 = vsel %vm527, %v271, 0.0
    %1297 = vadd.xlane.f32.xlu0 %v1296
    %v1298 = vpop.xlane.xlu0 %1297
    %v1299 = vsel %vm527, %v272, 0.0
    %1300 = vadd.xlane.f32.xlu0 %v1299
    %v1301 = vpop.xlane.xlu0 %1300
    %v1302 = vsel %vm527, %v273, 0.0
    %1303 = vadd.xlane.f32.xlu0 %v1302
    %v1304 = vpop.xlane.xlu0 %1303
    %v1305 = vsel %vm527, %v274, 0.0
    %1306 = vadd.xlane.f32.xlu0 %v1305
    %v1307 = vpop.xlane.xlu0 %1306
    %v1308 = vsel %vm527, %v275, 0.0
    %1309 = vadd.xlane.f32.xlu0 %v1308
    %v1310 = vpop.xlane.xlu0 %1309
    %v1311 = vsel %vm527, %v276, 0.0
    %1312 = vadd.xlane.f32.xlu0 %v1311
    %v1313 = vpop.xlane.xlu0 %1312
    %v1314 = vsel %vm527, %v277, 0.0
    %1315 = vadd.xlane.f32.xlu0 %v1314
    %v1316 = vpop.xlane.xlu0 %1315
    %v1317 = vsel %vm527, %v278, 0.0
    %1318 = vadd.xlane.f32.xlu0 %v1317
    %v1319 = vpop.xlane.xlu0 %1318
    %v1320 = vsel %vm527, %v279, 0.0
    %1321 = vadd.xlane.f32.xlu0 %v1320
    %v1322 = vpop.xlane.xlu0 %1321
    %v1323 = vsel %vm527, %v280, 0.0
    %1324 = vadd.xlane.f32.xlu0 %v1323
    %v1325 = vpop.xlane.xlu0 %1324
    %v1326 = vsel %vm527, %v281, 0.0
    %1327 = vadd.xlane.f32.xlu0 %v1326
    %v1328 = vpop.xlane.xlu0 %1327
    %v1329 = vsel %vm527, %v282, 0.0
    %1330 = vadd.xlane.f32.xlu0 %v1329
    %v1331 = vpop.xlane.xlu0 %1330
    %v1332 = vsel %vm527, %v283, 0.0
    %1333 = vadd.xlane.f32.xlu0 %v1332
    %v1334 = vpop.xlane.xlu0 %1333
    %v1335 = vsel %vm527, %v284, 0.0
    %1336 = vadd.xlane.f32.xlu0 %v1335
    %v1337 = vpop.xlane.xlu0 %1336
    %v1338 = vsel %vm527, %v285, 0.0
    %1339 = vadd.xlane.f32.xlu0 %v1338
    %v1340 = vpop.xlane.xlu0 %1339
    %v1341 = vsel %vm527, %v286, 0.0
    %1342 = vadd.xlane.f32.xlu0 %v1341
    %v1343 = vpop.xlane.xlu0 %1342
    %v1344 = vsel %vm527, %v287, 0.0
    %1345 = vadd.xlane.f32.xlu0 %v1344
    %v1346 = vpop.xlane.xlu0 %1345
    %v1347 = vsel %vm527, %v288, 0.0
    %1348 = vadd.xlane.f32.xlu0 %v1347
    %v1349 = vpop.xlane.xlu0 %1348
    %v1350 = vsel %vm527, %v289, 0.0
    %1351 = vadd.xlane.f32.xlu0 %v1350
    %v1352 = vpop.xlane.xlu0 %1351
    %v1353 = vsel %vm527, %v290, 0.0
    %1354 = vadd.xlane.f32.xlu0 %v1353
    %v1355 = vpop.xlane.xlu0 %1354
    %v1356 = vsel %vm527, %v291, 0.0
    %1357 = vadd.xlane.f32.xlu0 %v1356
    %v1358 = vpop.xlane.xlu0 %1357
    %v1359 = vsel %vm527, %v292, 0.0
    %1360 = vadd.xlane.f32.xlu0 %v1359
    %v1361 = vpop.xlane.xlu0 %1360
    %v1362 = vsel %vm527, %v293, 0.0
    %1363 = vadd.xlane.f32.xlu0 %v1362
    %v1364 = vpop.xlane.xlu0 %1363
    %v1365 = vsel %vm527, %v294, 0.0
    %1366 = vadd.xlane.f32.xlu0 %v1365
    %v1367 = vpop.xlane.xlu0 %1366
    %v1368 = vsel %vm527, %v295, 0.0
    %1369 = vadd.xlane.f32.xlu0 %v1368
    %v1370 = vpop.xlane.xlu0 %1369
    %v1371 = vsel %vm527, %v296, 0.0
    %1372 = vadd.xlane.f32.xlu0 %v1371
    %v1373 = vpop.xlane.xlu0 %1372
    %v1374 = vsel %vm527, %v297, 0.0
    %1375 = vadd.xlane.f32.xlu0 %v1374
    %v1376 = vpop.xlane.xlu0 %1375
    %v1377 = vsel %vm527, %v298, 0.0
    %1378 = vadd.xlane.f32.xlu0 %v1377
    %v1379 = vpop.xlane.xlu0 %1378
    %v1380 = vsel %vm527, %v299, 0.0
    %1381 = vadd.xlane.f32.xlu0 %v1380
    %v1382 = vpop.xlane.xlu0 %1381
    %v1383 = vsel %vm527, %v300, 0.0
    %1384 = vadd.xlane.f32.xlu0 %v1383
    %v1385 = vpop.xlane.xlu0 %1384
    %v1386 = vsel %vm527, %v301, 0.0
    %1387 = vadd.xlane.f32.xlu0 %v1386
    %v1388 = vpop.xlane.xlu0 %1387
    %v1389 = vsel %vm527, %v302, 0.0
    %1390 = vadd.xlane.f32.xlu0 %v1389
    %v1391 = vpop.xlane.xlu0 %1390
    %v1392 = vsel %vm527, %v303, 0.0
    %1393 = vadd.xlane.f32.xlu0 %v1392
    %v1394 = vpop.xlane.xlu0 %1393
    %v1395 = vsel %vm527, %v304, 0.0
    %1396 = vadd.xlane.f32.xlu0 %v1395
    %v1397 = vpop.xlane.xlu0 %1396
    %v1398 = vsel %vm527, %v305, 0.0
    %1399 = vadd.xlane.f32.xlu0 %v1398
    %v1400 = vpop.xlane.xlu0 %1399
    %v1401 = vsel %vm527, %v306, 0.0
    %1402 = vadd.xlane.f32.xlu0 %v1401
    %v1403 = vpop.xlane.xlu0 %1402
    %v1404 = vsel %vm527, %v307, 0.0
    %1405 = vadd.xlane.f32.xlu0 %v1404
    %v1406 = vpop.xlane.xlu0 %1405
    %v1407 = vsel %vm527, %v308, 0.0
    %1408 = vadd.xlane.f32.xlu0 %v1407
    %v1409 = vpop.xlane.xlu0 %1408
    %v1410 = vsel %vm527, %v309, 0.0
    %1411 = vadd.xlane.f32.xlu0 %v1410
    %v1412 = vpop.xlane.xlu0 %1411
    %v1413 = vsel %vm527, %v310, 0.0
    %1414 = vadd.xlane.f32.xlu0 %v1413
    %v1415 = vpop.xlane.xlu0 %1414
    %v1416 = vsel %vm527, %v311, 0.0
    %1417 = vadd.xlane.f32.xlu0 %v1416
    %v1418 = vpop.xlane.xlu0 %1417
    %v1419 = vsel %vm527, %v312, 0.0
    %1420 = vadd.xlane.f32.xlu0 %v1419
    %v1421 = vpop.xlane.xlu0 %1420
    %v1422 = vsel %vm527, %v313, 0.0
    %1423 = vadd.xlane.f32.xlu0 %v1422
    %v1424 = vpop.xlane.xlu0 %1423
    %v1425 = vsel %vm527, %v314, 0.0
    %1426 = vadd.xlane.f32.xlu0 %v1425
    %v1427 = vpop.xlane.xlu0 %1426
    %v1428 = vsel %vm527, %v315, 0.0
    %1429 = vadd.xlane.f32.xlu0 %v1428
    %v1430 = vpop.xlane.xlu0 %1429
    %v1431 = vsel %vm527, %v316, 0.0
    %1432 = vadd.xlane.f32.xlu0 %v1431
    %v1433 = vpop.xlane.xlu0 %1432
    %v1434 = vsel %vm527, %v317, 0.0
    %1435 = vadd.xlane.f32.xlu0 %v1434
    %v1436 = vpop.xlane.xlu0 %1435
    %v1437 = vsel %vm527, %v318, 0.0
    %1438 = vadd.xlane.f32.xlu0 %v1437
    %v1439 = vpop.xlane.xlu0 %1438
    %v1440 = vsel %vm527, %v319, 0.0
    %1441 = vadd.xlane.f32.xlu0 %v1440
    %v1442 = vpop.xlane.xlu0 %1441
    %v1443 = vsel %vm527, %v320, 0.0
    %1444 = vadd.xlane.f32.xlu0 %v1443
    %v1445 = vpop.xlane.xlu0 %1444
    %v1446 = vsel %vm527, %v321, 0.0
    %1447 = vadd.xlane.f32.xlu0 %v1446
    %v1448 = vpop.xlane.xlu0 %1447
    %v1449 = vsel %vm527, %v322, 0.0
    %1450 = vadd.xlane.f32.xlu0 %v1449
    %v1451 = vpop.xlane.xlu0 %1450
    %v1452 = vsel %vm527, %v323, 0.0
    %1453 = vadd.xlane.f32.xlu0 %v1452
    %v1454 = vpop.xlane.xlu0 %1453
    %v1455 = vsel %vm527, %v324, 0.0
    %1456 = vadd.xlane.f32.xlu0 %v1455
    %v1457 = vpop.xlane.xlu0 %1456
    %v1458 = vsel %vm527, %v325, 0.0
    %1459 = vadd.xlane.f32.xlu0 %v1458
    %v1460 = vpop.xlane.xlu0 %1459
    %v1461 = vsel %vm527, %v326, 0.0
    %1462 = vadd.xlane.f32.xlu0 %v1461
    %v1463 = vpop.xlane.xlu0 %1462
    %v1464 = vsel %vm527, %v327, 0.0
    %1465 = vadd.xlane.f32.xlu0 %v1464
    %v1466 = vpop.xlane.xlu0 %1465
    %v1467 = vsel %vm527, %v328, 0.0
    %1468 = vadd.xlane.f32.xlu0 %v1467
    %v1469 = vpop.xlane.xlu0 %1468
    %v1470 = vsel %vm527, %v329, 0.0
    %1471 = vadd.xlane.f32.xlu0 %v1470
    %v1472 = vpop.xlane.xlu0 %1471
    %v1473 = vsel %vm527, %v330, 0.0
    %1474 = vadd.xlane.f32.xlu0 %v1473
    %v1475 = vpop.xlane.xlu0 %1474
    %v1476 = vsel %vm527, %v331, 0.0
    %1477 = vadd.xlane.f32.xlu0 %v1476
    %v1478 = vpop.xlane.xlu0 %1477
    %v1479 = vsel %vm527, %v332, 0.0
    %1480 = vadd.xlane.f32.xlu0 %v1479
    %v1481 = vpop.xlane.xlu0 %1480
    %v1482 = vsel %vm527, %v333, 0.0
    %1483 = vadd.xlane.f32.xlu0 %v1482
    %v1484 = vpop.xlane.xlu0 %1483
    %v1485 = vsel %vm527, %v334, 0.0
    %1486 = vadd.xlane.f32.xlu0 %v1485
    %v1487 = vpop.xlane.xlu0 %1486
    %v1488 = vsel %vm527, %v335, 0.0
    %1489 = vadd.xlane.f32.xlu0 %v1488
    %v1490 = vpop.xlane.xlu0 %1489
    %v1491 = vsel %vm527, %v336, 0.0
    %1492 = vadd.xlane.f32.xlu0 %v1491
    %v1493 = vpop.xlane.xlu0 %1492
    %v1494 = vsel %vm527, %v337, 0.0
    %1495 = vadd.xlane.f32.xlu0 %v1494
    %v1496 = vpop.xlane.xlu0 %1495
    %v1497 = vsel %vm527, %v338, 0.0
    %1498 = vadd.xlane.f32.xlu0 %v1497
    %v1499 = vpop.xlane.xlu0 %1498
    %v1500 = vsel %vm527, %v339, 0.0
    %1501 = vadd.xlane.f32.xlu0 %v1500
    %v1502 = vpop.xlane.xlu0 %1501
    %v1503 = vsel %vm527, %v340, 0.0
    %1504 = vadd.xlane.f32.xlu0 %v1503
    %v1505 = vpop.xlane.xlu0 %1504
    %v1506 = vsel %vm527, %v341, 0.0
    %1507 = vadd.xlane.f32.xlu0 %v1506
    %v1508 = vpop.xlane.xlu0 %1507
    %v1509 = vsel %vm527, %v342, 0.0
    %1510 = vadd.xlane.f32.xlu0 %v1509
    %v1511 = vpop.xlane.xlu0 %1510
    %v1512 = vsel %vm527, %v343, 0.0
    %1513 = vadd.xlane.f32.xlu0 %v1512
    %v1514 = vpop.xlane.xlu0 %1513
    %v1515 = vsel %vm527, %v344, 0.0
    %1516 = vadd.xlane.f32.xlu0 %v1515
    %v1517 = vpop.xlane.xlu0 %1516
    %v1518 = vsel %vm527, %v345, 0.0
    %1519 = vadd.xlane.f32.xlu0 %v1518
    %v1520 = vpop.xlane.xlu0 %1519
    %v1521 = vsel %vm527, %v346, 0.0
    %1522 = vadd.xlane.f32.xlu0 %v1521
    %v1523 = vpop.xlane.xlu0 %1522
    %v1524 = vsel %vm527, %v347, 0.0
    %1525 = vadd.xlane.f32.xlu0 %v1524
    %v1526 = vpop.xlane.xlu0 %1525
    %v1527 = vsel %vm527, %v348, 0.0
    %1528 = vadd.xlane.f32.xlu0 %v1527
    %v1529 = vpop.xlane.xlu0 %1528
    %v1530 = vsel %vm527, %v349, 0.0
    %1531 = vadd.xlane.f32.xlu0 %v1530
    %v1532 = vpop.xlane.xlu0 %1531
    %v1533 = vsel %vm527, %v350, 0.0
    %1534 = vadd.xlane.f32.xlu0 %v1533
    %v1535 = vpop.xlane.xlu0 %1534
    %v1536 = vsel %vm527, %v351, 0.0
    %1537 = vadd.xlane.f32.xlu0 %v1536
    %v1538 = vpop.xlane.xlu0 %1537
    %v1539 = vsel %vm527, %v352, 0.0
    %1540 = vadd.xlane.f32.xlu0 %v1539
    %v1541 = vpop.xlane.xlu0 %1540
    %v1542 = vsel %vm527, %v353, 0.0
    %1543 = vadd.xlane.f32.xlu0 %v1542
    %v1544 = vpop.xlane.xlu0 %1543
    %v1545 = vsel %vm527, %v354, 0.0
    %1546 = vadd.xlane.f32.xlu0 %v1545
    %v1547 = vpop.xlane.xlu0 %1546
    %v1548 = vsel %vm527, %v355, 0.0
    %1549 = vadd.xlane.f32.xlu0 %v1548
    %v1550 = vpop.xlane.xlu0 %1549
    %v1551 = vsel %vm527, %v356, 0.0
    %1552 = vadd.xlane.f32.xlu0 %v1551
    %v1553 = vpop.xlane.xlu0 %1552
    %v1554 = vsel %vm527, %v357, 0.0
    %1555 = vadd.xlane.f32.xlu0 %v1554
    %v1556 = vpop.xlane.xlu0 %1555
    %v1557 = vsel %vm527, %v358, 0.0
    %1558 = vadd.xlane.f32.xlu0 %v1557
    %v1559 = vpop.xlane.xlu0 %1558
    %v1560 = vsel %vm527, %v359, 0.0
    %1561 = vadd.xlane.f32.xlu0 %v1560
    %v1562 = vpop.xlane.xlu0 %1561
    %v1563 = vsel %vm527, %v360, 0.0
    %1564 = vadd.xlane.f32.xlu0 %v1563
    %v1565 = vpop.xlane.xlu0 %1564
    %v1566 = vsel %vm527, %v361, 0.0
    %1567 = vadd.xlane.f32.xlu0 %v1566
    %v1568 = vpop.xlane.xlu0 %1567
    %v1569 = vsel %vm527, %v362, 0.0
    %1570 = vadd.xlane.f32.xlu0 %v1569
    %v1571 = vpop.xlane.xlu0 %1570
    %v1572 = vsel %vm527, %v363, 0.0
    %1573 = vadd.xlane.f32.xlu0 %v1572
    %v1574 = vpop.xlane.xlu0 %1573
    %v1575 = vsel %vm527, %v364, 0.0
    %1576 = vadd.xlane.f32.xlu0 %v1575
    %v1577 = vpop.xlane.xlu0 %1576
    %v1578 = vsel %vm527, %v365, 0.0
    %1579 = vadd.xlane.f32.xlu0 %v1578
    %v1580 = vpop.xlane.xlu0 %1579
    %v1581 = vsel %vm527, %v366, 0.0
    %1582 = vadd.xlane.f32.xlu0 %v1581
    %v1583 = vpop.xlane.xlu0 %1582
    %v1584 = vsel %vm527, %v367, 0.0
    %1585 = vadd.xlane.f32.xlu0 %v1584
    %v1586 = vpop.xlane.xlu0 %1585
    %v1587 = vsel %vm527, %v368, 0.0
    %1588 = vadd.xlane.f32.xlu0 %v1587
    %v1589 = vpop.xlane.xlu0 %1588
    %v1590 = vsel %vm527, %v369, 0.0
    %1591 = vadd.xlane.f32.xlu0 %v1590
    %v1592 = vpop.xlane.xlu0 %1591
    %v1593 = vsel %vm527, %v370, 0.0
    %1594 = vadd.xlane.f32.xlu0 %v1593
    %v1595 = vpop.xlane.xlu0 %1594
    %v1596 = vsel %vm527, %v371, 0.0
    %1597 = vadd.xlane.f32.xlu0 %v1596
    %v1598 = vpop.xlane.xlu0 %1597
    %v1599 = vsel %vm527, %v372, 0.0
    %1600 = vadd.xlane.f32.xlu0 %v1599
    %v1601 = vpop.xlane.xlu0 %1600
    %v1602 = vsel %vm527, %v373, 0.0
    %1603 = vadd.xlane.f32.xlu0 %v1602
    %v1604 = vpop.xlane.xlu0 %1603
    %v1605 = vsel %vm527, %v374, 0.0
    %1606 = vadd.xlane.f32.xlu0 %v1605
    %v1607 = vpop.xlane.xlu0 %1606
    %v1608 = vsel %vm527, %v375, 0.0
    %1609 = vadd.xlane.f32.xlu0 %v1608
    %v1610 = vpop.xlane.xlu0 %1609
    %v1611 = vsel %vm527, %v376, 0.0
    %1612 = vadd.xlane.f32.xlu0 %v1611
    %v1613 = vpop.xlane.xlu0 %1612
    %v1614 = vsel %vm527, %v377, 0.0
    %1615 = vadd.xlane.f32.xlu0 %v1614
    %v1616 = vpop.xlane.xlu0 %1615
    %v1617 = vsel %vm527, %v378, 0.0
    %1618 = vadd.xlane.f32.xlu0 %v1617
    %v1619 = vpop.xlane.xlu0 %1618
    %v1620 = vsel %vm527, %v379, 0.0
    %1621 = vadd.xlane.f32.xlu0 %v1620
    %v1622 = vpop.xlane.xlu0 %1621
    %v1623 = vsel %vm527, %v380, 0.0
    %1624 = vadd.xlane.f32.xlu0 %v1623
    %v1625 = vpop.xlane.xlu0 %1624
    %v1626 = vsel %vm527, %v381, 0.0
    %1627 = vadd.xlane.f32.xlu0 %v1626
    %v1628 = vpop.xlane.xlu0 %1627
    %v1629 = vsel %vm527, %v382, 0.0
    %1630 = vadd.xlane.f32.xlu0 %v1629
    %v1631 = vpop.xlane.xlu0 %1630
    %v1632 = vsel %vm527, %v383, 0.0
    %1633 = vadd.xlane.f32.xlu0 %v1632
    %v1634 = vpop.xlane.xlu0 %1633
    %v1635 = vsel %vm527, %v384, 0.0
    %1636 = vadd.xlane.f32.xlu0 %v1635
    %v1637 = vpop.xlane.xlu0 %1636
    %v1638 = vsel %vm527, %v385, 0.0
    %1639 = vadd.xlane.f32.xlu0 %v1638
    %v1640 = vpop.xlane.xlu0 %1639
    %v1641 = vsel %vm527, %v386, 0.0
    %1642 = vadd.xlane.f32.xlu0 %v1641
    %v1643 = vpop.xlane.xlu0 %1642
    %v1644 = vsel %vm527, %v387, 0.0
    %1645 = vadd.xlane.f32.xlu0 %v1644
    %v1646 = vpop.xlane.xlu0 %1645
    %v1647 = vsel %vm527, %v388, 0.0
    %1648 = vadd.xlane.f32.xlu0 %v1647
    %v1649 = vpop.xlane.xlu0 %1648
    %v1650 = vsel %vm527, %v389, 0.0
    %1651 = vadd.xlane.f32.xlu0 %v1650
    %v1652 = vpop.xlane.xlu0 %1651
    %v1653 = vsel %vm527, %v390, 0.0
    %1654 = vadd.xlane.f32.xlu0 %v1653
    %v1655 = vpop.xlane.xlu0 %1654
    %v1656 = vsel %vm527, %v391, 0.0
    %1657 = vadd.xlane.f32.xlu0 %v1656
    %v1658 = vpop.xlane.xlu0 %1657
    %v1659 = vsel %vm527, %v392, 0.0
    %1660 = vadd.xlane.f32.xlu0 %v1659
    %v1661 = vpop.xlane.xlu0 %1660
    %v1662 = vsel %vm527, %v393, 0.0
    %1663 = vadd.xlane.f32.xlu0 %v1662
    %v1664 = vpop.xlane.xlu0 %1663
    %v1665 = vsel %vm527, %v394, 0.0
    %1666 = vadd.xlane.f32.xlu0 %v1665
    %v1667 = vpop.xlane.xlu0 %1666
    %v1668 = vsel %vm527, %v395, 0.0
    %1669 = vadd.xlane.f32.xlu0 %v1668
    %v1670 = vpop.xlane.xlu0 %1669
    %v1671 = vsel %vm527, %v396, 0.0
    %1672 = vadd.xlane.f32.xlu0 %v1671
    %v1673 = vpop.xlane.xlu0 %1672
    %v1674 = vsel %vm527, %v397, 0.0
    %1675 = vadd.xlane.f32.xlu0 %v1674
    %v1676 = vpop.xlane.xlu0 %1675
    %v1677 = vsel %vm527, %v398, 0.0
    %1678 = vadd.xlane.f32.xlu0 %v1677
    %v1679 = vpop.xlane.xlu0 %1678
    %v1680 = vsel %vm527, %v399, 0.0
    %1681 = vadd.xlane.f32.xlu0 %v1680
    %v1682 = vpop.xlane.xlu0 %1681
    %v1683 = vsel %vm527, %v400, 0.0
    %1684 = vadd.xlane.f32.xlu0 %v1683
    %v1685 = vpop.xlane.xlu0 %1684
    %v1686 = vsel %vm527, %v401, 0.0
    %1687 = vadd.xlane.f32.xlu0 %v1686
    %v1688 = vpop.xlane.xlu0 %1687
    %v1689 = vsel %vm527, %v402, 0.0
    %1690 = vadd.xlane.f32.xlu0 %v1689
    %v1691 = vpop.xlane.xlu0 %1690
    %v1692 = vsel %vm527, %v403, 0.0
    %1693 = vadd.xlane.f32.xlu0 %v1692
    %v1694 = vpop.xlane.xlu0 %1693
    %v1695 = vsel %vm527, %v404, 0.0
    %1696 = vadd.xlane.f32.xlu0 %v1695
    %v1697 = vpop.xlane.xlu0 %1696
    %v1698 = vsel %vm527, %v405, 0.0
    %1699 = vadd.xlane.f32.xlu0 %v1698
    %v1700 = vpop.xlane.xlu0 %1699
    %v1701 = vsel %vm527, %v406, 0.0
    %1702 = vadd.xlane.f32.xlu0 %v1701
    %v1703 = vpop.xlane.xlu0 %1702
    %v1704 = vsel %vm527, %v407, 0.0
    %1705 = vadd.xlane.f32.xlu0 %v1704
    %v1706 = vpop.xlane.xlu0 %1705
    %v1707 = vsel %vm527, %v408, 0.0
    %1708 = vadd.xlane.f32.xlu0 %v1707
    %v1709 = vpop.xlane.xlu0 %1708
    %v1710 = vsel %vm527, %v409, 0.0
    %1711 = vadd.xlane.f32.xlu0 %v1710
    %v1712 = vpop.xlane.xlu0 %1711
    %v1713 = vsel %vm527, %v410, 0.0
    %1714 = vadd.xlane.f32.xlu0 %v1713
    %v1715 = vpop.xlane.xlu0 %1714
    %v1716 = vsel %vm527, %v411, 0.0
    %1717 = vadd.xlane.f32.xlu0 %v1716
    %v1718 = vpop.xlane.xlu0 %1717
    %v1719 = vsel %vm527, %v412, 0.0
    %1720 = vadd.xlane.f32.xlu0 %v1719
    %v1721 = vpop.xlane.xlu0 %1720
    %v1722 = vsel %vm527, %v413, 0.0
    %1723 = vadd.xlane.f32.xlu0 %v1722
    %v1724 = vpop.xlane.xlu0 %1723
    %v1725 = vsel %vm527, %v414, 0.0
    %1726 = vadd.xlane.f32.xlu0 %v1725
    %v1727 = vpop.xlane.xlu0 %1726
    %v1728 = vsel %vm527, %v415, 0.0
    %1729 = vadd.xlane.f32.xlu0 %v1728
    %v1730 = vpop.xlane.xlu0 %1729
    %v1731 = vsel %vm527, %v416, 0.0
    %1732 = vadd.xlane.f32.xlu0 %v1731
    %v1733 = vpop.xlane.xlu0 %1732
    %v1734 = vsel %vm527, %v417, 0.0
    %1735 = vadd.xlane.f32.xlu0 %v1734
    %v1736 = vpop.xlane.xlu0 %1735
    %v1737 = vsel %vm527, %v418, 0.0
    %1738 = vadd.xlane.f32.xlu0 %v1737
    %v1739 = vpop.xlane.xlu0 %1738
    %v1740 = vsel %vm527, %v419, 0.0
    %1741 = vadd.xlane.f32.xlu0 %v1740
    %v1742 = vpop.xlane.xlu0 %1741
    %v1743 = vsel %vm527, %v420, 0.0
    %1744 = vadd.xlane.f32.xlu0 %v1743
    %v1745 = vpop.xlane.xlu0 %1744
    %v1746 = vsel %vm527, %v421, 0.0
    %1747 = vadd.xlane.f32.xlu0 %v1746
    %v1748 = vpop.xlane.xlu0 %1747
    %v1749 = vsel %vm527, %v422, 0.0
    %1750 = vadd.xlane.f32.xlu0 %v1749
    %v1751 = vpop.xlane.xlu0 %1750
    %v1752 = vsel %vm527, %v423, 0.0
    %1753 = vadd.xlane.f32.xlu0 %v1752
    %v1754 = vpop.xlane.xlu0 %1753
    %v1755 = vsel %vm527, %v424, 0.0
    %1756 = vadd.xlane.f32.xlu0 %v1755
    %v1757 = vpop.xlane.xlu0 %1756
    %v1758 = vsel %vm527, %v425, 0.0
    %1759 = vadd.xlane.f32.xlu0 %v1758
    %v1760 = vpop.xlane.xlu0 %1759
    %v1761 = vsel %vm527, %v426, 0.0
    %1762 = vadd.xlane.f32.xlu0 %v1761
    %v1763 = vpop.xlane.xlu0 %1762
    %v1764 = vsel %vm527, %v427, 0.0
    %1765 = vadd.xlane.f32.xlu0 %v1764
    %v1766 = vpop.xlane.xlu0 %1765
    %v1767 = vsel %vm527, %v428, 0.0
    %1768 = vadd.xlane.f32.xlu0 %v1767
    %v1769 = vpop.xlane.xlu0 %1768
    %v1770 = vsel %vm527, %v429, 0.0
    %1771 = vadd.xlane.f32.xlu0 %v1770
    %v1772 = vpop.xlane.xlu0 %1771
    %v1773 = vsel %vm527, %v430, 0.0
    %1774 = vadd.xlane.f32.xlu0 %v1773
    %v1775 = vpop.xlane.xlu0 %1774
    %v1776 = vsel %vm527, %v431, 0.0
    %1777 = vadd.xlane.f32.xlu0 %v1776
    %v1778 = vpop.xlane.xlu0 %1777
    %v1779 = vsel %vm527, %v432, 0.0
    %1780 = vadd.xlane.f32.xlu0 %v1779
    %v1781 = vpop.xlane.xlu0 %1780
    %v1782 = vsel %vm527, %v433, 0.0
    %1783 = vadd.xlane.f32.xlu0 %v1782
    %v1784 = vpop.xlane.xlu0 %1783
    %v1785 = vsel %vm527, %v434, 0.0
    %1786 = vadd.xlane.f32.xlu0 %v1785
    %v1787 = vpop.xlane.xlu0 %1786
    %v1788 = vsel %vm527, %v435, 0.0
    %1789 = vadd.xlane.f32.xlu0 %v1788
    %v1790 = vpop.xlane.xlu0 %1789
    %v1791 = vsel %vm527, %v436, 0.0
    %1792 = vadd.xlane.f32.xlu0 %v1791
    %v1793 = vpop.xlane.xlu0 %1792
    %v1794 = vsel %vm527, %v437, 0.0
    %1795 = vadd.xlane.f32.xlu0 %v1794
    %v1796 = vpop.xlane.xlu0 %1795
    %v1797 = vsel %vm527, %v438, 0.0
    %1798 = vadd.xlane.f32.xlu0 %v1797
    %v1799 = vpop.xlane.xlu0 %1798
    %v1800 = vsel %vm527, %v439, 0.0
    %1801 = vadd.xlane.f32.xlu0 %v1800
    %v1802 = vpop.xlane.xlu0 %1801
    %v1803 = vsel %vm527, %v440, 0.0
    %1804 = vadd.xlane.f32.xlu0 %v1803
    %v1805 = vpop.xlane.xlu0 %1804
    %v1806 = vsel %vm527, %v441, 0.0
    %1807 = vadd.xlane.f32.xlu0 %v1806
    %v1808 = vpop.xlane.xlu0 %1807
    %v1809 = vsel %vm527, %v442, 0.0
    %1810 = vadd.xlane.f32.xlu0 %v1809
    %v1811 = vpop.xlane.xlu0 %1810
    %v1812 = vsel %vm527, %v443, 0.0
    %1813 = vadd.xlane.f32.xlu0 %v1812
    %v1814 = vpop.xlane.xlu0 %1813
    %v1815 = vsel %vm527, %v444, 0.0
    %1816 = vadd.xlane.f32.xlu0 %v1815
    %v1817 = vpop.xlane.xlu0 %1816
    %v1818 = vsel %vm527, %v445, 0.0
    %1819 = vadd.xlane.f32.xlu0 %v1818
    %v1820 = vpop.xlane.xlu0 %1819
    %v1821 = vsel %vm527, %v446, 0.0
    %1822 = vadd.xlane.f32.xlu0 %v1821
    %v1823 = vpop.xlane.xlu0 %1822
    %v1824 = vsel %vm527, %v447, 0.0
    %1825 = vadd.xlane.f32.xlu0 %v1824
    %v1826 = vpop.xlane.xlu0 %1825
    %v1827 = vsel %vm527, %v448, 0.0
    %1828 = vadd.xlane.f32.xlu0 %v1827
    %v1829 = vpop.xlane.xlu0 %1828
    %v1830 = vsel %vm527, %v449, 0.0
    %1831 = vadd.xlane.f32.xlu0 %v1830
    %v1832 = vpop.xlane.xlu0 %1831
    %v1833 = vsel %vm527, %v450, 0.0
    %1834 = vadd.xlane.f32.xlu0 %v1833
    %v1835 = vpop.xlane.xlu0 %1834
    %v1836 = vsel %vm527, %v451, 0.0
    %1837 = vadd.xlane.f32.xlu0 %v1836
    %v1838 = vpop.xlane.xlu0 %1837
    %v1839 = vsel %vm527, %v452, 0.0
    %1840 = vadd.xlane.f32.xlu0 %v1839
    %v1841 = vpop.xlane.xlu0 %1840
    %v1842 = vsel %vm527, %v453, 0.0
    %1843 = vadd.xlane.f32.xlu0 %v1842
    %v1844 = vpop.xlane.xlu0 %1843
    %v1845 = vsel %vm527, %v454, 0.0
    %1846 = vadd.xlane.f32.xlu0 %v1845
    %v1847 = vpop.xlane.xlu0 %1846
    %v1848 = vsel %vm527, %v455, 0.0
    %1849 = vadd.xlane.f32.xlu0 %v1848
    %v1850 = vpop.xlane.xlu0 %1849
    %v1851 = vsel %vm527, %v456, 0.0
    %1852 = vadd.xlane.f32.xlu0 %v1851
    %v1853 = vpop.xlane.xlu0 %1852
    %v1854 = vsel %vm527, %v457, 0.0
    %1855 = vadd.xlane.f32.xlu0 %v1854
    %v1856 = vpop.xlane.xlu0 %1855
    %v1857 = vsel %vm527, %v458, 0.0
    %1858 = vadd.xlane.f32.xlu0 %v1857
    %v1859 = vpop.xlane.xlu0 %1858
    %v1860 = vsel %vm527, %v459, 0.0
    %1861 = vadd.xlane.f32.xlu0 %v1860
    %v1862 = vpop.xlane.xlu0 %1861
    %v1863 = vsel %vm527, %v460, 0.0
    %1864 = vadd.xlane.f32.xlu0 %v1863
    %v1865 = vpop.xlane.xlu0 %1864
    %v1866 = vsel %vm527, %v461, 0.0
    %1867 = vadd.xlane.f32.xlu0 %v1866
    %v1868 = vpop.xlane.xlu0 %1867
    %v1869 = vsel %vm527, %v462, 0.0
    %1870 = vadd.xlane.f32.xlu0 %v1869
    %v1871 = vpop.xlane.xlu0 %1870
    %v1872 = vsel %vm527, %v463, 0.0
    %1873 = vadd.xlane.f32.xlu0 %v1872
    %v1874 = vpop.xlane.xlu0 %1873
    %v1875 = vsel %vm527, %v464, 0.0
    %1876 = vadd.xlane.f32.xlu0 %v1875
    %v1877 = vpop.xlane.xlu0 %1876
    %v1878 = vsel %vm527, %v465, 0.0
    %1879 = vadd.xlane.f32.xlu0 %v1878
    %v1880 = vpop.xlane.xlu0 %1879
    %v1881 = vsel %vm527, %v466, 0.0
    %1882 = vadd.xlane.f32.xlu0 %v1881
    %v1883 = vpop.xlane.xlu0 %1882
    %v1884 = vsel %vm527, %v467, 0.0
    %1885 = vadd.xlane.f32.xlu0 %v1884
    %v1886 = vpop.xlane.xlu0 %1885
    %v1887 = vsel %vm527, %v468, 0.0
    %1888 = vadd.xlane.f32.xlu0 %v1887
    %v1889 = vpop.xlane.xlu0 %1888
    %v1890 = vsel %vm527, %v469, 0.0
    %1891 = vadd.xlane.f32.xlu0 %v1890
    %v1892 = vpop.xlane.xlu0 %1891
    %v1893 = vsel %vm527, %v470, 0.0
    %1894 = vadd.xlane.f32.xlu0 %v1893
    %v1895 = vpop.xlane.xlu0 %1894
    %v1896 = vsel %vm527, %v471, 0.0
    %1897 = vadd.xlane.f32.xlu0 %v1896
    %v1898 = vpop.xlane.xlu0 %1897
    %v1899 = vsel %vm527, %v472, 0.0
    %1900 = vadd.xlane.f32.xlu0 %v1899
    %v1901 = vpop.xlane.xlu0 %1900
    %v1902 = vsel %vm527, %v473, 0.0
    %1903 = vadd.xlane.f32.xlu0 %v1902
    %v1904 = vpop.xlane.xlu0 %1903
    %v1905 = vsel %vm527, %v474, 0.0
    %1906 = vadd.xlane.f32.xlu0 %v1905
    %v1907 = vpop.xlane.xlu0 %1906
    %v1908 = vsel %vm527, %v475, 0.0
    %1909 = vadd.xlane.f32.xlu0 %v1908
    %v1910 = vpop.xlane.xlu0 %1909
    %v1911 = vsel %vm527, %v476, 0.0
    %1912 = vadd.xlane.f32.xlu0 %v1911
    %v1913 = vpop.xlane.xlu0 %1912
    %v1914 = vsel %vm527, %v477, 0.0
    %1915 = vadd.xlane.f32.xlu0 %v1914
    %v1916 = vpop.xlane.xlu0 %1915
    %v1917 = vsel %vm527, %v478, 0.0
    %1918 = vadd.xlane.f32.xlu0 %v1917
    %v1919 = vpop.xlane.xlu0 %1918
    %v1920 = vsel %vm527, %v479, 0.0
    %1921 = vadd.xlane.f32.xlu0 %v1920
    %v1922 = vpop.xlane.xlu0 %1921
    %v1923 = vsel %vm527, %v480, 0.0
    %1924 = vadd.xlane.f32.xlu0 %v1923
    %v1925 = vpop.xlane.xlu0 %1924
    %v1926 = vsel %vm527, %v481, 0.0
    %1927 = vadd.xlane.f32.xlu0 %v1926
    %v1928 = vpop.xlane.xlu0 %1927
    %v1929 = vsel %vm527, %v482, 0.0
    %1930 = vadd.xlane.f32.xlu0 %v1929
    %v1931 = vpop.xlane.xlu0 %1930
    %v1932 = vsel %vm527, %v483, 0.0
    %1933 = vadd.xlane.f32.xlu0 %v1932
    %v1934 = vpop.xlane.xlu0 %1933
    %v1935 = vsel %vm527, %v484, 0.0
    %1936 = vadd.xlane.f32.xlu0 %v1935
    %v1937 = vpop.xlane.xlu0 %1936
    %v1938 = vsel %vm527, %v485, 0.0
    %1939 = vadd.xlane.f32.xlu0 %v1938
    %v1940 = vpop.xlane.xlu0 %1939
    %v1941 = vsel %vm527, %v486, 0.0
    %1942 = vadd.xlane.f32.xlu0 %v1941
    %v1943 = vpop.xlane.xlu0 %1942
    %v1944 = vsel %vm527, %v487, 0.0
    %1945 = vadd.xlane.f32.xlu0 %v1944
    %v1946 = vpop.xlane.xlu0 %1945
    %v1947 = vsel %vm527, %v488, 0.0
    %1948 = vadd.xlane.f32.xlu0 %v1947
    %v1949 = vpop.xlane.xlu0 %1948
    %v1950 = vsel %vm527, %v489, 0.0
    %1951 = vadd.xlane.f32.xlu0 %v1950
    %v1952 = vpop.xlane.xlu0 %1951
    %v1953 = vsel %vm527, %v490, 0.0
    %1954 = vadd.xlane.f32.xlu0 %v1953
    %v1955 = vpop.xlane.xlu0 %1954
    %v1956 = vsel %vm527, %v491, 0.0
    %1957 = vadd.xlane.f32.xlu0 %v1956
    %v1958 = vpop.xlane.xlu0 %1957
    %v1959 = vsel %vm527, %v492, 0.0
    %1960 = vadd.xlane.f32.xlu0 %v1959
    %v1961 = vpop.xlane.xlu0 %1960
    %v1962 = vsel %vm527, %v493, 0.0
    %1963 = vadd.xlane.f32.xlu0 %v1962
    %v1964 = vpop.xlane.xlu0 %1963
    %v1965 = vsel %vm527, %v494, 0.0
    %1966 = vadd.xlane.f32.xlu0 %v1965
    %v1967 = vpop.xlane.xlu0 %1966
    %v1968 = vsel %vm527, %v495, 0.0
    %1969 = vadd.xlane.f32.xlu0 %v1968
    %v1970 = vpop.xlane.xlu0 %1969
    %v1971 = vsel %vm527, %v496, 0.0
    %1972 = vadd.xlane.f32.xlu0 %v1971
    %v1973 = vpop.xlane.xlu0 %1972
    %v1974 = vsel %vm527, %v497, 0.0
    %1975 = vadd.xlane.f32.xlu0 %v1974
    %v1976 = vpop.xlane.xlu0 %1975
    %v1977 = vsel %vm527, %v498, 0.0
    %1978 = vadd.xlane.f32.xlu0 %v1977
    %v1979 = vpop.xlane.xlu0 %1978
    %v1980 = vsel %vm527, %v499, 0.0
    %1981 = vadd.xlane.f32.xlu0 %v1980
    %v1982 = vpop.xlane.xlu0 %1981
    %v1983 = vsel %vm527, %v500, 0.0
    %1984 = vadd.xlane.f32.xlu0 %v1983
    %v1985 = vpop.xlane.xlu0 %1984
    %v1986 = vsel %vm527, %v501, 0.0
    %1987 = vadd.xlane.f32.xlu0 %v1986
    %v1988 = vpop.xlane.xlu0 %1987
    %v1989 = vsel %vm527, %v502, 0.0
    %1990 = vadd.xlane.f32.xlu0 %v1989
    %v1991 = vpop.xlane.xlu0 %1990
    %v1992 = vsel %vm527, %v503, 0.0
    %1993 = vadd.xlane.f32.xlu0 %v1992
    %v1994 = vpop.xlane.xlu0 %1993
    %v1995 = vsel %vm527, %v504, 0.0
    %1996 = vadd.xlane.f32.xlu0 %v1995
    %v1997 = vpop.xlane.xlu0 %1996
    %v1998 = vsel %vm527, %v505, 0.0
    %1999 = vadd.xlane.f32.xlu0 %v1998
    %v2000 = vpop.xlane.xlu0 %1999
    %v2001 = vsel %vm527, %v506, 0.0
    %2002 = vadd.xlane.f32.xlu0 %v2001
    %v2003 = vpop.xlane.xlu0 %2002
    %v2004 = vsel %vm527, %v507, 0.0
    %2005 = vadd.xlane.f32.xlu0 %v2004
    %v2006 = vpop.xlane.xlu0 %2005
    %v2007 = vsel %vm527, %v508, 0.0
    %2008 = vadd.xlane.f32.xlu0 %v2007
    %v2009 = vpop.xlane.xlu0 %2008
    %v2010 = vsel %vm527, %v509, 0.0
    %2011 = vadd.xlane.f32.xlu0 %v2010
    %v2012 = vpop.xlane.xlu0 %2011
    %v2013 = vsel %vm527, %v510, 0.0
    %2014 = vadd.xlane.f32.xlu0 %v2013
    %v2015 = vpop.xlane.xlu0 %2014
    %v2016 = vsel %vm527, %v511, 0.0
    %2017 = vadd.xlane.f32.xlu0 %v2016
    %v2018 = vpop.xlane.xlu0 %2017
    %v2019 = vsel %vm527, %v512, 0.0
    %2020 = vadd.xlane.f32.xlu0 %v2019
    %v2021 = vpop.xlane.xlu0 %2020
    %v2022 = vsel %vm527, %v513, 0.0
    %2023 = vadd.xlane.f32.xlu0 %v2022
    %v2024 = vpop.xlane.xlu0 %2023
    %v2025 = vsel %vm527, %v514, 0.0
    %2026 = vadd.xlane.f32.xlu0 %v2025
    %v2027 = vpop.xlane.xlu0 %2026
    %v2028 = vsel %vm527, %v515, 0.0
    %2029 = vadd.xlane.f32.xlu0 %v2028
    %v2030 = vpop.xlane.xlu0 %2029
    %v2031 = vsel %vm527, %v516, 0.0
    %2032 = vadd.xlane.f32.xlu0 %v2031
    %v2033 = vpop.xlane.xlu0 %2032
    %v2034 = vsel %vm527, %v517, 0.0
    %2035 = vadd.xlane.f32.xlu0 %v2034
    %v2036 = vpop.xlane.xlu0 %2035
    %v2037 = vsel %vm527, %v518, 0.0
    %2038 = vadd.xlane.f32.xlu0 %v2037
    %v2039 = vpop.xlane.xlu0 %2038
    %v2040 = vsel %vm527, %v519, 0.0
    %2041 = vadd.xlane.f32.xlu0 %v2040
    %v2042 = vpop.xlane.xlu0 %2041
    %v2043 = vsel %vm527, %v520, 0.0
    %2044 = vadd.xlane.f32.xlu0 %v2043
    %v2045 = vpop.xlane.xlu0 %2044
    %v2046 = vsel %vm527, %v521, 0.0
    %2047 = vadd.xlane.f32.xlu0 %v2046
    %v2048 = vpop.xlane.xlu0 %2047
    %v2049 = vsel %vm527, %v522, 0.0
    %2050 = vadd.xlane.f32.xlu0 %v2049
    %v2051 = vpop.xlane.xlu0 %2050
    %v2052 = vsel %vm527, %v523, 0.0
    %2053 = vadd.xlane.f32.xlu0 %v2052
    %v2054 = vpop.xlane.xlu0 %2053
    %v2055 = vsel %vm527, %v524, 0.0
    %2056 = vadd.xlane.f32.xlu0 %v2055
    %v2057 = vpop.xlane.xlu0 %2056
    %v2058 = vsel %vm527, %v525, 0.0
    %2059 = vadd.xlane.f32.xlu0 %v2058
    %v2060 = vpop.xlane.xlu0 %2059
    %v2061 = vsel %vm527, %v526, 0.0
    %2062 = vadd.xlane.f32.xlu0 %v2061
    %v2063 = vpop.xlane.xlu0 %2062
    %v2064 = vld [vmem:[%s1] sm:$0xff]
    %v2065 = vld [vmem:[%s1 + $0x8] sm:$0xff]
    %v2066 = vld [vmem:[%s1 + $0x10] sm:$0xff]
    %v2067 = vld [vmem:[%s1 + $0x18] sm:$0xff]
    %v2068 = vld [vmem:[%s1 + $0x20] sm:$0xff]
    %v2069 = vld [vmem:[%s1 + $0x28] sm:$0xff]
    %v2070 = vld [vmem:[%s1 + $0x30] sm:$0xff]
    %v2071 = vld [vmem:[%s1 + $0x38] sm:$0xff]
    %v2072 = vld [vmem:[%s1 + $0x40] sm:$0xff]
    %v2073 = vld [vmem:[%s1 + $0x48] sm:$0xff]
    %v2074 = vld [vmem:[%s1 + $0x50] sm:$0xff]
    %v2075 = vld [vmem:[%s1 + $0x58] sm:$0xff]
    %v2076 = vld [vmem:[%s1 + $0x60] sm:$0xff]
    %v2077 = vld [vmem:[%s1 + $0x68] sm:$0xff]
    %v2078 = vld [vmem:[%s1 + $0x70] sm:$0xff]
    %v2079 = vld [vmem:[%s1 + $0x78] sm:$0xff]
    %v2592 = vlaneseq
    %v2593 = vand.u32 %v2592, 127
    %v2594 = vlaneseq
    %v2595 = vshrl.u32 %v2594, 7
    %v2596 = vsub.s32 %v2593, %v2595
    %v2597 = vrot.slane %v530, %v2596
    %v2598 = vadd.s32 %v2593, 4294967288
    %v2599 = vlaneseq
    %v2600 = vshrl.u32 %v2599, 7
    %v2601 = vsub.s32 %v2598, %v2600
    %v2602 = vrot.slane %v533, %v2601
    %vm2603 = vcmask 130112
    %v2604 = vsel %vm2603, %v2602, %v2597
    %v2605 = vadd.s32 %v2593, 4294967280
    %v2606 = vlaneseq
    %v2607 = vshrl.u32 %v2606, 7
    %v2608 = vsub.s32 %v2605, %v2607
    %v2609 = vrot.slane %v536, %v2608
    %vm2610 = vcmask 195712
    %v2611 = vsel %vm2610, %v2609, %v2604
    %v2612 = vadd.s32 %v2593, 4294967272
    %v2613 = vlaneseq
    %v2614 = vshrl.u32 %v2613, 7
    %v2615 = vsub.s32 %v2612, %v2614
    %v2616 = vrot.slane %v539, %v2615
    %vm2617 = vcmask 261312
    %v2618 = vsel %vm2617, %v2616, %v2611
    %v2619 = vadd.s32 %v2593, 4294967264
    %v2620 = vlaneseq
    %v2621 = vshrl.u32 %v2620, 7
    %v2622 = vsub.s32 %v2619, %v2621
    %v2623 = vrot.slane %v542, %v2622
    %vm2624 = vcmask 326912
    %v2625 = vsel %vm2624, %v2623, %v2618
    %v2626 = vadd.s32 %v2593, 4294967256
    %v2627 = vlaneseq
    %v2628 = vshrl.u32 %v2627, 7
    %v2629 = vsub.s32 %v2626, %v2628
    %v2630 = vrot.slane %v545, %v2629
    %vm2631 = vcmask 392512
    %v2632 = vsel %vm2631, %v2630, %v2625
    %v2633 = vadd.s32 %v2593, 4294967248
    %v2634 = vlaneseq
    %v2635 = vshrl.u32 %v2634, 7
    %v2636 = vsub.s32 %v2633, %v2635
    %v2637 = vrot.slane %v548, %v2636
    %vm2638 = vcmask 458112
    %v2639 = vsel %vm2638, %v2637, %v2632
    %v2640 = vadd.s32 %v2593, 4294967240
    %v2641 = vlaneseq
    %v2642 = vshrl.u32 %v2641, 7
    %v2643 = vsub.s32 %v2640, %v2642
    %v2644 = vrot.slane %v551, %v2643
    %vm2645 = vcmask 523712
    %v2646 = vsel %vm2645, %v2644, %v2639
    %v2647 = vadd.s32 %v2593, 4294967232
    %v2648 = vlaneseq
    %v2649 = vshrl.u32 %v2648, 7
    %v2650 = vsub.s32 %v2647, %v2649
    %v2651 = vrot.slane %v554, %v2650
    %vm2652 = vcmask 589312
    %v2653 = vsel %vm2652, %v2651, %v2646
    %v2654 = vadd.s32 %v2593, 4294967224
    %v2655 = vlaneseq
    %v2656 = vshrl.u32 %v2655, 7
    %v2657 = vsub.s32 %v2654, %v2656
    %v2658 = vrot.slane %v557, %v2657
    %vm2659 = vcmask 654912
    %v2660 = vsel %vm2659, %v2658, %v2653
    %v2661 = vadd.s32 %v2593, 4294967216
    %v2662 = vlaneseq
    %v2663 = vshrl.u32 %v2662, 7
    %v2664 = vsub.s32 %v2661, %v2663
    %v2665 = vrot.slane %v560, %v2664
    %vm2666 = vcmask 720512
    %v2667 = vsel %vm2666, %v2665, %v2660
    %v2668 = vadd.s32 %v2593, 4294967208
    %v2669 = vlaneseq
    %v2670 = vshrl.u32 %v2669, 7
    %v2671 = vsub.s32 %v2668, %v2670
    %v2672 = vrot.slane %v563, %v2671
    %vm2673 = vcmask 786112
    %v2674 = vsel %vm2673, %v2672, %v2667
    %v2675 = vadd.s32 %v2593, 4294967200
    %v2676 = vlaneseq
    %v2677 = vshrl.u32 %v2676, 7
    %v2678 = vsub.s32 %v2675, %v2677
    %v2679 = vrot.slane %v566, %v2678
    %vm2680 = vcmask 851712
    %v2681 = vsel %vm2680, %v2679, %v2674
    %v2682 = vadd.s32 %v2593, 4294967192
    %v2683 = vlaneseq
    %v2684 = vshrl.u32 %v2683, 7
    %v2685 = vsub.s32 %v2682, %v2684
    %v2686 = vrot.slane %v569, %v2685
    %vm2687 = vcmask 917312
    %v2688 = vsel %vm2687, %v2686, %v2681
    %v2689 = vadd.s32 %v2593, 4294967184
    %v2690 = vlaneseq
    %v2691 = vshrl.u32 %v2690, 7
    %v2692 = vsub.s32 %v2689, %v2691
    %v2693 = vrot.slane %v572, %v2692
    %vm2694 = vcmask 982912
    %v2695 = vsel %vm2694, %v2693, %v2688
    %v2696 = vadd.s32 %v2593, 4294967176
    %v2697 = vlaneseq
    %v2698 = vshrl.u32 %v2697, 7
    %v2699 = vsub.s32 %v2696, %v2698
    %v2700 = vrot.slane %v575, %v2699
    %vm2701 = vcmask 1048512
    %v2702 = vsel %vm2701, %v2700, %v2695
    %v2703 = vlaneseq
    %v2704 = vshrl.u32 %v2703, 7
    %v2705 = vsub.s32 %v2593, %v2704
    %v2706 = vrot.slane %v578, %v2705
    %v2707 = vlaneseq
    %v2708 = vshrl.u32 %v2707, 7
    %v2709 = vsub.s32 %v2598, %v2708
    %v2710 = vrot.slane %v581, %v2709
    %v2711 = vsel %vm2603, %v2710, %v2706
    %v2712 = vlaneseq
    %v2713 = vshrl.u32 %v2712, 7
    %v2714 = vsub.s32 %v2605, %v2713
    %v2715 = vrot.slane %v584, %v2714
    %v2716 = vsel %vm2610, %v2715, %v2711
    %v2717 = vlaneseq
    %v2718 = vshrl.u32 %v2717, 7
    %v2719 = vsub.s32 %v2612, %v2718
    %v2720 = vrot.slane %v587, %v2719
    %v2721 = vsel %vm2617, %v2720, %v2716
    %v2722 = vlaneseq
    %v2723 = vshrl.u32 %v2722, 7
    %v2724 = vsub.s32 %v2619, %v2723
    %v2725 = vrot.slane %v590, %v2724
    %v2726 = vsel %vm2624, %v2725, %v2721
    %v2727 = vlaneseq
    %v2728 = vshrl.u32 %v2727, 7
    %v2729 = vsub.s32 %v2626, %v2728
    %v2730 = vrot.slane %v593, %v2729
    %v2731 = vsel %vm2631, %v2730, %v2726
    %v2732 = vlaneseq
    %v2733 = vshrl.u32 %v2732, 7
    %v2734 = vsub.s32 %v2633, %v2733
    %v2735 = vrot.slane %v596, %v2734
    %v2736 = vsel %vm2638, %v2735, %v2731
    %v2737 = vlaneseq
    %v2738 = vshrl.u32 %v2737, 7
    %v2739 = vsub.s32 %v2640, %v2738
    %v2740 = vrot.slane %v599, %v2739
    %v2741 = vsel %vm2645, %v2740, %v2736
    %v2742 = vlaneseq
    %v2743 = vshrl.u32 %v2742, 7
    %v2744 = vsub.s32 %v2647, %v2743
    %v2745 = vrot.slane %v602, %v2744
    %v2746 = vsel %vm2652, %v2745, %v2741
    %v2747 = vlaneseq
    %v2748 = vshrl.u32 %v2747, 7
    %v2749 = vsub.s32 %v2654, %v2748
    %v2750 = vrot.slane %v605, %v2749
    %v2751 = vsel %vm2659, %v2750, %v2746
    %v2752 = vlaneseq
    %v2753 = vshrl.u32 %v2752, 7
    %v2754 = vsub.s32 %v2661, %v2753
    %v2755 = vrot.slane %v608, %v2754
    %v2756 = vsel %vm2666, %v2755, %v2751
    %v2757 = vlaneseq
    %v2758 = vshrl.u32 %v2757, 7
    %v2759 = vsub.s32 %v2668, %v2758
    %v2760 = vrot.slane %v611, %v2759
    %v2761 = vsel %vm2673, %v2760, %v2756
    %v2762 = vlaneseq
    %v2763 = vshrl.u32 %v2762, 7
    %v2764 = vsub.s32 %v2675, %v2763
    %v2765 = vrot.slane %v614, %v2764
    %v2766 = vsel %vm2680, %v2765, %v2761
    %v2767 = vlaneseq
    %v2768 = vshrl.u32 %v2767, 7
    %v2769 = vsub.s32 %v2682, %v2768
    %v2770 = vrot.slane %v617, %v2769
    %v2771 = vsel %vm2687, %v2770, %v2766
    %v2772 = vlaneseq
    %v2773 = vshrl.u32 %v2772, 7
    %v2774 = vsub.s32 %v2689, %v2773
    %v2775 = vrot.slane %v620, %v2774
    %v2776 = vsel %vm2694, %v2775, %v2771
    %v2777 = vlaneseq
    %v2778 = vshrl.u32 %v2777, 7
    %v2779 = vsub.s32 %v2696, %v2778
    %v2780 = vrot.slane %v623, %v2779
    %v2781 = vsel %vm2701, %v2780, %v2776
    %v2782 = vlaneseq
    %v2783 = vshrl.u32 %v2782, 7
    %v2784 = vsub.s32 %v2593, %v2783
    %v2785 = vrot.slane %v626, %v2784
    %v2786 = vlaneseq
    %v2787 = vshrl.u32 %v2786, 7
    %v2788 = vsub.s32 %v2598, %v2787
    %v2789 = vrot.slane %v629, %v2788
    %v2790 = vsel %vm2603, %v2789, %v2785
    %v2791 = vlaneseq
    %v2792 = vshrl.u32 %v2791, 7
    %v2793 = vsub.s32 %v2605, %v2792
    %v2794 = vrot.slane %v632, %v2793
    %v2795 = vsel %vm2610, %v2794, %v2790
    %v2796 = vlaneseq
    %v2797 = vshrl.u32 %v2796, 7
    %v2798 = vsub.s32 %v2612, %v2797
    %v2799 = vrot.slane %v635, %v2798
    %v2800 = vsel %vm2617, %v2799, %v2795
    %v2801 = vlaneseq
    %v2802 = vshrl.u32 %v2801, 7
    %v2803 = vsub.s32 %v2619, %v2802
    %v2804 = vrot.slane %v638, %v2803
    %v2805 = vsel %vm2624, %v2804, %v2800
    %v2806 = vlaneseq
    %v2807 = vshrl.u32 %v2806, 7
    %v2808 = vsub.s32 %v2626, %v2807
    %v2809 = vrot.slane %v641, %v2808
    %v2810 = vsel %vm2631, %v2809, %v2805
    %v2811 = vlaneseq
    %v2812 = vshrl.u32 %v2811, 7
    %v2813 = vsub.s32 %v2633, %v2812
    %v2814 = vrot.slane %v644, %v2813
    %v2815 = vsel %vm2638, %v2814, %v2810
    %v2816 = vlaneseq
    %v2817 = vshrl.u32 %v2816, 7
    %v2818 = vsub.s32 %v2640, %v2817
    %v2819 = vrot.slane %v647, %v2818
    %v2820 = vsel %vm2645, %v2819, %v2815
    %v2821 = vlaneseq
    %v2822 = vshrl.u32 %v2821, 7
    %v2823 = vsub.s32 %v2647, %v2822
    %v2824 = vrot.slane %v650, %v2823
    %v2825 = vsel %vm2652, %v2824, %v2820
    %v2826 = vlaneseq
    %v2827 = vshrl.u32 %v2826, 7
    %v2828 = vsub.s32 %v2654, %v2827
    %v2829 = vrot.slane %v653, %v2828
    %v2830 = vsel %vm2659, %v2829, %v2825
    %v2831 = vlaneseq
    %v2832 = vshrl.u32 %v2831, 7
    %v2833 = vsub.s32 %v2661, %v2832
    %v2834 = vrot.slane %v656, %v2833
    %v2835 = vsel %vm2666, %v2834, %v2830
    %v2836 = vlaneseq
    %v2837 = vshrl.u32 %v2836, 7
    %v2838 = vsub.s32 %v2668, %v2837
    %v2839 = vrot.slane %v659, %v2838
    %v2840 = vsel %vm2673, %v2839, %v2835
    %v2841 = vlaneseq
    %v2842 = vshrl.u32 %v2841, 7
    %v2843 = vsub.s32 %v2675, %v2842
    %v2844 = vrot.slane %v662, %v2843
    %v2845 = vsel %vm2680, %v2844, %v2840
    %v2846 = vlaneseq
    %v2847 = vshrl.u32 %v2846, 7
    %v2848 = vsub.s32 %v2682, %v2847
    %v2849 = vrot.slane %v665, %v2848
    %v2850 = vsel %vm2687, %v2849, %v2845
    %v2851 = vlaneseq
    %v2852 = vshrl.u32 %v2851, 7
    %v2853 = vsub.s32 %v2689, %v2852
    %v2854 = vrot.slane %v668, %v2853
    %v2855 = vsel %vm2694, %v2854, %v2850
    %v2856 = vlaneseq
    %v2857 = vshrl.u32 %v2856, 7
    %v2858 = vsub.s32 %v2696, %v2857
    %v2859 = vrot.slane %v671, %v2858
    %v2860 = vsel %vm2701, %v2859, %v2855
    %v2861 = vlaneseq
    %v2862 = vshrl.u32 %v2861, 7
    %v2863 = vsub.s32 %v2593, %v2862
    %v2864 = vrot.slane %v674, %v2863
    %v2865 = vlaneseq
    %v2866 = vshrl.u32 %v2865, 7
    %v2867 = vsub.s32 %v2598, %v2866
    %v2868 = vrot.slane %v677, %v2867
    %v2869 = vsel %vm2603, %v2868, %v2864
    %v2870 = vlaneseq
    %v2871 = vshrl.u32 %v2870, 7
    %v2872 = vsub.s32 %v2605, %v2871
    %v2873 = vrot.slane %v680, %v2872
    %v2874 = vsel %vm2610, %v2873, %v2869
    %v2875 = vlaneseq
    %v2876 = vshrl.u32 %v2875, 7
    %v2877 = vsub.s32 %v2612, %v2876
    %v2878 = vrot.slane %v683, %v2877
    %v2879 = vsel %vm2617, %v2878, %v2874
    %v2880 = vlaneseq
    %v2881 = vshrl.u32 %v2880, 7
    %v2882 = vsub.s32 %v2619, %v2881
    %v2883 = vrot.slane %v686, %v2882
    %v2884 = vsel %vm2624, %v2883, %v2879
    %v2885 = vlaneseq
    %v2886 = vshrl.u32 %v2885, 7
    %v2887 = vsub.s32 %v2626, %v2886
    %v2888 = vrot.slane %v689, %v2887
    %v2889 = vsel %vm2631, %v2888, %v2884
    %v2890 = vlaneseq
    %v2891 = vshrl.u32 %v2890, 7
    %v2892 = vsub.s32 %v2633, %v2891
    %v2893 = vrot.slane %v692, %v2892
    %v2894 = vsel %vm2638, %v2893, %v2889
    %v2895 = vlaneseq
    %v2896 = vshrl.u32 %v2895, 7
    %v2897 = vsub.s32 %v2640, %v2896
    %v2898 = vrot.slane %v695, %v2897
    %v2899 = vsel %vm2645, %v2898, %v2894
    %v2900 = vlaneseq
    %v2901 = vshrl.u32 %v2900, 7
    %v2902 = vsub.s32 %v2647, %v2901
    %v2903 = vrot.slane %v698, %v2902
    %v2904 = vsel %vm2652, %v2903, %v2899
    %v2905 = vlaneseq
    %v2906 = vshrl.u32 %v2905, 7
    %v2907 = vsub.s32 %v2654, %v2906
    %v2908 = vrot.slane %v701, %v2907
    %v2909 = vsel %vm2659, %v2908, %v2904
    %v2910 = vlaneseq
    %v2911 = vshrl.u32 %v2910, 7
    %v2912 = vsub.s32 %v2661, %v2911
    %v2913 = vrot.slane %v704, %v2912
    %v2914 = vsel %vm2666, %v2913, %v2909
    %v2915 = vlaneseq
    %v2916 = vshrl.u32 %v2915, 7
    %v2917 = vsub.s32 %v2668, %v2916
    %v2918 = vrot.slane %v707, %v2917
    %v2919 = vsel %vm2673, %v2918, %v2914
    %v2920 = vlaneseq
    %v2921 = vshrl.u32 %v2920, 7
    %v2922 = vsub.s32 %v2675, %v2921
    %v2923 = vrot.slane %v710, %v2922
    %v2924 = vsel %vm2680, %v2923, %v2919
    %v2925 = vlaneseq
    %v2926 = vshrl.u32 %v2925, 7
    %v2927 = vsub.s32 %v2682, %v2926
    %v2928 = vrot.slane %v713, %v2927
    %v2929 = vsel %vm2687, %v2928, %v2924
    %v2930 = vlaneseq
    %v2931 = vshrl.u32 %v2930, 7
    %v2932 = vsub.s32 %v2689, %v2931
    %v2933 = vrot.slane %v716, %v2932
    %v2934 = vsel %vm2694, %v2933, %v2929
    %v2935 = vlaneseq
    %v2936 = vshrl.u32 %v2935, 7
    %v2937 = vsub.s32 %v2696, %v2936
    %v2938 = vrot.slane %v719, %v2937
    %v2939 = vsel %vm2701, %v2938, %v2934
    %v2940 = vlaneseq
    %v2941 = vshrl.u32 %v2940, 7
    %v2942 = vsub.s32 %v2593, %v2941
    %v2943 = vrot.slane %v722, %v2942
    %v2944 = vlaneseq
    %v2945 = vshrl.u32 %v2944, 7
    %v2946 = vsub.s32 %v2598, %v2945
    %v2947 = vrot.slane %v725, %v2946
    %v2948 = vsel %vm2603, %v2947, %v2943
    %v2949 = vlaneseq
    %v2950 = vshrl.u32 %v2949, 7
    %v2951 = vsub.s32 %v2605, %v2950
    %v2952 = vrot.slane %v728, %v2951
    %v2953 = vsel %vm2610, %v2952, %v2948
    %v2954 = vlaneseq
    %v2955 = vshrl.u32 %v2954, 7
    %v2956 = vsub.s32 %v2612, %v2955
    %v2957 = vrot.slane %v731, %v2956
    %v2958 = vsel %vm2617, %v2957, %v2953
    %v2959 = vlaneseq
    %v2960 = vshrl.u32 %v2959, 7
    %v2961 = vsub.s32 %v2619, %v2960
    %v2962 = vrot.slane %v734, %v2961
    %v2963 = vsel %vm2624, %v2962, %v2958
    %v2964 = vlaneseq
    %v2965 = vshrl.u32 %v2964, 7
    %v2966 = vsub.s32 %v2626, %v2965
    %v2967 = vrot.slane %v737, %v2966
    %v2968 = vsel %vm2631, %v2967, %v2963
    %v2969 = vlaneseq
    %v2970 = vshrl.u32 %v2969, 7
    %v2971 = vsub.s32 %v2633, %v2970
    %v2972 = vrot.slane %v740, %v2971
    %v2973 = vsel %vm2638, %v2972, %v2968
    %v2974 = vlaneseq
    %v2975 = vshrl.u32 %v2974, 7
    %v2976 = vsub.s32 %v2640, %v2975
    %v2977 = vrot.slane %v743, %v2976
    %v2978 = vsel %vm2645, %v2977, %v2973
    %v2979 = vlaneseq
    %v2980 = vshrl.u32 %v2979, 7
    %v2981 = vsub.s32 %v2647, %v2980
    %v2982 = vrot.slane %v746, %v2981
    %v2983 = vsel %vm2652, %v2982, %v2978
    %v2984 = vlaneseq
    %v2985 = vshrl.u32 %v2984, 7
    %v2986 = vsub.s32 %v2654, %v2985
    %v2987 = vrot.slane %v749, %v2986
    %v2988 = vsel %vm2659, %v2987, %v2983
    %v2989 = vlaneseq
    %v2990 = vshrl.u32 %v2989, 7
    %v2991 = vsub.s32 %v2661, %v2990
    %v2992 = vrot.slane %v752, %v2991
    %v2993 = vsel %vm2666, %v2992, %v2988
    %v2994 = vlaneseq
    %v2995 = vshrl.u32 %v2994, 7
    %v2996 = vsub.s32 %v2668, %v2995
    %v2997 = vrot.slane %v755, %v2996
    %v2998 = vsel %vm2673, %v2997, %v2993
    %v2999 = vlaneseq
    %v3000 = vshrl.u32 %v2999, 7
    %v3001 = vsub.s32 %v2675, %v3000
    %v3002 = vrot.slane %v758, %v3001
    %v3003 = vsel %vm2680, %v3002, %v2998
    %v3004 = vlaneseq
    %v3005 = vshrl.u32 %v3004, 7
    %v3006 = vsub.s32 %v2682, %v3005
    %v3007 = vrot.slane %v761, %v3006
    %v3008 = vsel %vm2687, %v3007, %v3003
    %v3009 = vlaneseq
    %v3010 = vshrl.u32 %v3009, 7
    %v3011 = vsub.s32 %v2689, %v3010
    %v3012 = vrot.slane %v764, %v3011
    %v3013 = vsel %vm2694, %v3012, %v3008
    %v3014 = vlaneseq
    %v3015 = vshrl.u32 %v3014, 7
    %v3016 = vsub.s32 %v2696, %v3015
    %v3017 = vrot.slane %v767, %v3016
    %v3018 = vsel %vm2701, %v3017, %v3013
    %v3019 = vlaneseq
    %v3020 = vshrl.u32 %v3019, 7
    %v3021 = vsub.s32 %v2593, %v3020
    %v3022 = vrot.slane %v770, %v3021
    %v3023 = vlaneseq
    %v3024 = vshrl.u32 %v3023, 7
    %v3025 = vsub.s32 %v2598, %v3024
    %v3026 = vrot.slane %v773, %v3025
    %v3027 = vsel %vm2603, %v3026, %v3022
    %v3028 = vlaneseq
    %v3029 = vshrl.u32 %v3028, 7
    %v3030 = vsub.s32 %v2605, %v3029
    %v3031 = vrot.slane %v776, %v3030
    %v3032 = vsel %vm2610, %v3031, %v3027
    %v3033 = vlaneseq
    %v3034 = vshrl.u32 %v3033, 7
    %v3035 = vsub.s32 %v2612, %v3034
    %v3036 = vrot.slane %v779, %v3035
    %v3037 = vsel %vm2617, %v3036, %v3032
    %v3038 = vlaneseq
    %v3039 = vshrl.u32 %v3038, 7
    %v3040 = vsub.s32 %v2619, %v3039
    %v3041 = vrot.slane %v782, %v3040
    %v3042 = vsel %vm2624, %v3041, %v3037
    %v3043 = vlaneseq
    %v3044 = vshrl.u32 %v3043, 7
    %v3045 = vsub.s32 %v2626, %v3044
    %v3046 = vrot.slane %v785, %v3045
    %v3047 = vsel %vm2631, %v3046, %v3042
    %v3048 = vlaneseq
    %v3049 = vshrl.u32 %v3048, 7
    %v3050 = vsub.s32 %v2633, %v3049
    %v3051 = vrot.slane %v788, %v3050
    %v3052 = vsel %vm2638, %v3051, %v3047
    %v3053 = vlaneseq
    %v3054 = vshrl.u32 %v3053, 7
    %v3055 = vsub.s32 %v2640, %v3054
    %v3056 = vrot.slane %v791, %v3055
    %v3057 = vsel %vm2645, %v3056, %v3052
    %v3058 = vlaneseq
    %v3059 = vshrl.u32 %v3058, 7
    %v3060 = vsub.s32 %v2647, %v3059
    %v3061 = vrot.slane %v794, %v3060
    %v3062 = vsel %vm2652, %v3061, %v3057
    %v3063 = vlaneseq
    %v3064 = vshrl.u32 %v3063, 7
    %v3065 = vsub.s32 %v2654, %v3064
    %v3066 = vrot.slane %v797, %v3065
    %v3067 = vsel %vm2659, %v3066, %v3062
    %v3068 = vlaneseq
    %v3069 = vshrl.u32 %v3068, 7
    %v3070 = vsub.s32 %v2661, %v3069
    %v3071 = vrot.slane %v800, %v3070
    %v3072 = vsel %vm2666, %v3071, %v3067
    %v3073 = vlaneseq
    %v3074 = vshrl.u32 %v3073, 7
    %v3075 = vsub.s32 %v2668, %v3074
    %v3076 = vrot.slane %v803, %v3075
    %v3077 = vsel %vm2673, %v3076, %v3072
    %v3078 = vlaneseq
    %v3079 = vshrl.u32 %v3078, 7
    %v3080 = vsub.s32 %v2675, %v3079
    %v3081 = vrot.slane %v806, %v3080
    %v3082 = vsel %vm2680, %v3081, %v3077
    %v3083 = vlaneseq
    %v3084 = vshrl.u32 %v3083, 7
    %v3085 = vsub.s32 %v2682, %v3084
    %v3086 = vrot.slane %v809, %v3085
    %v3087 = vsel %vm2687, %v3086, %v3082
    %v3088 = vlaneseq
    %v3089 = vshrl.u32 %v3088, 7
    %v3090 = vsub.s32 %v2689, %v3089
    %v3091 = vrot.slane %v812, %v3090
    %v3092 = vsel %vm2694, %v3091, %v3087
    %v3093 = vlaneseq
    %v3094 = vshrl.u32 %v3093, 7
    %v3095 = vsub.s32 %v2696, %v3094
    %v3096 = vrot.slane %v815, %v3095
    %v3097 = vsel %vm2701, %v3096, %v3092
    %v3098 = vlaneseq
    %v3099 = vshrl.u32 %v3098, 7
    %v3100 = vsub.s32 %v2593, %v3099
    %v3101 = vrot.slane %v818, %v3100
    %v3102 = vlaneseq
    %v3103 = vshrl.u32 %v3102, 7
    %v3104 = vsub.s32 %v2598, %v3103
    %v3105 = vrot.slane %v821, %v3104
    %v3106 = vsel %vm2603, %v3105, %v3101
    %v3107 = vlaneseq
    %v3108 = vshrl.u32 %v3107, 7
    %v3109 = vsub.s32 %v2605, %v3108
    %v3110 = vrot.slane %v824, %v3109
    %v3111 = vsel %vm2610, %v3110, %v3106
    %v3112 = vlaneseq
    %v3113 = vshrl.u32 %v3112, 7
    %v3114 = vsub.s32 %v2612, %v3113
    %v3115 = vrot.slane %v827, %v3114
    %v3116 = vsel %vm2617, %v3115, %v3111
    %v3117 = vlaneseq
    %v3118 = vshrl.u32 %v3117, 7
    %v3119 = vsub.s32 %v2619, %v3118
    %v3120 = vrot.slane %v830, %v3119
    %v3121 = vsel %vm2624, %v3120, %v3116
    %v3122 = vlaneseq
    %v3123 = vshrl.u32 %v3122, 7
    %v3124 = vsub.s32 %v2626, %v3123
    %v3125 = vrot.slane %v833, %v3124
    %v3126 = vsel %vm2631, %v3125, %v3121
    %v3127 = vlaneseq
    %v3128 = vshrl.u32 %v3127, 7
    %v3129 = vsub.s32 %v2633, %v3128
    %v3130 = vrot.slane %v836, %v3129
    %v3131 = vsel %vm2638, %v3130, %v3126
    %v3132 = vlaneseq
    %v3133 = vshrl.u32 %v3132, 7
    %v3134 = vsub.s32 %v2640, %v3133
    %v3135 = vrot.slane %v839, %v3134
    %v3136 = vsel %vm2645, %v3135, %v3131
    %v3137 = vlaneseq
    %v3138 = vshrl.u32 %v3137, 7
    %v3139 = vsub.s32 %v2647, %v3138
    %v3140 = vrot.slane %v842, %v3139
    %v3141 = vsel %vm2652, %v3140, %v3136
    %v3142 = vlaneseq
    %v3143 = vshrl.u32 %v3142, 7
    %v3144 = vsub.s32 %v2654, %v3143
    %v3145 = vrot.slane %v845, %v3144
    %v3146 = vsel %vm2659, %v3145, %v3141
    %v3147 = vlaneseq
    %v3148 = vshrl.u32 %v3147, 7
    %v3149 = vsub.s32 %v2661, %v3148
    %v3150 = vrot.slane %v848, %v3149
    %v3151 = vsel %vm2666, %v3150, %v3146
    %v3152 = vlaneseq
    %v3153 = vshrl.u32 %v3152, 7
    %v3154 = vsub.s32 %v2668, %v3153
    %v3155 = vrot.slane %v851, %v3154
    %v3156 = vsel %vm2673, %v3155, %v3151
    %v3157 = vlaneseq
    %v3158 = vshrl.u32 %v3157, 7
    %v3159 = vsub.s32 %v2675, %v3158
    %v3160 = vrot.slane %v854, %v3159
    %v3161 = vsel %vm2680, %v3160, %v3156
    %v3162 = vlaneseq
    %v3163 = vshrl.u32 %v3162, 7
    %v3164 = vsub.s32 %v2682, %v3163
    %v3165 = vrot.slane %v857, %v3164
    %v3166 = vsel %vm2687, %v3165, %v3161
    %v3167 = vlaneseq
    %v3168 = vshrl.u32 %v3167, 7
    %v3169 = vsub.s32 %v2689, %v3168
    %v3170 = vrot.slane %v860, %v3169
    %v3171 = vsel %vm2694, %v3170, %v3166
    %v3172 = vlaneseq
    %v3173 = vshrl.u32 %v3172, 7
    %v3174 = vsub.s32 %v2696, %v3173
    %v3175 = vrot.slane %v863, %v3174
    %v3176 = vsel %vm2701, %v3175, %v3171
    %v3177 = vlaneseq
    %v3178 = vshrl.u32 %v3177, 7
    %v3179 = vsub.s32 %v2593, %v3178
    %v3180 = vrot.slane %v866, %v3179
    %v3181 = vlaneseq
    %v3182 = vshrl.u32 %v3181, 7
    %v3183 = vsub.s32 %v2598, %v3182
    %v3184 = vrot.slane %v869, %v3183
    %v3185 = vsel %vm2603, %v3184, %v3180
    %v3186 = vlaneseq
    %v3187 = vshrl.u32 %v3186, 7
    %v3188 = vsub.s32 %v2605, %v3187
    %v3189 = vrot.slane %v872, %v3188
    %v3190 = vsel %vm2610, %v3189, %v3185
    %v3191 = vlaneseq
    %v3192 = vshrl.u32 %v3191, 7
    %v3193 = vsub.s32 %v2612, %v3192
    %v3194 = vrot.slane %v875, %v3193
    %v3195 = vsel %vm2617, %v3194, %v3190
    %v3196 = vlaneseq
    %v3197 = vshrl.u32 %v3196, 7
    %v3198 = vsub.s32 %v2619, %v3197
    %v3199 = vrot.slane %v878, %v3198
    %v3200 = vsel %vm2624, %v3199, %v3195
    %v3201 = vlaneseq
    %v3202 = vshrl.u32 %v3201, 7
    %v3203 = vsub.s32 %v2626, %v3202
    %v3204 = vrot.slane %v881, %v3203
    %v3205 = vsel %vm2631, %v3204, %v3200
    %v3206 = vlaneseq
    %v3207 = vshrl.u32 %v3206, 7
    %v3208 = vsub.s32 %v2633, %v3207
    %v3209 = vrot.slane %v884, %v3208
    %v3210 = vsel %vm2638, %v3209, %v3205
    %v3211 = vlaneseq
    %v3212 = vshrl.u32 %v3211, 7
    %v3213 = vsub.s32 %v2640, %v3212
    %v3214 = vrot.slane %v887, %v3213
    %v3215 = vsel %vm2645, %v3214, %v3210
    %v3216 = vlaneseq
    %v3217 = vshrl.u32 %v3216, 7
    %v3218 = vsub.s32 %v2647, %v3217
    %v3219 = vrot.slane %v890, %v3218
    %v3220 = vsel %vm2652, %v3219, %v3215
    %v3221 = vlaneseq
    %v3222 = vshrl.u32 %v3221, 7
    %v3223 = vsub.s32 %v2654, %v3222
    %v3224 = vrot.slane %v893, %v3223
    %v3225 = vsel %vm2659, %v3224, %v3220
    %v3226 = vlaneseq
    %v3227 = vshrl.u32 %v3226, 7
    %v3228 = vsub.s32 %v2661, %v3227
    %v3229 = vrot.slane %v896, %v3228
    %v3230 = vsel %vm2666, %v3229, %v3225
    %v3231 = vlaneseq
    %v3232 = vshrl.u32 %v3231, 7
    %v3233 = vsub.s32 %v2668, %v3232
    %v3234 = vrot.slane %v899, %v3233
    %v3235 = vsel %vm2673, %v3234, %v3230
    %v3236 = vlaneseq
    %v3237 = vshrl.u32 %v3236, 7
    %v3238 = vsub.s32 %v2675, %v3237
    %v3239 = vrot.slane %v902, %v3238
    %v3240 = vsel %vm2680, %v3239, %v3235
    %v3241 = vlaneseq
    %v3242 = vshrl.u32 %v3241, 7
    %v3243 = vsub.s32 %v2682, %v3242
    %v3244 = vrot.slane %v905, %v3243
    %v3245 = vsel %vm2687, %v3244, %v3240
    %v3246 = vlaneseq
    %v3247 = vshrl.u32 %v3246, 7
    %v3248 = vsub.s32 %v2689, %v3247
    %v3249 = vrot.slane %v908, %v3248
    %v3250 = vsel %vm2694, %v3249, %v3245
    %v3251 = vlaneseq
    %v3252 = vshrl.u32 %v3251, 7
    %v3253 = vsub.s32 %v2696, %v3252
    %v3254 = vrot.slane %v911, %v3253
    %v3255 = vsel %vm2701, %v3254, %v3250
    %v3256 = vlaneseq
    %v3257 = vshrl.u32 %v3256, 7
    %v3258 = vsub.s32 %v2593, %v3257
    %v3259 = vrot.slane %v914, %v3258
    %v3260 = vlaneseq
    %v3261 = vshrl.u32 %v3260, 7
    %v3262 = vsub.s32 %v2598, %v3261
    %v3263 = vrot.slane %v917, %v3262
    %v3264 = vsel %vm2603, %v3263, %v3259
    %v3265 = vlaneseq
    %v3266 = vshrl.u32 %v3265, 7
    %v3267 = vsub.s32 %v2605, %v3266
    %v3268 = vrot.slane %v920, %v3267
    %v3269 = vsel %vm2610, %v3268, %v3264
    %v3270 = vlaneseq
    %v3271 = vshrl.u32 %v3270, 7
    %v3272 = vsub.s32 %v2612, %v3271
    %v3273 = vrot.slane %v923, %v3272
    %v3274 = vsel %vm2617, %v3273, %v3269
    %v3275 = vlaneseq
    %v3276 = vshrl.u32 %v3275, 7
    %v3277 = vsub.s32 %v2619, %v3276
    %v3278 = vrot.slane %v926, %v3277
    %v3279 = vsel %vm2624, %v3278, %v3274
    %v3280 = vlaneseq
    %v3281 = vshrl.u32 %v3280, 7
    %v3282 = vsub.s32 %v2626, %v3281
    %v3283 = vrot.slane %v929, %v3282
    %v3284 = vsel %vm2631, %v3283, %v3279
    %v3285 = vlaneseq
    %v3286 = vshrl.u32 %v3285, 7
    %v3287 = vsub.s32 %v2633, %v3286
    %v3288 = vrot.slane %v932, %v3287
    %v3289 = vsel %vm2638, %v3288, %v3284
    %v3290 = vlaneseq
    %v3291 = vshrl.u32 %v3290, 7
    %v3292 = vsub.s32 %v2640, %v3291
    %v3293 = vrot.slane %v935, %v3292
    %v3294 = vsel %vm2645, %v3293, %v3289
    %v3295 = vlaneseq
    %v3296 = vshrl.u32 %v3295, 7
    %v3297 = vsub.s32 %v2647, %v3296
    %v3298 = vrot.slane %v938, %v3297
    %v3299 = vsel %vm2652, %v3298, %v3294
    %v3300 = vlaneseq
    %v3301 = vshrl.u32 %v3300, 7
    %v3302 = vsub.s32 %v2654, %v3301
    %v3303 = vrot.slane %v941, %v3302
    %v3304 = vsel %vm2659, %v3303, %v3299
    %v3305 = vlaneseq
    %v3306 = vshrl.u32 %v3305, 7
    %v3307 = vsub.s32 %v2661, %v3306
    %v3308 = vrot.slane %v944, %v3307
    %v3309 = vsel %vm2666, %v3308, %v3304
    %v3310 = vlaneseq
    %v3311 = vshrl.u32 %v3310, 7
    %v3312 = vsub.s32 %v2668, %v3311
    %v3313 = vrot.slane %v947, %v3312
    %v3314 = vsel %vm2673, %v3313, %v3309
    %v3315 = vlaneseq
    %v3316 = vshrl.u32 %v3315, 7
    %v3317 = vsub.s32 %v2675, %v3316
    %v3318 = vrot.slane %v950, %v3317
    %v3319 = vsel %vm2680, %v3318, %v3314
    %v3320 = vlaneseq
    %v3321 = vshrl.u32 %v3320, 7
    %v3322 = vsub.s32 %v2682, %v3321
    %v3323 = vrot.slane %v953, %v3322
    %v3324 = vsel %vm2687, %v3323, %v3319
    %v3325 = vlaneseq
    %v3326 = vshrl.u32 %v3325, 7
    %v3327 = vsub.s32 %v2689, %v3326
    %v3328 = vrot.slane %v956, %v3327
    %v3329 = vsel %vm2694, %v3328, %v3324
    %v3330 = vlaneseq
    %v3331 = vshrl.u32 %v3330, 7
    %v3332 = vsub.s32 %v2696, %v3331
    %v3333 = vrot.slane %v959, %v3332
    %v3334 = vsel %vm2701, %v3333, %v3329
    %v3335 = vlaneseq
    %v3336 = vshrl.u32 %v3335, 7
    %v3337 = vsub.s32 %v2593, %v3336
    %v3338 = vrot.slane %v962, %v3337
    %v3339 = vlaneseq
    %v3340 = vshrl.u32 %v3339, 7
    %v3341 = vsub.s32 %v2598, %v3340
    %v3342 = vrot.slane %v965, %v3341
    %v3343 = vsel %vm2603, %v3342, %v3338
    %v3344 = vlaneseq
    %v3345 = vshrl.u32 %v3344, 7
    %v3346 = vsub.s32 %v2605, %v3345
    %v3347 = vrot.slane %v968, %v3346
    %v3348 = vsel %vm2610, %v3347, %v3343
    %v3349 = vlaneseq
    %v3350 = vshrl.u32 %v3349, 7
    %v3351 = vsub.s32 %v2612, %v3350
    %v3352 = vrot.slane %v971, %v3351
    %v3353 = vsel %vm2617, %v3352, %v3348
    %v3354 = vlaneseq
    %v3355 = vshrl.u32 %v3354, 7
    %v3356 = vsub.s32 %v2619, %v3355
    %v3357 = vrot.slane %v974, %v3356
    %v3358 = vsel %vm2624, %v3357, %v3353
    %v3359 = vlaneseq
    %v3360 = vshrl.u32 %v3359, 7
    %v3361 = vsub.s32 %v2626, %v3360
    %v3362 = vrot.slane %v977, %v3361
    %v3363 = vsel %vm2631, %v3362, %v3358
    %v3364 = vlaneseq
    %v3365 = vshrl.u32 %v3364, 7
    %v3366 = vsub.s32 %v2633, %v3365
    %v3367 = vrot.slane %v980, %v3366
    %v3368 = vsel %vm2638, %v3367, %v3363
    %v3369 = vlaneseq
    %v3370 = vshrl.u32 %v3369, 7
    %v3371 = vsub.s32 %v2640, %v3370
    %v3372 = vrot.slane %v983, %v3371
    %v3373 = vsel %vm2645, %v3372, %v3368
    %v3374 = vlaneseq
    %v3375 = vshrl.u32 %v3374, 7
    %v3376 = vsub.s32 %v2647, %v3375
    %v3377 = vrot.slane %v986, %v3376
    %v3378 = vsel %vm2652, %v3377, %v3373
    %v3379 = vlaneseq
    %v3380 = vshrl.u32 %v3379, 7
    %v3381 = vsub.s32 %v2654, %v3380
    %v3382 = vrot.slane %v989, %v3381
    %v3383 = vsel %vm2659, %v3382, %v3378
    %v3384 = vlaneseq
    %v3385 = vshrl.u32 %v3384, 7
    %v3386 = vsub.s32 %v2661, %v3385
    %v3387 = vrot.slane %v992, %v3386
    %v3388 = vsel %vm2666, %v3387, %v3383
    %v3389 = vlaneseq
    %v3390 = vshrl.u32 %v3389, 7
    %v3391 = vsub.s32 %v2668, %v3390
    %v3392 = vrot.slane %v995, %v3391
    %v3393 = vsel %vm2673, %v3392, %v3388
    %v3394 = vlaneseq
    %v3395 = vshrl.u32 %v3394, 7
    %v3396 = vsub.s32 %v2675, %v3395
    %v3397 = vrot.slane %v998, %v3396
    %v3398 = vsel %vm2680, %v3397, %v3393
    %v3399 = vlaneseq
    %v3400 = vshrl.u32 %v3399, 7
    %v3401 = vsub.s32 %v2682, %v3400
    %v3402 = vrot.slane %v1001, %v3401
    %v3403 = vsel %vm2687, %v3402, %v3398
    %v3404 = vlaneseq
    %v3405 = vshrl.u32 %v3404, 7
    %v3406 = vsub.s32 %v2689, %v3405
    %v3407 = vrot.slane %v1004, %v3406
    %v3408 = vsel %vm2694, %v3407, %v3403
    %v3409 = vlaneseq
    %v3410 = vshrl.u32 %v3409, 7
    %v3411 = vsub.s32 %v2696, %v3410
    %v3412 = vrot.slane %v1007, %v3411
    %v3413 = vsel %vm2701, %v3412, %v3408
    %v3414 = vlaneseq
    %v3415 = vshrl.u32 %v3414, 7
    %v3416 = vsub.s32 %v2593, %v3415
    %v3417 = vrot.slane %v1010, %v3416
    %v3418 = vlaneseq
    %v3419 = vshrl.u32 %v3418, 7
    %v3420 = vsub.s32 %v2598, %v3419
    %v3421 = vrot.slane %v1013, %v3420
    %v3422 = vsel %vm2603, %v3421, %v3417
    %v3423 = vlaneseq
    %v3424 = vshrl.u32 %v3423, 7
    %v3425 = vsub.s32 %v2605, %v3424
    %v3426 = vrot.slane %v1016, %v3425
    %v3427 = vsel %vm2610, %v3426, %v3422
    %v3428 = vlaneseq
    %v3429 = vshrl.u32 %v3428, 7
    %v3430 = vsub.s32 %v2612, %v3429
    %v3431 = vrot.slane %v1019, %v3430
    %v3432 = vsel %vm2617, %v3431, %v3427
    %v3433 = vlaneseq
    %v3434 = vshrl.u32 %v3433, 7
    %v3435 = vsub.s32 %v2619, %v3434
    %v3436 = vrot.slane %v1022, %v3435
    %v3437 = vsel %vm2624, %v3436, %v3432
    %v3438 = vlaneseq
    %v3439 = vshrl.u32 %v3438, 7
    %v3440 = vsub.s32 %v2626, %v3439
    %v3441 = vrot.slane %v1025, %v3440
    %v3442 = vsel %vm2631, %v3441, %v3437
    %v3443 = vlaneseq
    %v3444 = vshrl.u32 %v3443, 7
    %v3445 = vsub.s32 %v2633, %v3444
    %v3446 = vrot.slane %v1028, %v3445
    %v3447 = vsel %vm2638, %v3446, %v3442
    %v3448 = vlaneseq
    %v3449 = vshrl.u32 %v3448, 7
    %v3450 = vsub.s32 %v2640, %v3449
    %v3451 = vrot.slane %v1031, %v3450
    %v3452 = vsel %vm2645, %v3451, %v3447
    %v3453 = vlaneseq
    %v3454 = vshrl.u32 %v3453, 7
    %v3455 = vsub.s32 %v2647, %v3454
    %v3456 = vrot.slane %v1034, %v3455
    %v3457 = vsel %vm2652, %v3456, %v3452
    %v3458 = vlaneseq
    %v3459 = vshrl.u32 %v3458, 7
    %v3460 = vsub.s32 %v2654, %v3459
    %v3461 = vrot.slane %v1037, %v3460
    %v3462 = vsel %vm2659, %v3461, %v3457
    %v3463 = vlaneseq
    %v3464 = vshrl.u32 %v3463, 7
    %v3465 = vsub.s32 %v2661, %v3464
    %v3466 = vrot.slane %v1040, %v3465
    %v3467 = vsel %vm2666, %v3466, %v3462
    %v3468 = vlaneseq
    %v3469 = vshrl.u32 %v3468, 7
    %v3470 = vsub.s32 %v2668, %v3469
    %v3471 = vrot.slane %v1043, %v3470
    %v3472 = vsel %vm2673, %v3471, %v3467
    %v3473 = vlaneseq
    %v3474 = vshrl.u32 %v3473, 7
    %v3475 = vsub.s32 %v2675, %v3474
    %v3476 = vrot.slane %v1046, %v3475
    %v3477 = vsel %vm2680, %v3476, %v3472
    %v3478 = vlaneseq
    %v3479 = vshrl.u32 %v3478, 7
    %v3480 = vsub.s32 %v2682, %v3479
    %v3481 = vrot.slane %v1049, %v3480
    %v3482 = vsel %vm2687, %v3481, %v3477
    %v3483 = vlaneseq
    %v3484 = vshrl.u32 %v3483, 7
    %v3485 = vsub.s32 %v2689, %v3484
    %v3486 = vrot.slane %v1052, %v3485
    %v3487 = vsel %vm2694, %v3486, %v3482
    %v3488 = vlaneseq
    %v3489 = vshrl.u32 %v3488, 7
    %v3490 = vsub.s32 %v2696, %v3489
    %v3491 = vrot.slane %v1055, %v3490
    %v3492 = vsel %vm2701, %v3491, %v3487
    %v3493 = vlaneseq
    %v3494 = vshrl.u32 %v3493, 7
    %v3495 = vsub.s32 %v2593, %v3494
    %v3496 = vrot.slane %v1058, %v3495
    %v3497 = vlaneseq
    %v3498 = vshrl.u32 %v3497, 7
    %v3499 = vsub.s32 %v2598, %v3498
    %v3500 = vrot.slane %v1061, %v3499
    %v3501 = vsel %vm2603, %v3500, %v3496
    %v3502 = vlaneseq
    %v3503 = vshrl.u32 %v3502, 7
    %v3504 = vsub.s32 %v2605, %v3503
    %v3505 = vrot.slane %v1064, %v3504
    %v3506 = vsel %vm2610, %v3505, %v3501
    %v3507 = vlaneseq
    %v3508 = vshrl.u32 %v3507, 7
    %v3509 = vsub.s32 %v2612, %v3508
    %v3510 = vrot.slane %v1067, %v3509
    %v3511 = vsel %vm2617, %v3510, %v3506
    %v3512 = vlaneseq
    %v3513 = vshrl.u32 %v3512, 7
    %v3514 = vsub.s32 %v2619, %v3513
    %v3515 = vrot.slane %v1070, %v3514
    %v3516 = vsel %vm2624, %v3515, %v3511
    %v3517 = vlaneseq
    %v3518 = vshrl.u32 %v3517, 7
    %v3519 = vsub.s32 %v2626, %v3518
    %v3520 = vrot.slane %v1073, %v3519
    %v3521 = vsel %vm2631, %v3520, %v3516
    %v3522 = vlaneseq
    %v3523 = vshrl.u32 %v3522, 7
    %v3524 = vsub.s32 %v2633, %v3523
    %v3525 = vrot.slane %v1076, %v3524
    %v3526 = vsel %vm2638, %v3525, %v3521
    %v3527 = vlaneseq
    %v3528 = vshrl.u32 %v3527, 7
    %v3529 = vsub.s32 %v2640, %v3528
    %v3530 = vrot.slane %v1079, %v3529
    %v3531 = vsel %vm2645, %v3530, %v3526
    %v3532 = vlaneseq
    %v3533 = vshrl.u32 %v3532, 7
    %v3534 = vsub.s32 %v2647, %v3533
    %v3535 = vrot.slane %v1082, %v3534
    %v3536 = vsel %vm2652, %v3535, %v3531
    %v3537 = vlaneseq
    %v3538 = vshrl.u32 %v3537, 7
    %v3539 = vsub.s32 %v2654, %v3538
    %v3540 = vrot.slane %v1085, %v3539
    %v3541 = vsel %vm2659, %v3540, %v3536
    %v3542 = vlaneseq
    %v3543 = vshrl.u32 %v3542, 7
    %v3544 = vsub.s32 %v2661, %v3543
    %v3545 = vrot.slane %v1088, %v3544
    %v3546 = vsel %vm2666, %v3545, %v3541
    %v3547 = vlaneseq
    %v3548 = vshrl.u32 %v3547, 7
    %v3549 = vsub.s32 %v2668, %v3548
    %v3550 = vrot.slane %v1091, %v3549
    %v3551 = vsel %vm2673, %v3550, %v3546
    %v3552 = vlaneseq
    %v3553 = vshrl.u32 %v3552, 7
    %v3554 = vsub.s32 %v2675, %v3553
    %v3555 = vrot.slane %v1094, %v3554
    %v3556 = vsel %vm2680, %v3555, %v3551
    %v3557 = vlaneseq
    %v3558 = vshrl.u32 %v3557, 7
    %v3559 = vsub.s32 %v2682, %v3558
    %v3560 = vrot.slane %v1097, %v3559
    %v3561 = vsel %vm2687, %v3560, %v3556
    %v3562 = vlaneseq
    %v3563 = vshrl.u32 %v3562, 7
    %v3564 = vsub.s32 %v2689, %v3563
    %v3565 = vrot.slane %v1100, %v3564
    %v3566 = vsel %vm2694, %v3565, %v3561
    %v3567 = vlaneseq
    %v3568 = vshrl.u32 %v3567, 7
    %v3569 = vsub.s32 %v2696, %v3568
    %v3570 = vrot.slane %v1103, %v3569
    %v3571 = vsel %vm2701, %v3570, %v3566
    %v3572 = vlaneseq
    %v3573 = vshrl.u32 %v3572, 7
    %v3574 = vsub.s32 %v2593, %v3573
    %v3575 = vrot.slane %v1106, %v3574
    %v3576 = vlaneseq
    %v3577 = vshrl.u32 %v3576, 7
    %v3578 = vsub.s32 %v2598, %v3577
    %v3579 = vrot.slane %v1109, %v3578
    %v3580 = vsel %vm2603, %v3579, %v3575
    %v3581 = vlaneseq
    %v3582 = vshrl.u32 %v3581, 7
    %v3583 = vsub.s32 %v2605, %v3582
    %v3584 = vrot.slane %v1112, %v3583
    %v3585 = vsel %vm2610, %v3584, %v3580
    %v3586 = vlaneseq
    %v3587 = vshrl.u32 %v3586, 7
    %v3588 = vsub.s32 %v2612, %v3587
    %v3589 = vrot.slane %v1115, %v3588
    %v3590 = vsel %vm2617, %v3589, %v3585
    %v3591 = vlaneseq
    %v3592 = vshrl.u32 %v3591, 7
    %v3593 = vsub.s32 %v2619, %v3592
    %v3594 = vrot.slane %v1118, %v3593
    %v3595 = vsel %vm2624, %v3594, %v3590
    %v3596 = vlaneseq
    %v3597 = vshrl.u32 %v3596, 7
    %v3598 = vsub.s32 %v2626, %v3597
    %v3599 = vrot.slane %v1121, %v3598
    %v3600 = vsel %vm2631, %v3599, %v3595
    %v3601 = vlaneseq
    %v3602 = vshrl.u32 %v3601, 7
    %v3603 = vsub.s32 %v2633, %v3602
    %v3604 = vrot.slane %v1124, %v3603
    %v3605 = vsel %vm2638, %v3604, %v3600
    %v3606 = vlaneseq
    %v3607 = vshrl.u32 %v3606, 7
    %v3608 = vsub.s32 %v2640, %v3607
    %v3609 = vrot.slane %v1127, %v3608
    %v3610 = vsel %vm2645, %v3609, %v3605
    %v3611 = vlaneseq
    %v3612 = vshrl.u32 %v3611, 7
    %v3613 = vsub.s32 %v2647, %v3612
    %v3614 = vrot.slane %v1130, %v3613
    %v3615 = vsel %vm2652, %v3614, %v3610
    %v3616 = vlaneseq
    %v3617 = vshrl.u32 %v3616, 7
    %v3618 = vsub.s32 %v2654, %v3617
    %v3619 = vrot.slane %v1133, %v3618
    %v3620 = vsel %vm2659, %v3619, %v3615
    %v3621 = vlaneseq
    %v3622 = vshrl.u32 %v3621, 7
    %v3623 = vsub.s32 %v2661, %v3622
    %v3624 = vrot.slane %v1136, %v3623
    %v3625 = vsel %vm2666, %v3624, %v3620
    %v3626 = vlaneseq
    %v3627 = vshrl.u32 %v3626, 7
    %v3628 = vsub.s32 %v2668, %v3627
    %v3629 = vrot.slane %v1139, %v3628
    %v3630 = vsel %vm2673, %v3629, %v3625
    %v3631 = vlaneseq
    %v3632 = vshrl.u32 %v3631, 7
    %v3633 = vsub.s32 %v2675, %v3632
    %v3634 = vrot.slane %v1142, %v3633
    %v3635 = vsel %vm2680, %v3634, %v3630
    %v3636 = vlaneseq
    %v3637 = vshrl.u32 %v3636, 7
    %v3638 = vsub.s32 %v2682, %v3637
    %v3639 = vrot.slane %v1145, %v3638
    %v3640 = vsel %vm2687, %v3639, %v3635
    %v3641 = vlaneseq
    %v3642 = vshrl.u32 %v3641, 7
    %v3643 = vsub.s32 %v2689, %v3642
    %v3644 = vrot.slane %v1148, %v3643
    %v3645 = vsel %vm2694, %v3644, %v3640
    %v3646 = vlaneseq
    %v3647 = vshrl.u32 %v3646, 7
    %v3648 = vsub.s32 %v2696, %v3647
    %v3649 = vrot.slane %v1151, %v3648
    %v3650 = vsel %vm2701, %v3649, %v3645
    %v3651 = vlaneseq
    %v3652 = vshrl.u32 %v3651, 7
    %v3653 = vsub.s32 %v2593, %v3652
    %v3654 = vrot.slane %v1154, %v3653
    %v3655 = vlaneseq
    %v3656 = vshrl.u32 %v3655, 7
    %v3657 = vsub.s32 %v2598, %v3656
    %v3658 = vrot.slane %v1157, %v3657
    %v3659 = vsel %vm2603, %v3658, %v3654
    %v3660 = vlaneseq
    %v3661 = vshrl.u32 %v3660, 7
    %v3662 = vsub.s32 %v2605, %v3661
    %v3663 = vrot.slane %v1160, %v3662
    %v3664 = vsel %vm2610, %v3663, %v3659
    %v3665 = vlaneseq
    %v3666 = vshrl.u32 %v3665, 7
    %v3667 = vsub.s32 %v2612, %v3666
    %v3668 = vrot.slane %v1163, %v3667
    %v3669 = vsel %vm2617, %v3668, %v3664
    %v3670 = vlaneseq
    %v3671 = vshrl.u32 %v3670, 7
    %v3672 = vsub.s32 %v2619, %v3671
    %v3673 = vrot.slane %v1166, %v3672
    %v3674 = vsel %vm2624, %v3673, %v3669
    %v3675 = vlaneseq
    %v3676 = vshrl.u32 %v3675, 7
    %v3677 = vsub.s32 %v2626, %v3676
    %v3678 = vrot.slane %v1169, %v3677
    %v3679 = vsel %vm2631, %v3678, %v3674
    %v3680 = vlaneseq
    %v3681 = vshrl.u32 %v3680, 7
    %v3682 = vsub.s32 %v2633, %v3681
    %v3683 = vrot.slane %v1172, %v3682
    %v3684 = vsel %vm2638, %v3683, %v3679
    %v3685 = vlaneseq
    %v3686 = vshrl.u32 %v3685, 7
    %v3687 = vsub.s32 %v2640, %v3686
    %v3688 = vrot.slane %v1175, %v3687
    %v3689 = vsel %vm2645, %v3688, %v3684
    %v3690 = vlaneseq
    %v3691 = vshrl.u32 %v3690, 7
    %v3692 = vsub.s32 %v2647, %v3691
    %v3693 = vrot.slane %v1178, %v3692
    %v3694 = vsel %vm2652, %v3693, %v3689
    %v3695 = vlaneseq
    %v3696 = vshrl.u32 %v3695, 7
    %v3697 = vsub.s32 %v2654, %v3696
    %v3698 = vrot.slane %v1181, %v3697
    %v3699 = vsel %vm2659, %v3698, %v3694
    %v3700 = vlaneseq
    %v3701 = vshrl.u32 %v3700, 7
    %v3702 = vsub.s32 %v2661, %v3701
    %v3703 = vrot.slane %v1184, %v3702
    %v3704 = vsel %vm2666, %v3703, %v3699
    %v3705 = vlaneseq
    %v3706 = vshrl.u32 %v3705, 7
    %v3707 = vsub.s32 %v2668, %v3706
    %v3708 = vrot.slane %v1187, %v3707
    %v3709 = vsel %vm2673, %v3708, %v3704
    %v3710 = vlaneseq
    %v3711 = vshrl.u32 %v3710, 7
    %v3712 = vsub.s32 %v2675, %v3711
    %v3713 = vrot.slane %v1190, %v3712
    %v3714 = vsel %vm2680, %v3713, %v3709
    %v3715 = vlaneseq
    %v3716 = vshrl.u32 %v3715, 7
    %v3717 = vsub.s32 %v2682, %v3716
    %v3718 = vrot.slane %v1193, %v3717
    %v3719 = vsel %vm2687, %v3718, %v3714
    %v3720 = vlaneseq
    %v3721 = vshrl.u32 %v3720, 7
    %v3722 = vsub.s32 %v2689, %v3721
    %v3723 = vrot.slane %v1196, %v3722
    %v3724 = vsel %vm2694, %v3723, %v3719
    %v3725 = vlaneseq
    %v3726 = vshrl.u32 %v3725, 7
    %v3727 = vsub.s32 %v2696, %v3726
    %v3728 = vrot.slane %v1199, %v3727
    %v3729 = vsel %vm2701, %v3728, %v3724
    %v3730 = vlaneseq
    %v3731 = vshrl.u32 %v3730, 7
    %v3732 = vsub.s32 %v2593, %v3731
    %v3733 = vrot.slane %v1202, %v3732
    %v3734 = vlaneseq
    %v3735 = vshrl.u32 %v3734, 7
    %v3736 = vsub.s32 %v2598, %v3735
    %v3737 = vrot.slane %v1205, %v3736
    %v3738 = vsel %vm2603, %v3737, %v3733
    %v3739 = vlaneseq
    %v3740 = vshrl.u32 %v3739, 7
    %v3741 = vsub.s32 %v2605, %v3740
    %v3742 = vrot.slane %v1208, %v3741
    %v3743 = vsel %vm2610, %v3742, %v3738
    %v3744 = vlaneseq
    %v3745 = vshrl.u32 %v3744, 7
    %v3746 = vsub.s32 %v2612, %v3745
    %v3747 = vrot.slane %v1211, %v3746
    %v3748 = vsel %vm2617, %v3747, %v3743
    %v3749 = vlaneseq
    %v3750 = vshrl.u32 %v3749, 7
    %v3751 = vsub.s32 %v2619, %v3750
    %v3752 = vrot.slane %v1214, %v3751
    %v3753 = vsel %vm2624, %v3752, %v3748
    %v3754 = vlaneseq
    %v3755 = vshrl.u32 %v3754, 7
    %v3756 = vsub.s32 %v2626, %v3755
    %v3757 = vrot.slane %v1217, %v3756
    %v3758 = vsel %vm2631, %v3757, %v3753
    %v3759 = vlaneseq
    %v3760 = vshrl.u32 %v3759, 7
    %v3761 = vsub.s32 %v2633, %v3760
    %v3762 = vrot.slane %v1220, %v3761
    %v3763 = vsel %vm2638, %v3762, %v3758
    %v3764 = vlaneseq
    %v3765 = vshrl.u32 %v3764, 7
    %v3766 = vsub.s32 %v2640, %v3765
    %v3767 = vrot.slane %v1223, %v3766
    %v3768 = vsel %vm2645, %v3767, %v3763
    %v3769 = vlaneseq
    %v3770 = vshrl.u32 %v3769, 7
    %v3771 = vsub.s32 %v2647, %v3770
    %v3772 = vrot.slane %v1226, %v3771
    %v3773 = vsel %vm2652, %v3772, %v3768
    %v3774 = vlaneseq
    %v3775 = vshrl.u32 %v3774, 7
    %v3776 = vsub.s32 %v2654, %v3775
    %v3777 = vrot.slane %v1229, %v3776
    %v3778 = vsel %vm2659, %v3777, %v3773
    %v3779 = vlaneseq
    %v3780 = vshrl.u32 %v3779, 7
    %v3781 = vsub.s32 %v2661, %v3780
    %v3782 = vrot.slane %v1232, %v3781
    %v3783 = vsel %vm2666, %v3782, %v3778
    %v3784 = vlaneseq
    %v3785 = vshrl.u32 %v3784, 7
    %v3786 = vsub.s32 %v2668, %v3785
    %v3787 = vrot.slane %v1235, %v3786
    %v3788 = vsel %vm2673, %v3787, %v3783
    %v3789 = vlaneseq
    %v3790 = vshrl.u32 %v3789, 7
    %v3791 = vsub.s32 %v2675, %v3790
    %v3792 = vrot.slane %v1238, %v3791
    %v3793 = vsel %vm2680, %v3792, %v3788
    %v3794 = vlaneseq
    %v3795 = vshrl.u32 %v3794, 7
    %v3796 = vsub.s32 %v2682, %v3795
    %v3797 = vrot.slane %v1241, %v3796
    %v3798 = vsel %vm2687, %v3797, %v3793
    %v3799 = vlaneseq
    %v3800 = vshrl.u32 %v3799, 7
    %v3801 = vsub.s32 %v2689, %v3800
    %v3802 = vrot.slane %v1244, %v3801
    %v3803 = vsel %vm2694, %v3802, %v3798
    %v3804 = vlaneseq
    %v3805 = vshrl.u32 %v3804, 7
    %v3806 = vsub.s32 %v2696, %v3805
    %v3807 = vrot.slane %v1247, %v3806
    %v3808 = vsel %vm2701, %v3807, %v3803
    %v3809 = vlaneseq
    %v3810 = vshrl.u32 %v3809, 7
    %v3811 = vsub.s32 %v2593, %v3810
    %v3812 = vrot.slane %v1250, %v3811
    %v3813 = vlaneseq
    %v3814 = vshrl.u32 %v3813, 7
    %v3815 = vsub.s32 %v2598, %v3814
    %v3816 = vrot.slane %v1253, %v3815
    %v3817 = vsel %vm2603, %v3816, %v3812
    %v3818 = vlaneseq
    %v3819 = vshrl.u32 %v3818, 7
    %v3820 = vsub.s32 %v2605, %v3819
    %v3821 = vrot.slane %v1256, %v3820
    %v3822 = vsel %vm2610, %v3821, %v3817
    %v3823 = vlaneseq
    %v3824 = vshrl.u32 %v3823, 7
    %v3825 = vsub.s32 %v2612, %v3824
    %v3826 = vrot.slane %v1259, %v3825
    %v3827 = vsel %vm2617, %v3826, %v3822
    %v3828 = vlaneseq
    %v3829 = vshrl.u32 %v3828, 7
    %v3830 = vsub.s32 %v2619, %v3829
    %v3831 = vrot.slane %v1262, %v3830
    %v3832 = vsel %vm2624, %v3831, %v3827
    %v3833 = vlaneseq
    %v3834 = vshrl.u32 %v3833, 7
    %v3835 = vsub.s32 %v2626, %v3834
    %v3836 = vrot.slane %v1265, %v3835
    %v3837 = vsel %vm2631, %v3836, %v3832
    %v3838 = vlaneseq
    %v3839 = vshrl.u32 %v3838, 7
    %v3840 = vsub.s32 %v2633, %v3839
    %v3841 = vrot.slane %v1268, %v3840
    %v3842 = vsel %vm2638, %v3841, %v3837
    %v3843 = vlaneseq
    %v3844 = vshrl.u32 %v3843, 7
    %v3845 = vsub.s32 %v2640, %v3844
    %v3846 = vrot.slane %v1271, %v3845
    %v3847 = vsel %vm2645, %v3846, %v3842
    %v3848 = vlaneseq
    %v3849 = vshrl.u32 %v3848, 7
    %v3850 = vsub.s32 %v2647, %v3849
    %v3851 = vrot.slane %v1274, %v3850
    %v3852 = vsel %vm2652, %v3851, %v3847
    %v3853 = vlaneseq
    %v3854 = vshrl.u32 %v3853, 7
    %v3855 = vsub.s32 %v2654, %v3854
    %v3856 = vrot.slane %v1277, %v3855
    %v3857 = vsel %vm2659, %v3856, %v3852
    %v3858 = vlaneseq
    %v3859 = vshrl.u32 %v3858, 7
    %v3860 = vsub.s32 %v2661, %v3859
    %v3861 = vrot.slane %v1280, %v3860
    %v3862 = vsel %vm2666, %v3861, %v3857
    %v3863 = vlaneseq
    %v3864 = vshrl.u32 %v3863, 7
    %v3865 = vsub.s32 %v2668, %v3864
    %v3866 = vrot.slane %v1283, %v3865
    %v3867 = vsel %vm2673, %v3866, %v3862
    %v3868 = vlaneseq
    %v3869 = vshrl.u32 %v3868, 7
    %v3870 = vsub.s32 %v2675, %v3869
    %v3871 = vrot.slane %v1286, %v3870
    %v3872 = vsel %vm2680, %v3871, %v3867
    %v3873 = vlaneseq
    %v3874 = vshrl.u32 %v3873, 7
    %v3875 = vsub.s32 %v2682, %v3874
    %v3876 = vrot.slane %v1289, %v3875
    %v3877 = vsel %vm2687, %v3876, %v3872
    %v3878 = vlaneseq
    %v3879 = vshrl.u32 %v3878, 7
    %v3880 = vsub.s32 %v2689, %v3879
    %v3881 = vrot.slane %v1292, %v3880
    %v3882 = vsel %vm2694, %v3881, %v3877
    %v3883 = vlaneseq
    %v3884 = vshrl.u32 %v3883, 7
    %v3885 = vsub.s32 %v2696, %v3884
    %v3886 = vrot.slane %v1295, %v3885
    %v3887 = vsel %vm2701, %v3886, %v3882
    %v3888 = vlaneseq
    %v3889 = vshrl.u32 %v3888, 7
    %v3890 = vsub.s32 %v2593, %v3889
    %v3891 = vrot.slane %v1298, %v3890
    %v3892 = vlaneseq
    %v3893 = vshrl.u32 %v3892, 7
    %v3894 = vsub.s32 %v2598, %v3893
    %v3895 = vrot.slane %v1301, %v3894
    %v3896 = vsel %vm2603, %v3895, %v3891
    %v3897 = vlaneseq
    %v3898 = vshrl.u32 %v3897, 7
    %v3899 = vsub.s32 %v2605, %v3898
    %v3900 = vrot.slane %v1304, %v3899
    %v3901 = vsel %vm2610, %v3900, %v3896
    %v3902 = vlaneseq
    %v3903 = vshrl.u32 %v3902, 7
    %v3904 = vsub.s32 %v2612, %v3903
    %v3905 = vrot.slane %v1307, %v3904
    %v3906 = vsel %vm2617, %v3905, %v3901
    %v3907 = vlaneseq
    %v3908 = vshrl.u32 %v3907, 7
    %v3909 = vsub.s32 %v2619, %v3908
    %v3910 = vrot.slane %v1310, %v3909
    %v3911 = vsel %vm2624, %v3910, %v3906
    %v3912 = vlaneseq
    %v3913 = vshrl.u32 %v3912, 7
    %v3914 = vsub.s32 %v2626, %v3913
    %v3915 = vrot.slane %v1313, %v3914
    %v3916 = vsel %vm2631, %v3915, %v3911
    %v3917 = vlaneseq
    %v3918 = vshrl.u32 %v3917, 7
    %v3919 = vsub.s32 %v2633, %v3918
    %v3920 = vrot.slane %v1316, %v3919
    %v3921 = vsel %vm2638, %v3920, %v3916
    %v3922 = vlaneseq
    %v3923 = vshrl.u32 %v3922, 7
    %v3924 = vsub.s32 %v2640, %v3923
    %v3925 = vrot.slane %v1319, %v3924
    %v3926 = vsel %vm2645, %v3925, %v3921
    %v3927 = vlaneseq
    %v3928 = vshrl.u32 %v3927, 7
    %v3929 = vsub.s32 %v2647, %v3928
    %v3930 = vrot.slane %v1322, %v3929
    %v3931 = vsel %vm2652, %v3930, %v3926
    %v3932 = vlaneseq
    %v3933 = vshrl.u32 %v3932, 7
    %v3934 = vsub.s32 %v2654, %v3933
    %v3935 = vrot.slane %v1325, %v3934
    %v3936 = vsel %vm2659, %v3935, %v3931
    %v3937 = vlaneseq
    %v3938 = vshrl.u32 %v3937, 7
    %v3939 = vsub.s32 %v2661, %v3938
    %v3940 = vrot.slane %v1328, %v3939
    %v3941 = vsel %vm2666, %v3940, %v3936
    %v3942 = vlaneseq
    %v3943 = vshrl.u32 %v3942, 7
    %v3944 = vsub.s32 %v2668, %v3943
    %v3945 = vrot.slane %v1331, %v3944
    %v3946 = vsel %vm2673, %v3945, %v3941
    %v3947 = vlaneseq
    %v3948 = vshrl.u32 %v3947, 7
    %v3949 = vsub.s32 %v2675, %v3948
    %v3950 = vrot.slane %v1334, %v3949
    %v3951 = vsel %vm2680, %v3950, %v3946
    %v3952 = vlaneseq
    %v3953 = vshrl.u32 %v3952, 7
    %v3954 = vsub.s32 %v2682, %v3953
    %v3955 = vrot.slane %v1337, %v3954
    %v3956 = vsel %vm2687, %v3955, %v3951
    %v3957 = vlaneseq
    %v3958 = vshrl.u32 %v3957, 7
    %v3959 = vsub.s32 %v2689, %v3958
    %v3960 = vrot.slane %v1340, %v3959
    %v3961 = vsel %vm2694, %v3960, %v3956
    %v3962 = vlaneseq
    %v3963 = vshrl.u32 %v3962, 7
    %v3964 = vsub.s32 %v2696, %v3963
    %v3965 = vrot.slane %v1343, %v3964
    %v3966 = vsel %vm2701, %v3965, %v3961
    %v3967 = vlaneseq
    %v3968 = vshrl.u32 %v3967, 7
    %v3969 = vsub.s32 %v2593, %v3968
    %v3970 = vrot.slane %v1346, %v3969
    %v3971 = vlaneseq
    %v3972 = vshrl.u32 %v3971, 7
    %v3973 = vsub.s32 %v2598, %v3972
    %v3974 = vrot.slane %v1349, %v3973
    %v3975 = vsel %vm2603, %v3974, %v3970
    %v3976 = vlaneseq
    %v3977 = vshrl.u32 %v3976, 7
    %v3978 = vsub.s32 %v2605, %v3977
    %v3979 = vrot.slane %v1352, %v3978
    %v3980 = vsel %vm2610, %v3979, %v3975
    %v3981 = vlaneseq
    %v3982 = vshrl.u32 %v3981, 7
    %v3983 = vsub.s32 %v2612, %v3982
    %v3984 = vrot.slane %v1355, %v3983
    %v3985 = vsel %vm2617, %v3984, %v3980
    %v3986 = vlaneseq
    %v3987 = vshrl.u32 %v3986, 7
    %v3988 = vsub.s32 %v2619, %v3987
    %v3989 = vrot.slane %v1358, %v3988
    %v3990 = vsel %vm2624, %v3989, %v3985
    %v3991 = vlaneseq
    %v3992 = vshrl.u32 %v3991, 7
    %v3993 = vsub.s32 %v2626, %v3992
    %v3994 = vrot.slane %v1361, %v3993
    %v3995 = vsel %vm2631, %v3994, %v3990
    %v3996 = vlaneseq
    %v3997 = vshrl.u32 %v3996, 7
    %v3998 = vsub.s32 %v2633, %v3997
    %v3999 = vrot.slane %v1364, %v3998
    %v4000 = vsel %vm2638, %v3999, %v3995
    %v4001 = vlaneseq
    %v4002 = vshrl.u32 %v4001, 7
    %v4003 = vsub.s32 %v2640, %v4002
    %v4004 = vrot.slane %v1367, %v4003
    %v4005 = vsel %vm2645, %v4004, %v4000
    %v4006 = vlaneseq
    %v4007 = vshrl.u32 %v4006, 7
    %v4008 = vsub.s32 %v2647, %v4007
    %v4009 = vrot.slane %v1370, %v4008
    %v4010 = vsel %vm2652, %v4009, %v4005
    %v4011 = vlaneseq
    %v4012 = vshrl.u32 %v4011, 7
    %v4013 = vsub.s32 %v2654, %v4012
    %v4014 = vrot.slane %v1373, %v4013
    %v4015 = vsel %vm2659, %v4014, %v4010
    %v4016 = vlaneseq
    %v4017 = vshrl.u32 %v4016, 7
    %v4018 = vsub.s32 %v2661, %v4017
    %v4019 = vrot.slane %v1376, %v4018
    %v4020 = vsel %vm2666, %v4019, %v4015
    %v4021 = vlaneseq
    %v4022 = vshrl.u32 %v4021, 7
    %v4023 = vsub.s32 %v2668, %v4022
    %v4024 = vrot.slane %v1379, %v4023
    %v4025 = vsel %vm2673, %v4024, %v4020
    %v4026 = vlaneseq
    %v4027 = vshrl.u32 %v4026, 7
    %v4028 = vsub.s32 %v2675, %v4027
    %v4029 = vrot.slane %v1382, %v4028
    %v4030 = vsel %vm2680, %v4029, %v4025
    %v4031 = vlaneseq
    %v4032 = vshrl.u32 %v4031, 7
    %v4033 = vsub.s32 %v2682, %v4032
    %v4034 = vrot.slane %v1385, %v4033
    %v4035 = vsel %vm2687, %v4034, %v4030
    %v4036 = vlaneseq
    %v4037 = vshrl.u32 %v4036, 7
    %v4038 = vsub.s32 %v2689, %v4037
    %v4039 = vrot.slane %v1388, %v4038
    %v4040 = vsel %vm2694, %v4039, %v4035
    %v4041 = vlaneseq
    %v4042 = vshrl.u32 %v4041, 7
    %v4043 = vsub.s32 %v2696, %v4042
    %v4044 = vrot.slane %v1391, %v4043
    %v4045 = vsel %vm2701, %v4044, %v4040
    %v4046 = vlaneseq
    %v4047 = vshrl.u32 %v4046, 7
    %v4048 = vsub.s32 %v2593, %v4047
    %v4049 = vrot.slane %v1394, %v4048
    %v4050 = vlaneseq
    %v4051 = vshrl.u32 %v4050, 7
    %v4052 = vsub.s32 %v2598, %v4051
    %v4053 = vrot.slane %v1397, %v4052
    %v4054 = vsel %vm2603, %v4053, %v4049
    %v4055 = vlaneseq
    %v4056 = vshrl.u32 %v4055, 7
    %v4057 = vsub.s32 %v2605, %v4056
    %v4058 = vrot.slane %v1400, %v4057
    %v4059 = vsel %vm2610, %v4058, %v4054
    %v4060 = vlaneseq
    %v4061 = vshrl.u32 %v4060, 7
    %v4062 = vsub.s32 %v2612, %v4061
    %v4063 = vrot.slane %v1403, %v4062
    %v4064 = vsel %vm2617, %v4063, %v4059
    %v4065 = vlaneseq
    %v4066 = vshrl.u32 %v4065, 7
    %v4067 = vsub.s32 %v2619, %v4066
    %v4068 = vrot.slane %v1406, %v4067
    %v4069 = vsel %vm2624, %v4068, %v4064
    %v4070 = vlaneseq
    %v4071 = vshrl.u32 %v4070, 7
    %v4072 = vsub.s32 %v2626, %v4071
    %v4073 = vrot.slane %v1409, %v4072
    %v4074 = vsel %vm2631, %v4073, %v4069
    %v4075 = vlaneseq
    %v4076 = vshrl.u32 %v4075, 7
    %v4077 = vsub.s32 %v2633, %v4076
    %v4078 = vrot.slane %v1412, %v4077
    %v4079 = vsel %vm2638, %v4078, %v4074
    %v4080 = vlaneseq
    %v4081 = vshrl.u32 %v4080, 7
    %v4082 = vsub.s32 %v2640, %v4081
    %v4083 = vrot.slane %v1415, %v4082
    %v4084 = vsel %vm2645, %v4083, %v4079
    %v4085 = vlaneseq
    %v4086 = vshrl.u32 %v4085, 7
    %v4087 = vsub.s32 %v2647, %v4086
    %v4088 = vrot.slane %v1418, %v4087
    %v4089 = vsel %vm2652, %v4088, %v4084
    %v4090 = vlaneseq
    %v4091 = vshrl.u32 %v4090, 7
    %v4092 = vsub.s32 %v2654, %v4091
    %v4093 = vrot.slane %v1421, %v4092
    %v4094 = vsel %vm2659, %v4093, %v4089
    %v4095 = vlaneseq
    %v4096 = vshrl.u32 %v4095, 7
    %v4097 = vsub.s32 %v2661, %v4096
    %v4098 = vrot.slane %v1424, %v4097
    %v4099 = vsel %vm2666, %v4098, %v4094
    %v4100 = vlaneseq
    %v4101 = vshrl.u32 %v4100, 7
    %v4102 = vsub.s32 %v2668, %v4101
    %v4103 = vrot.slane %v1427, %v4102
    %v4104 = vsel %vm2673, %v4103, %v4099
    %v4105 = vlaneseq
    %v4106 = vshrl.u32 %v4105, 7
    %v4107 = vsub.s32 %v2675, %v4106
    %v4108 = vrot.slane %v1430, %v4107
    %v4109 = vsel %vm2680, %v4108, %v4104
    %v4110 = vlaneseq
    %v4111 = vshrl.u32 %v4110, 7
    %v4112 = vsub.s32 %v2682, %v4111
    %v4113 = vrot.slane %v1433, %v4112
    %v4114 = vsel %vm2687, %v4113, %v4109
    %v4115 = vlaneseq
    %v4116 = vshrl.u32 %v4115, 7
    %v4117 = vsub.s32 %v2689, %v4116
    %v4118 = vrot.slane %v1436, %v4117
    %v4119 = vsel %vm2694, %v4118, %v4114
    %v4120 = vlaneseq
    %v4121 = vshrl.u32 %v4120, 7
    %v4122 = vsub.s32 %v2696, %v4121
    %v4123 = vrot.slane %v1439, %v4122
    %v4124 = vsel %vm2701, %v4123, %v4119
    %v4125 = vlaneseq
    %v4126 = vshrl.u32 %v4125, 7
    %v4127 = vsub.s32 %v2593, %v4126
    %v4128 = vrot.slane %v1442, %v4127
    %v4129 = vlaneseq
    %v4130 = vshrl.u32 %v4129, 7
    %v4131 = vsub.s32 %v2598, %v4130
    %v4132 = vrot.slane %v1445, %v4131
    %v4133 = vsel %vm2603, %v4132, %v4128
    %v4134 = vlaneseq
    %v4135 = vshrl.u32 %v4134, 7
    %v4136 = vsub.s32 %v2605, %v4135
    %v4137 = vrot.slane %v1448, %v4136
    %v4138 = vsel %vm2610, %v4137, %v4133
    %v4139 = vlaneseq
    %v4140 = vshrl.u32 %v4139, 7
    %v4141 = vsub.s32 %v2612, %v4140
    %v4142 = vrot.slane %v1451, %v4141
    %v4143 = vsel %vm2617, %v4142, %v4138
    %v4144 = vlaneseq
    %v4145 = vshrl.u32 %v4144, 7
    %v4146 = vsub.s32 %v2619, %v4145
    %v4147 = vrot.slane %v1454, %v4146
    %v4148 = vsel %vm2624, %v4147, %v4143
    %v4149 = vlaneseq
    %v4150 = vshrl.u32 %v4149, 7
    %v4151 = vsub.s32 %v2626, %v4150
    %v4152 = vrot.slane %v1457, %v4151
    %v4153 = vsel %vm2631, %v4152, %v4148
    %v4154 = vlaneseq
    %v4155 = vshrl.u32 %v4154, 7
    %v4156 = vsub.s32 %v2633, %v4155
    %v4157 = vrot.slane %v1460, %v4156
    %v4158 = vsel %vm2638, %v4157, %v4153
    %v4159 = vlaneseq
    %v4160 = vshrl.u32 %v4159, 7
    %v4161 = vsub.s32 %v2640, %v4160
    %v4162 = vrot.slane %v1463, %v4161
    %v4163 = vsel %vm2645, %v4162, %v4158
    %v4164 = vlaneseq
    %v4165 = vshrl.u32 %v4164, 7
    %v4166 = vsub.s32 %v2647, %v4165
    %v4167 = vrot.slane %v1466, %v4166
    %v4168 = vsel %vm2652, %v4167, %v4163
    %v4169 = vlaneseq
    %v4170 = vshrl.u32 %v4169, 7
    %v4171 = vsub.s32 %v2654, %v4170
    %v4172 = vrot.slane %v1469, %v4171
    %v4173 = vsel %vm2659, %v4172, %v4168
    %v4174 = vlaneseq
    %v4175 = vshrl.u32 %v4174, 7
    %v4176 = vsub.s32 %v2661, %v4175
    %v4177 = vrot.slane %v1472, %v4176
    %v4178 = vsel %vm2666, %v4177, %v4173
    %v4179 = vlaneseq
    %v4180 = vshrl.u32 %v4179, 7
    %v4181 = vsub.s32 %v2668, %v4180
    %v4182 = vrot.slane %v1475, %v4181
    %v4183 = vsel %vm2673, %v4182, %v4178
    %v4184 = vlaneseq
    %v4185 = vshrl.u32 %v4184, 7
    %v4186 = vsub.s32 %v2675, %v4185
    %v4187 = vrot.slane %v1478, %v4186
    %v4188 = vsel %vm2680, %v4187, %v4183
    %v4189 = vlaneseq
    %v4190 = vshrl.u32 %v4189, 7
    %v4191 = vsub.s32 %v2682, %v4190
    %v4192 = vrot.slane %v1481, %v4191
    %v4193 = vsel %vm2687, %v4192, %v4188
    %v4194 = vlaneseq
    %v4195 = vshrl.u32 %v4194, 7
    %v4196 = vsub.s32 %v2689, %v4195
    %v4197 = vrot.slane %v1484, %v4196
    %v4198 = vsel %vm2694, %v4197, %v4193
    %v4199 = vlaneseq
    %v4200 = vshrl.u32 %v4199, 7
    %v4201 = vsub.s32 %v2696, %v4200
    %v4202 = vrot.slane %v1487, %v4201
    %v4203 = vsel %vm2701, %v4202, %v4198
    %v4204 = vlaneseq
    %v4205 = vshrl.u32 %v4204, 7
    %v4206 = vsub.s32 %v2593, %v4205
    %v4207 = vrot.slane %v1490, %v4206
    %v4208 = vlaneseq
    %v4209 = vshrl.u32 %v4208, 7
    %v4210 = vsub.s32 %v2598, %v4209
    %v4211 = vrot.slane %v1493, %v4210
    %v4212 = vsel %vm2603, %v4211, %v4207
    %v4213 = vlaneseq
    %v4214 = vshrl.u32 %v4213, 7
    %v4215 = vsub.s32 %v2605, %v4214
    %v4216 = vrot.slane %v1496, %v4215
    %v4217 = vsel %vm2610, %v4216, %v4212
    %v4218 = vlaneseq
    %v4219 = vshrl.u32 %v4218, 7
    %v4220 = vsub.s32 %v2612, %v4219
    %v4221 = vrot.slane %v1499, %v4220
    %v4222 = vsel %vm2617, %v4221, %v4217
    %v4223 = vlaneseq
    %v4224 = vshrl.u32 %v4223, 7
    %v4225 = vsub.s32 %v2619, %v4224
    %v4226 = vrot.slane %v1502, %v4225
    %v4227 = vsel %vm2624, %v4226, %v4222
    %v4228 = vlaneseq
    %v4229 = vshrl.u32 %v4228, 7
    %v4230 = vsub.s32 %v2626, %v4229
    %v4231 = vrot.slane %v1505, %v4230
    %v4232 = vsel %vm2631, %v4231, %v4227
    %v4233 = vlaneseq
    %v4234 = vshrl.u32 %v4233, 7
    %v4235 = vsub.s32 %v2633, %v4234
    %v4236 = vrot.slane %v1508, %v4235
    %v4237 = vsel %vm2638, %v4236, %v4232
    %v4238 = vlaneseq
    %v4239 = vshrl.u32 %v4238, 7
    %v4240 = vsub.s32 %v2640, %v4239
    %v4241 = vrot.slane %v1511, %v4240
    %v4242 = vsel %vm2645, %v4241, %v4237
    %v4243 = vlaneseq
    %v4244 = vshrl.u32 %v4243, 7
    %v4245 = vsub.s32 %v2647, %v4244
    %v4246 = vrot.slane %v1514, %v4245
    %v4247 = vsel %vm2652, %v4246, %v4242
    %v4248 = vlaneseq
    %v4249 = vshrl.u32 %v4248, 7
    %v4250 = vsub.s32 %v2654, %v4249
    %v4251 = vrot.slane %v1517, %v4250
    %v4252 = vsel %vm2659, %v4251, %v4247
    %v4253 = vlaneseq
    %v4254 = vshrl.u32 %v4253, 7
    %v4255 = vsub.s32 %v2661, %v4254
    %v4256 = vrot.slane %v1520, %v4255
    %v4257 = vsel %vm2666, %v4256, %v4252
    %v4258 = vlaneseq
    %v4259 = vshrl.u32 %v4258, 7
    %v4260 = vsub.s32 %v2668, %v4259
    %v4261 = vrot.slane %v1523, %v4260
    %v4262 = vsel %vm2673, %v4261, %v4257
    %v4263 = vlaneseq
    %v4264 = vshrl.u32 %v4263, 7
    %v4265 = vsub.s32 %v2675, %v4264
    %v4266 = vrot.slane %v1526, %v4265
    %v4267 = vsel %vm2680, %v4266, %v4262
    %v4268 = vlaneseq
    %v4269 = vshrl.u32 %v4268, 7
    %v4270 = vsub.s32 %v2682, %v4269
    %v4271 = vrot.slane %v1529, %v4270
    %v4272 = vsel %vm2687, %v4271, %v4267
    %v4273 = vlaneseq
    %v4274 = vshrl.u32 %v4273, 7
    %v4275 = vsub.s32 %v2689, %v4274
    %v4276 = vrot.slane %v1532, %v4275
    %v4277 = vsel %vm2694, %v4276, %v4272
    %v4278 = vlaneseq
    %v4279 = vshrl.u32 %v4278, 7
    %v4280 = vsub.s32 %v2696, %v4279
    %v4281 = vrot.slane %v1535, %v4280
    %v4282 = vsel %vm2701, %v4281, %v4277
    %v4283 = vlaneseq
    %v4284 = vshrl.u32 %v4283, 7
    %v4285 = vsub.s32 %v2593, %v4284
    %v4286 = vrot.slane %v1538, %v4285
    %v4287 = vlaneseq
    %v4288 = vshrl.u32 %v4287, 7
    %v4289 = vsub.s32 %v2598, %v4288
    %v4290 = vrot.slane %v1541, %v4289
    %v4291 = vsel %vm2603, %v4290, %v4286
    %v4292 = vlaneseq
    %v4293 = vshrl.u32 %v4292, 7
    %v4294 = vsub.s32 %v2605, %v4293
    %v4295 = vrot.slane %v1544, %v4294
    %v4296 = vsel %vm2610, %v4295, %v4291
    %v4297 = vlaneseq
    %v4298 = vshrl.u32 %v4297, 7
    %v4299 = vsub.s32 %v2612, %v4298
    %v4300 = vrot.slane %v1547, %v4299
    %v4301 = vsel %vm2617, %v4300, %v4296
    %v4302 = vlaneseq
    %v4303 = vshrl.u32 %v4302, 7
    %v4304 = vsub.s32 %v2619, %v4303
    %v4305 = vrot.slane %v1550, %v4304
    %v4306 = vsel %vm2624, %v4305, %v4301
    %v4307 = vlaneseq
    %v4308 = vshrl.u32 %v4307, 7
    %v4309 = vsub.s32 %v2626, %v4308
    %v4310 = vrot.slane %v1553, %v4309
    %v4311 = vsel %vm2631, %v4310, %v4306
    %v4312 = vlaneseq
    %v4313 = vshrl.u32 %v4312, 7
    %v4314 = vsub.s32 %v2633, %v4313
    %v4315 = vrot.slane %v1556, %v4314
    %v4316 = vsel %vm2638, %v4315, %v4311
    %v4317 = vlaneseq
    %v4318 = vshrl.u32 %v4317, 7
    %v4319 = vsub.s32 %v2640, %v4318
    %v4320 = vrot.slane %v1559, %v4319
    %v4321 = vsel %vm2645, %v4320, %v4316
    %v4322 = vlaneseq
    %v4323 = vshrl.u32 %v4322, 7
    %v4324 = vsub.s32 %v2647, %v4323
    %v4325 = vrot.slane %v1562, %v4324
    %v4326 = vsel %vm2652, %v4325, %v4321
    %v4327 = vlaneseq
    %v4328 = vshrl.u32 %v4327, 7
    %v4329 = vsub.s32 %v2654, %v4328
    %v4330 = vrot.slane %v1565, %v4329
    %v4331 = vsel %vm2659, %v4330, %v4326
    %v4332 = vlaneseq
    %v4333 = vshrl.u32 %v4332, 7
    %v4334 = vsub.s32 %v2661, %v4333
    %v4335 = vrot.slane %v1568, %v4334
    %v4336 = vsel %vm2666, %v4335, %v4331
    %v4337 = vlaneseq
    %v4338 = vshrl.u32 %v4337, 7
    %v4339 = vsub.s32 %v2668, %v4338
    %v4340 = vrot.slane %v1571, %v4339
    %v4341 = vsel %vm2673, %v4340, %v4336
    %v4342 = vlaneseq
    %v4343 = vshrl.u32 %v4342, 7
    %v4344 = vsub.s32 %v2675, %v4343
    %v4345 = vrot.slane %v1574, %v4344
    %v4346 = vsel %vm2680, %v4345, %v4341
    %v4347 = vlaneseq
    %v4348 = vshrl.u32 %v4347, 7
    %v4349 = vsub.s32 %v2682, %v4348
    %v4350 = vrot.slane %v1577, %v4349
    %v4351 = vsel %vm2687, %v4350, %v4346
    %v4352 = vlaneseq
    %v4353 = vshrl.u32 %v4352, 7
    %v4354 = vsub.s32 %v2689, %v4353
    %v4355 = vrot.slane %v1580, %v4354
    %v4356 = vsel %vm2694, %v4355, %v4351
    %v4357 = vlaneseq
    %v4358 = vshrl.u32 %v4357, 7
    %v4359 = vsub.s32 %v2696, %v4358
    %v4360 = vrot.slane %v1583, %v4359
    %v4361 = vsel %vm2701, %v4360, %v4356
    %v4362 = vlaneseq
    %v4363 = vshrl.u32 %v4362, 7
    %v4364 = vsub.s32 %v2593, %v4363
    %v4365 = vrot.slane %v1586, %v4364
    %v4366 = vlaneseq
    %v4367 = vshrl.u32 %v4366, 7
    %v4368 = vsub.s32 %v2598, %v4367
    %v4369 = vrot.slane %v1589, %v4368
    %v4370 = vsel %vm2603, %v4369, %v4365
    %v4371 = vlaneseq
    %v4372 = vshrl.u32 %v4371, 7
    %v4373 = vsub.s32 %v2605, %v4372
    %v4374 = vrot.slane %v1592, %v4373
    %v4375 = vsel %vm2610, %v4374, %v4370
    %v4376 = vlaneseq
    %v4377 = vshrl.u32 %v4376, 7
    %v4378 = vsub.s32 %v2612, %v4377
    %v4379 = vrot.slane %v1595, %v4378
    %v4380 = vsel %vm2617, %v4379, %v4375
    %v4381 = vlaneseq
    %v4382 = vshrl.u32 %v4381, 7
    %v4383 = vsub.s32 %v2619, %v4382
    %v4384 = vrot.slane %v1598, %v4383
    %v4385 = vsel %vm2624, %v4384, %v4380
    %v4386 = vlaneseq
    %v4387 = vshrl.u32 %v4386, 7
    %v4388 = vsub.s32 %v2626, %v4387
    %v4389 = vrot.slane %v1601, %v4388
    %v4390 = vsel %vm2631, %v4389, %v4385
    %v4391 = vlaneseq
    %v4392 = vshrl.u32 %v4391, 7
    %v4393 = vsub.s32 %v2633, %v4392
    %v4394 = vrot.slane %v1604, %v4393
    %v4395 = vsel %vm2638, %v4394, %v4390
    %v4396 = vlaneseq
    %v4397 = vshrl.u32 %v4396, 7
    %v4398 = vsub.s32 %v2640, %v4397
    %v4399 = vrot.slane %v1607, %v4398
    %v4400 = vsel %vm2645, %v4399, %v4395
    %v4401 = vlaneseq
    %v4402 = vshrl.u32 %v4401, 7
    %v4403 = vsub.s32 %v2647, %v4402
    %v4404 = vrot.slane %v1610, %v4403
    %v4405 = vsel %vm2652, %v4404, %v4400
    %v4406 = vlaneseq
    %v4407 = vshrl.u32 %v4406, 7
    %v4408 = vsub.s32 %v2654, %v4407
    %v4409 = vrot.slane %v1613, %v4408
    %v4410 = vsel %vm2659, %v4409, %v4405
    %v4411 = vlaneseq
    %v4412 = vshrl.u32 %v4411, 7
    %v4413 = vsub.s32 %v2661, %v4412
    %v4414 = vrot.slane %v1616, %v4413
    %v4415 = vsel %vm2666, %v4414, %v4410
    %v4416 = vlaneseq
    %v4417 = vshrl.u32 %v4416, 7
    %v4418 = vsub.s32 %v2668, %v4417
    %v4419 = vrot.slane %v1619, %v4418
    %v4420 = vsel %vm2673, %v4419, %v4415
    %v4421 = vlaneseq
    %v4422 = vshrl.u32 %v4421, 7
    %v4423 = vsub.s32 %v2675, %v4422
    %v4424 = vrot.slane %v1622, %v4423
    %v4425 = vsel %vm2680, %v4424, %v4420
    %v4426 = vlaneseq
    %v4427 = vshrl.u32 %v4426, 7
    %v4428 = vsub.s32 %v2682, %v4427
    %v4429 = vrot.slane %v1625, %v4428
    %v4430 = vsel %vm2687, %v4429, %v4425
    %v4431 = vlaneseq
    %v4432 = vshrl.u32 %v4431, 7
    %v4433 = vsub.s32 %v2689, %v4432
    %v4434 = vrot.slane %v1628, %v4433
    %v4435 = vsel %vm2694, %v4434, %v4430
    %v4436 = vlaneseq
    %v4437 = vshrl.u32 %v4436, 7
    %v4438 = vsub.s32 %v2696, %v4437
    %v4439 = vrot.slane %v1631, %v4438
    %v4440 = vsel %vm2701, %v4439, %v4435
    %v4441 = vlaneseq
    %v4442 = vshrl.u32 %v4441, 7
    %v4443 = vsub.s32 %v2593, %v4442
    %v4444 = vrot.slane %v1634, %v4443
    %v4445 = vlaneseq
    %v4446 = vshrl.u32 %v4445, 7
    %v4447 = vsub.s32 %v2598, %v4446
    %v4448 = vrot.slane %v1637, %v4447
    %v4449 = vsel %vm2603, %v4448, %v4444
    %v4450 = vlaneseq
    %v4451 = vshrl.u32 %v4450, 7
    %v4452 = vsub.s32 %v2605, %v4451
    %v4453 = vrot.slane %v1640, %v4452
    %v4454 = vsel %vm2610, %v4453, %v4449
    %v4455 = vlaneseq
    %v4456 = vshrl.u32 %v4455, 7
    %v4457 = vsub.s32 %v2612, %v4456
    %v4458 = vrot.slane %v1643, %v4457
    %v4459 = vsel %vm2617, %v4458, %v4454
    %v4460 = vlaneseq
    %v4461 = vshrl.u32 %v4460, 7
    %v4462 = vsub.s32 %v2619, %v4461
    %v4463 = vrot.slane %v1646, %v4462
    %v4464 = vsel %vm2624, %v4463, %v4459
    %v4465 = vlaneseq
    %v4466 = vshrl.u32 %v4465, 7
    %v4467 = vsub.s32 %v2626, %v4466
    %v4468 = vrot.slane %v1649, %v4467
    %v4469 = vsel %vm2631, %v4468, %v4464
    %v4470 = vlaneseq
    %v4471 = vshrl.u32 %v4470, 7
    %v4472 = vsub.s32 %v2633, %v4471
    %v4473 = vrot.slane %v1652, %v4472
    %v4474 = vsel %vm2638, %v4473, %v4469
    %v4475 = vlaneseq
    %v4476 = vshrl.u32 %v4475, 7
    %v4477 = vsub.s32 %v2640, %v4476
    %v4478 = vrot.slane %v1655, %v4477
    %v4479 = vsel %vm2645, %v4478, %v4474
    %v4480 = vlaneseq
    %v4481 = vshrl.u32 %v4480, 7
    %v4482 = vsub.s32 %v2647, %v4481
    %v4483 = vrot.slane %v1658, %v4482
    %v4484 = vsel %vm2652, %v4483, %v4479
    %v4485 = vlaneseq
    %v4486 = vshrl.u32 %v4485, 7
    %v4487 = vsub.s32 %v2654, %v4486
    %v4488 = vrot.slane %v1661, %v4487
    %v4489 = vsel %vm2659, %v4488, %v4484
    %v4490 = vlaneseq
    %v4491 = vshrl.u32 %v4490, 7
    %v4492 = vsub.s32 %v2661, %v4491
    %v4493 = vrot.slane %v1664, %v4492
    %v4494 = vsel %vm2666, %v4493, %v4489
    %v4495 = vlaneseq
    %v4496 = vshrl.u32 %v4495, 7
    %v4497 = vsub.s32 %v2668, %v4496
    %v4498 = vrot.slane %v1667, %v4497
    %v4499 = vsel %vm2673, %v4498, %v4494
    %v4500 = vlaneseq
    %v4501 = vshrl.u32 %v4500, 7
    %v4502 = vsub.s32 %v2675, %v4501
    %v4503 = vrot.slane %v1670, %v4502
    %v4504 = vsel %vm2680, %v4503, %v4499
    %v4505 = vlaneseq
    %v4506 = vshrl.u32 %v4505, 7
    %v4507 = vsub.s32 %v2682, %v4506
    %v4508 = vrot.slane %v1673, %v4507
    %v4509 = vsel %vm2687, %v4508, %v4504
    %v4510 = vlaneseq
    %v4511 = vshrl.u32 %v4510, 7
    %v4512 = vsub.s32 %v2689, %v4511
    %v4513 = vrot.slane %v1676, %v4512
    %v4514 = vsel %vm2694, %v4513, %v4509
    %v4515 = vlaneseq
    %v4516 = vshrl.u32 %v4515, 7
    %v4517 = vsub.s32 %v2696, %v4516
    %v4518 = vrot.slane %v1679, %v4517
    %v4519 = vsel %vm2701, %v4518, %v4514
    %v4520 = vlaneseq
    %v4521 = vshrl.u32 %v4520, 7
    %v4522 = vsub.s32 %v2593, %v4521
    %v4523 = vrot.slane %v1682, %v4522
    %v4524 = vlaneseq
    %v4525 = vshrl.u32 %v4524, 7
    %v4526 = vsub.s32 %v2598, %v4525
    %v4527 = vrot.slane %v1685, %v4526
    %v4528 = vsel %vm2603, %v4527, %v4523
    %v4529 = vlaneseq
    %v4530 = vshrl.u32 %v4529, 7
    %v4531 = vsub.s32 %v2605, %v4530
    %v4532 = vrot.slane %v1688, %v4531
    %v4533 = vsel %vm2610, %v4532, %v4528
    %v4534 = vlaneseq
    %v4535 = vshrl.u32 %v4534, 7
    %v4536 = vsub.s32 %v2612, %v4535
    %v4537 = vrot.slane %v1691, %v4536
    %v4538 = vsel %vm2617, %v4537, %v4533
    %v4539 = vlaneseq
    %v4540 = vshrl.u32 %v4539, 7
    %v4541 = vsub.s32 %v2619, %v4540
    %v4542 = vrot.slane %v1694, %v4541
    %v4543 = vsel %vm2624, %v4542, %v4538
    %v4544 = vlaneseq
    %v4545 = vshrl.u32 %v4544, 7
    %v4546 = vsub.s32 %v2626, %v4545
    %v4547 = vrot.slane %v1697, %v4546
    %v4548 = vsel %vm2631, %v4547, %v4543
    %v4549 = vlaneseq
    %v4550 = vshrl.u32 %v4549, 7
    %v4551 = vsub.s32 %v2633, %v4550
    %v4552 = vrot.slane %v1700, %v4551
    %v4553 = vsel %vm2638, %v4552, %v4548
    %v4554 = vlaneseq
    %v4555 = vshrl.u32 %v4554, 7
    %v4556 = vsub.s32 %v2640, %v4555
    %v4557 = vrot.slane %v1703, %v4556
    %v4558 = vsel %vm2645, %v4557, %v4553
    %v4559 = vlaneseq
    %v4560 = vshrl.u32 %v4559, 7
    %v4561 = vsub.s32 %v2647, %v4560
    %v4562 = vrot.slane %v1706, %v4561
    %v4563 = vsel %vm2652, %v4562, %v4558
    %v4564 = vlaneseq
    %v4565 = vshrl.u32 %v4564, 7
    %v4566 = vsub.s32 %v2654, %v4565
    %v4567 = vrot.slane %v1709, %v4566
    %v4568 = vsel %vm2659, %v4567, %v4563
    %v4569 = vlaneseq
    %v4570 = vshrl.u32 %v4569, 7
    %v4571 = vsub.s32 %v2661, %v4570
    %v4572 = vrot.slane %v1712, %v4571
    %v4573 = vsel %vm2666, %v4572, %v4568
    %v4574 = vlaneseq
    %v4575 = vshrl.u32 %v4574, 7
    %v4576 = vsub.s32 %v2668, %v4575
    %v4577 = vrot.slane %v1715, %v4576
    %v4578 = vsel %vm2673, %v4577, %v4573
    %v4579 = vlaneseq
    %v4580 = vshrl.u32 %v4579, 7
    %v4581 = vsub.s32 %v2675, %v4580
    %v4582 = vrot.slane %v1718, %v4581
    %v4583 = vsel %vm2680, %v4582, %v4578
    %v4584 = vlaneseq
    %v4585 = vshrl.u32 %v4584, 7
    %v4586 = vsub.s32 %v2682, %v4585
    %v4587 = vrot.slane %v1721, %v4586
    %v4588 = vsel %vm2687, %v4587, %v4583
    %v4589 = vlaneseq
    %v4590 = vshrl.u32 %v4589, 7
    %v4591 = vsub.s32 %v2689, %v4590
    %v4592 = vrot.slane %v1724, %v4591
    %v4593 = vsel %vm2694, %v4592, %v4588
    %v4594 = vlaneseq
    %v4595 = vshrl.u32 %v4594, 7
    %v4596 = vsub.s32 %v2696, %v4595
    %v4597 = vrot.slane %v1727, %v4596
    %v4598 = vsel %vm2701, %v4597, %v4593
    %v4599 = vlaneseq
    %v4600 = vshrl.u32 %v4599, 7
    %v4601 = vsub.s32 %v2593, %v4600
    %v4602 = vrot.slane %v1730, %v4601
    %v4603 = vlaneseq
    %v4604 = vshrl.u32 %v4603, 7
    %v4605 = vsub.s32 %v2598, %v4604
    %v4606 = vrot.slane %v1733, %v4605
    %v4607 = vsel %vm2603, %v4606, %v4602
    %v4608 = vlaneseq
    %v4609 = vshrl.u32 %v4608, 7
    %v4610 = vsub.s32 %v2605, %v4609
    %v4611 = vrot.slane %v1736, %v4610
    %v4612 = vsel %vm2610, %v4611, %v4607
    %v4613 = vlaneseq
    %v4614 = vshrl.u32 %v4613, 7
    %v4615 = vsub.s32 %v2612, %v4614
    %v4616 = vrot.slane %v1739, %v4615
    %v4617 = vsel %vm2617, %v4616, %v4612
    %v4618 = vlaneseq
    %v4619 = vshrl.u32 %v4618, 7
    %v4620 = vsub.s32 %v2619, %v4619
    %v4621 = vrot.slane %v1742, %v4620
    %v4622 = vsel %vm2624, %v4621, %v4617
    %v4623 = vlaneseq
    %v4624 = vshrl.u32 %v4623, 7
    %v4625 = vsub.s32 %v2626, %v4624
    %v4626 = vrot.slane %v1745, %v4625
    %v4627 = vsel %vm2631, %v4626, %v4622
    %v4628 = vlaneseq
    %v4629 = vshrl.u32 %v4628, 7
    %v4630 = vsub.s32 %v2633, %v4629
    %v4631 = vrot.slane %v1748, %v4630
    %v4632 = vsel %vm2638, %v4631, %v4627
    %v4633 = vlaneseq
    %v4634 = vshrl.u32 %v4633, 7
    %v4635 = vsub.s32 %v2640, %v4634
    %v4636 = vrot.slane %v1751, %v4635
    %v4637 = vsel %vm2645, %v4636, %v4632
    %v4638 = vlaneseq
    %v4639 = vshrl.u32 %v4638, 7
    %v4640 = vsub.s32 %v2647, %v4639
    %v4641 = vrot.slane %v1754, %v4640
    %v4642 = vsel %vm2652, %v4641, %v4637
    %v4643 = vlaneseq
    %v4644 = vshrl.u32 %v4643, 7
    %v4645 = vsub.s32 %v2654, %v4644
    %v4646 = vrot.slane %v1757, %v4645
    %v4647 = vsel %vm2659, %v4646, %v4642
    %v4648 = vlaneseq
    %v4649 = vshrl.u32 %v4648, 7
    %v4650 = vsub.s32 %v2661, %v4649
    %v4651 = vrot.slane %v1760, %v4650
    %v4652 = vsel %vm2666, %v4651, %v4647
    %v4653 = vlaneseq
    %v4654 = vshrl.u32 %v4653, 7
    %v4655 = vsub.s32 %v2668, %v4654
    %v4656 = vrot.slane %v1763, %v4655
    %v4657 = vsel %vm2673, %v4656, %v4652
    %v4658 = vlaneseq
    %v4659 = vshrl.u32 %v4658, 7
    %v4660 = vsub.s32 %v2675, %v4659
    %v4661 = vrot.slane %v1766, %v4660
    %v4662 = vsel %vm2680, %v4661, %v4657
    %v4663 = vlaneseq
    %v4664 = vshrl.u32 %v4663, 7
    %v4665 = vsub.s32 %v2682, %v4664
    %v4666 = vrot.slane %v1769, %v4665
    %v4667 = vsel %vm2687, %v4666, %v4662
    %v4668 = vlaneseq
    %v4669 = vshrl.u32 %v4668, 7
    %v4670 = vsub.s32 %v2689, %v4669
    %v4671 = vrot.slane %v1772, %v4670
    %v4672 = vsel %vm2694, %v4671, %v4667
    %v4673 = vlaneseq
    %v4674 = vshrl.u32 %v4673, 7
    %v4675 = vsub.s32 %v2696, %v4674
    %v4676 = vrot.slane %v1775, %v4675
    %v4677 = vsel %vm2701, %v4676, %v4672
    %v4678 = vlaneseq
    %v4679 = vshrl.u32 %v4678, 7
    %v4680 = vsub.s32 %v2593, %v4679
    %v4681 = vrot.slane %v1778, %v4680
    %v4682 = vlaneseq
    %v4683 = vshrl.u32 %v4682, 7
    %v4684 = vsub.s32 %v2598, %v4683
    %v4685 = vrot.slane %v1781, %v4684
    %v4686 = vsel %vm2603, %v4685, %v4681
    %v4687 = vlaneseq
    %v4688 = vshrl.u32 %v4687, 7
    %v4689 = vsub.s32 %v2605, %v4688
    %v4690 = vrot.slane %v1784, %v4689
    %v4691 = vsel %vm2610, %v4690, %v4686
    %v4692 = vlaneseq
    %v4693 = vshrl.u32 %v4692, 7
    %v4694 = vsub.s32 %v2612, %v4693
    %v4695 = vrot.slane %v1787, %v4694
    %v4696 = vsel %vm2617, %v4695, %v4691
    %v4697 = vlaneseq
    %v4698 = vshrl.u32 %v4697, 7
    %v4699 = vsub.s32 %v2619, %v4698
    %v4700 = vrot.slane %v1790, %v4699
    %v4701 = vsel %vm2624, %v4700, %v4696
    %v4702 = vlaneseq
    %v4703 = vshrl.u32 %v4702, 7
    %v4704 = vsub.s32 %v2626, %v4703
    %v4705 = vrot.slane %v1793, %v4704
    %v4706 = vsel %vm2631, %v4705, %v4701
    %v4707 = vlaneseq
    %v4708 = vshrl.u32 %v4707, 7
    %v4709 = vsub.s32 %v2633, %v4708
    %v4710 = vrot.slane %v1796, %v4709
    %v4711 = vsel %vm2638, %v4710, %v4706
    %v4712 = vlaneseq
    %v4713 = vshrl.u32 %v4712, 7
    %v4714 = vsub.s32 %v2640, %v4713
    %v4715 = vrot.slane %v1799, %v4714
    %v4716 = vsel %vm2645, %v4715, %v4711
    %v4717 = vlaneseq
    %v4718 = vshrl.u32 %v4717, 7
    %v4719 = vsub.s32 %v2647, %v4718
    %v4720 = vrot.slane %v1802, %v4719
    %v4721 = vsel %vm2652, %v4720, %v4716
    %v4722 = vlaneseq
    %v4723 = vshrl.u32 %v4722, 7
    %v4724 = vsub.s32 %v2654, %v4723
    %v4725 = vrot.slane %v1805, %v4724
    %v4726 = vsel %vm2659, %v4725, %v4721
    %v4727 = vlaneseq
    %v4728 = vshrl.u32 %v4727, 7
    %v4729 = vsub.s32 %v2661, %v4728
    %v4730 = vrot.slane %v1808, %v4729
    %v4731 = vsel %vm2666, %v4730, %v4726
    %v4732 = vlaneseq
    %v4733 = vshrl.u32 %v4732, 7
    %v4734 = vsub.s32 %v2668, %v4733
    %v4735 = vrot.slane %v1811, %v4734
    %v4736 = vsel %vm2673, %v4735, %v4731
    %v4737 = vlaneseq
    %v4738 = vshrl.u32 %v4737, 7
    %v4739 = vsub.s32 %v2675, %v4738
    %v4740 = vrot.slane %v1814, %v4739
    %v4741 = vsel %vm2680, %v4740, %v4736
    %v4742 = vlaneseq
    %v4743 = vshrl.u32 %v4742, 7
    %v4744 = vsub.s32 %v2682, %v4743
    %v4745 = vrot.slane %v1817, %v4744
    %v4746 = vsel %vm2687, %v4745, %v4741
    %v4747 = vlaneseq
    %v4748 = vshrl.u32 %v4747, 7
    %v4749 = vsub.s32 %v2689, %v4748
    %v4750 = vrot.slane %v1820, %v4749
    %v4751 = vsel %vm2694, %v4750, %v4746
    %v4752 = vlaneseq
    %v4753 = vshrl.u32 %v4752, 7
    %v4754 = vsub.s32 %v2696, %v4753
    %v4755 = vrot.slane %v1823, %v4754
    %v4756 = vsel %vm2701, %v4755, %v4751
    %v4757 = vlaneseq
    %v4758 = vshrl.u32 %v4757, 7
    %v4759 = vsub.s32 %v2593, %v4758
    %v4760 = vrot.slane %v1826, %v4759
    %v4761 = vlaneseq
    %v4762 = vshrl.u32 %v4761, 7
    %v4763 = vsub.s32 %v2598, %v4762
    %v4764 = vrot.slane %v1829, %v4763
    %v4765 = vsel %vm2603, %v4764, %v4760
    %v4766 = vlaneseq
    %v4767 = vshrl.u32 %v4766, 7
    %v4768 = vsub.s32 %v2605, %v4767
    %v4769 = vrot.slane %v1832, %v4768
    %v4770 = vsel %vm2610, %v4769, %v4765
    %v4771 = vlaneseq
    %v4772 = vshrl.u32 %v4771, 7
    %v4773 = vsub.s32 %v2612, %v4772
    %v4774 = vrot.slane %v1835, %v4773
    %v4775 = vsel %vm2617, %v4774, %v4770
    %v4776 = vlaneseq
    %v4777 = vshrl.u32 %v4776, 7
    %v4778 = vsub.s32 %v2619, %v4777
    %v4779 = vrot.slane %v1838, %v4778
    %v4780 = vsel %vm2624, %v4779, %v4775
    %v4781 = vlaneseq
    %v4782 = vshrl.u32 %v4781, 7
    %v4783 = vsub.s32 %v2626, %v4782
    %v4784 = vrot.slane %v1841, %v4783
    %v4785 = vsel %vm2631, %v4784, %v4780
    %v4786 = vlaneseq
    %v4787 = vshrl.u32 %v4786, 7
    %v4788 = vsub.s32 %v2633, %v4787
    %v4789 = vrot.slane %v1844, %v4788
    %v4790 = vsel %vm2638, %v4789, %v4785
    %v4791 = vlaneseq
    %v4792 = vshrl.u32 %v4791, 7
    %v4793 = vsub.s32 %v2640, %v4792
    %v4794 = vrot.slane %v1847, %v4793
    %v4795 = vsel %vm2645, %v4794, %v4790
    %v4796 = vlaneseq
    %v4797 = vshrl.u32 %v4796, 7
    %v4798 = vsub.s32 %v2647, %v4797
    %v4799 = vrot.slane %v1850, %v4798
    %v4800 = vsel %vm2652, %v4799, %v4795
    %v4801 = vlaneseq
    %v4802 = vshrl.u32 %v4801, 7
    %v4803 = vsub.s32 %v2654, %v4802
    %v4804 = vrot.slane %v1853, %v4803
    %v4805 = vsel %vm2659, %v4804, %v4800
    %v4806 = vlaneseq
    %v4807 = vshrl.u32 %v4806, 7
    %v4808 = vsub.s32 %v2661, %v4807
    %v4809 = vrot.slane %v1856, %v4808
    %v4810 = vsel %vm2666, %v4809, %v4805
    %v4811 = vlaneseq
    %v4812 = vshrl.u32 %v4811, 7
    %v4813 = vsub.s32 %v2668, %v4812
    %v4814 = vrot.slane %v1859, %v4813
    %v4815 = vsel %vm2673, %v4814, %v4810
    %v4816 = vlaneseq
    %v4817 = vshrl.u32 %v4816, 7
    %v4818 = vsub.s32 %v2675, %v4817
    %v4819 = vrot.slane %v1862, %v4818
    %v4820 = vsel %vm2680, %v4819, %v4815
    %v4821 = vlaneseq
    %v4822 = vshrl.u32 %v4821, 7
    %v4823 = vsub.s32 %v2682, %v4822
    %v4824 = vrot.slane %v1865, %v4823
    %v4825 = vsel %vm2687, %v4824, %v4820
    %v4826 = vlaneseq
    %v4827 = vshrl.u32 %v4826, 7
    %v4828 = vsub.s32 %v2689, %v4827
    %v4829 = vrot.slane %v1868, %v4828
    %v4830 = vsel %vm2694, %v4829, %v4825
    %v4831 = vlaneseq
    %v4832 = vshrl.u32 %v4831, 7
    %v4833 = vsub.s32 %v2696, %v4832
    %v4834 = vrot.slane %v1871, %v4833
    %v4835 = vsel %vm2701, %v4834, %v4830
    %v4836 = vlaneseq
    %v4837 = vshrl.u32 %v4836, 7
    %v4838 = vsub.s32 %v2593, %v4837
    %v4839 = vrot.slane %v1874, %v4838
    %v4840 = vlaneseq
    %v4841 = vshrl.u32 %v4840, 7
    %v4842 = vsub.s32 %v2598, %v4841
    %v4843 = vrot.slane %v1877, %v4842
    %v4844 = vsel %vm2603, %v4843, %v4839
    %v4845 = vlaneseq
    %v4846 = vshrl.u32 %v4845, 7
    %v4847 = vsub.s32 %v2605, %v4846
    %v4848 = vrot.slane %v1880, %v4847
    %v4849 = vsel %vm2610, %v4848, %v4844
    %v4850 = vlaneseq
    %v4851 = vshrl.u32 %v4850, 7
    %v4852 = vsub.s32 %v2612, %v4851
    %v4853 = vrot.slane %v1883, %v4852
    %v4854 = vsel %vm2617, %v4853, %v4849
    %v4855 = vlaneseq
    %v4856 = vshrl.u32 %v4855, 7
    %v4857 = vsub.s32 %v2619, %v4856
    %v4858 = vrot.slane %v1886, %v4857
    %v4859 = vsel %vm2624, %v4858, %v4854
    %v4860 = vlaneseq
    %v4861 = vshrl.u32 %v4860, 7
    %v4862 = vsub.s32 %v2626, %v4861
    %v4863 = vrot.slane %v1889, %v4862
    %v4864 = vsel %vm2631, %v4863, %v4859
    %v4865 = vlaneseq
    %v4866 = vshrl.u32 %v4865, 7
    %v4867 = vsub.s32 %v2633, %v4866
    %v4868 = vrot.slane %v1892, %v4867
    %v4869 = vsel %vm2638, %v4868, %v4864
    %v4870 = vlaneseq
    %v4871 = vshrl.u32 %v4870, 7
    %v4872 = vsub.s32 %v2640, %v4871
    %v4873 = vrot.slane %v1895, %v4872
    %v4874 = vsel %vm2645, %v4873, %v4869
    %v4875 = vlaneseq
    %v4876 = vshrl.u32 %v4875, 7
    %v4877 = vsub.s32 %v2647, %v4876
    %v4878 = vrot.slane %v1898, %v4877
    %v4879 = vsel %vm2652, %v4878, %v4874
    %v4880 = vlaneseq
    %v4881 = vshrl.u32 %v4880, 7
    %v4882 = vsub.s32 %v2654, %v4881
    %v4883 = vrot.slane %v1901, %v4882
    %v4884 = vsel %vm2659, %v4883, %v4879
    %v4885 = vlaneseq
    %v4886 = vshrl.u32 %v4885, 7
    %v4887 = vsub.s32 %v2661, %v4886
    %v4888 = vrot.slane %v1904, %v4887
    %v4889 = vsel %vm2666, %v4888, %v4884
    %v4890 = vlaneseq
    %v4891 = vshrl.u32 %v4890, 7
    %v4892 = vsub.s32 %v2668, %v4891
    %v4893 = vrot.slane %v1907, %v4892
    %v4894 = vsel %vm2673, %v4893, %v4889
    %v4895 = vlaneseq
    %v4896 = vshrl.u32 %v4895, 7
    %v4897 = vsub.s32 %v2675, %v4896
    %v4898 = vrot.slane %v1910, %v4897
    %v4899 = vsel %vm2680, %v4898, %v4894
    %v4900 = vlaneseq
    %v4901 = vshrl.u32 %v4900, 7
    %v4902 = vsub.s32 %v2682, %v4901
    %v4903 = vrot.slane %v1913, %v4902
    %v4904 = vsel %vm2687, %v4903, %v4899
    %v4905 = vlaneseq
    %v4906 = vshrl.u32 %v4905, 7
    %v4907 = vsub.s32 %v2689, %v4906
    %v4908 = vrot.slane %v1916, %v4907
    %v4909 = vsel %vm2694, %v4908, %v4904
    %v4910 = vlaneseq
    %v4911 = vshrl.u32 %v4910, 7
    %v4912 = vsub.s32 %v2696, %v4911
    %v4913 = vrot.slane %v1919, %v4912
    %v4914 = vsel %vm2701, %v4913, %v4909
    %v4915 = vlaneseq
    %v4916 = vshrl.u32 %v4915, 7
    %v4917 = vsub.s32 %v2593, %v4916
    %v4918 = vrot.slane %v1922, %v4917
    %v4919 = vlaneseq
    %v4920 = vshrl.u32 %v4919, 7
    %v4921 = vsub.s32 %v2598, %v4920
    %v4922 = vrot.slane %v1925, %v4921
    %v4923 = vsel %vm2603, %v4922, %v4918
    %v4924 = vlaneseq
    %v4925 = vshrl.u32 %v4924, 7
    %v4926 = vsub.s32 %v2605, %v4925
    %v4927 = vrot.slane %v1928, %v4926
    %v4928 = vsel %vm2610, %v4927, %v4923
    %v4929 = vlaneseq
    %v4930 = vshrl.u32 %v4929, 7
    %v4931 = vsub.s32 %v2612, %v4930
    %v4932 = vrot.slane %v1931, %v4931
    %v4933 = vsel %vm2617, %v4932, %v4928
    %v4934 = vlaneseq
    %v4935 = vshrl.u32 %v4934, 7
    %v4936 = vsub.s32 %v2619, %v4935
    %v4937 = vrot.slane %v1934, %v4936
    %v4938 = vsel %vm2624, %v4937, %v4933
    %v4939 = vlaneseq
    %v4940 = vshrl.u32 %v4939, 7
    %v4941 = vsub.s32 %v2626, %v4940
    %v4942 = vrot.slane %v1937, %v4941
    %v4943 = vsel %vm2631, %v4942, %v4938
    %v4944 = vlaneseq
    %v4945 = vshrl.u32 %v4944, 7
    %v4946 = vsub.s32 %v2633, %v4945
    %v4947 = vrot.slane %v1940, %v4946
    %v4948 = vsel %vm2638, %v4947, %v4943
    %v4949 = vlaneseq
    %v4950 = vshrl.u32 %v4949, 7
    %v4951 = vsub.s32 %v2640, %v4950
    %v4952 = vrot.slane %v1943, %v4951
    %v4953 = vsel %vm2645, %v4952, %v4948
    %v4954 = vlaneseq
    %v4955 = vshrl.u32 %v4954, 7
    %v4956 = vsub.s32 %v2647, %v4955
    %v4957 = vrot.slane %v1946, %v4956
    %v4958 = vsel %vm2652, %v4957, %v4953
    %v4959 = vlaneseq
    %v4960 = vshrl.u32 %v4959, 7
    %v4961 = vsub.s32 %v2654, %v4960
    %v4962 = vrot.slane %v1949, %v4961
    %v4963 = vsel %vm2659, %v4962, %v4958
    %v4964 = vlaneseq
    %v4965 = vshrl.u32 %v4964, 7
    %v4966 = vsub.s32 %v2661, %v4965
    %v4967 = vrot.slane %v1952, %v4966
    %v4968 = vsel %vm2666, %v4967, %v4963
    %v4969 = vlaneseq
    %v4970 = vshrl.u32 %v4969, 7
    %v4971 = vsub.s32 %v2668, %v4970
    %v4972 = vrot.slane %v1955, %v4971
    %v4973 = vsel %vm2673, %v4972, %v4968
    %v4974 = vlaneseq
    %v4975 = vshrl.u32 %v4974, 7
    %v4976 = vsub.s32 %v2675, %v4975
    %v4977 = vrot.slane %v1958, %v4976
    %v4978 = vsel %vm2680, %v4977, %v4973
    %v4979 = vlaneseq
    %v4980 = vshrl.u32 %v4979, 7
    %v4981 = vsub.s32 %v2682, %v4980
    %v4982 = vrot.slane %v1961, %v4981
    %v4983 = vsel %vm2687, %v4982, %v4978
    %v4984 = vlaneseq
    %v4985 = vshrl.u32 %v4984, 7
    %v4986 = vsub.s32 %v2689, %v4985
    %v4987 = vrot.slane %v1964, %v4986
    %v4988 = vsel %vm2694, %v4987, %v4983
    %v4989 = vlaneseq
    %v4990 = vshrl.u32 %v4989, 7
    %v4991 = vsub.s32 %v2696, %v4990
    %v4992 = vrot.slane %v1967, %v4991
    %v4993 = vsel %vm2701, %v4992, %v4988
    %v4994 = vlaneseq
    %v4995 = vshrl.u32 %v4994, 7
    %v4996 = vsub.s32 %v2593, %v4995
    %v4997 = vrot.slane %v1970, %v4996
    %v4998 = vlaneseq
    %v4999 = vshrl.u32 %v4998, 7
    %v5000 = vsub.s32 %v2598, %v4999
    %v5001 = vrot.slane %v1973, %v5000
    %v5002 = vsel %vm2603, %v5001, %v4997
    %v5003 = vlaneseq
    %v5004 = vshrl.u32 %v5003, 7
    %v5005 = vsub.s32 %v2605, %v5004
    %v5006 = vrot.slane %v1976, %v5005
    %v5007 = vsel %vm2610, %v5006, %v5002
    %v5008 = vlaneseq
    %v5009 = vshrl.u32 %v5008, 7
    %v5010 = vsub.s32 %v2612, %v5009
    %v5011 = vrot.slane %v1979, %v5010
    %v5012 = vsel %vm2617, %v5011, %v5007
    %v5013 = vlaneseq
    %v5014 = vshrl.u32 %v5013, 7
    %v5015 = vsub.s32 %v2619, %v5014
    %v5016 = vrot.slane %v1982, %v5015
    %v5017 = vsel %vm2624, %v5016, %v5012
    %v5018 = vlaneseq
    %v5019 = vshrl.u32 %v5018, 7
    %v5020 = vsub.s32 %v2626, %v5019
    %v5021 = vrot.slane %v1985, %v5020
    %v5022 = vsel %vm2631, %v5021, %v5017
    %v5023 = vlaneseq
    %v5024 = vshrl.u32 %v5023, 7
    %v5025 = vsub.s32 %v2633, %v5024
    %v5026 = vrot.slane %v1988, %v5025
    %v5027 = vsel %vm2638, %v5026, %v5022
    %v5028 = vlaneseq
    %v5029 = vshrl.u32 %v5028, 7
    %v5030 = vsub.s32 %v2640, %v5029
    %v5031 = vrot.slane %v1991, %v5030
    %v5032 = vsel %vm2645, %v5031, %v5027
    %v5033 = vlaneseq
    %v5034 = vshrl.u32 %v5033, 7
    %v5035 = vsub.s32 %v2647, %v5034
    %v5036 = vrot.slane %v1994, %v5035
    %v5037 = vsel %vm2652, %v5036, %v5032
    %v5038 = vlaneseq
    %v5039 = vshrl.u32 %v5038, 7
    %v5040 = vsub.s32 %v2654, %v5039
    %v5041 = vrot.slane %v1997, %v5040
    %v5042 = vsel %vm2659, %v5041, %v5037
    %v5043 = vlaneseq
    %v5044 = vshrl.u32 %v5043, 7
    %v5045 = vsub.s32 %v2661, %v5044
    %v5046 = vrot.slane %v2000, %v5045
    %v5047 = vsel %vm2666, %v5046, %v5042
    %v5048 = vlaneseq
    %v5049 = vshrl.u32 %v5048, 7
    %v5050 = vsub.s32 %v2668, %v5049
    %v5051 = vrot.slane %v2003, %v5050
    %v5052 = vsel %vm2673, %v5051, %v5047
    %v5053 = vlaneseq
    %v5054 = vshrl.u32 %v5053, 7
    %v5055 = vsub.s32 %v2675, %v5054
    %v5056 = vrot.slane %v2006, %v5055
    %v5057 = vsel %vm2680, %v5056, %v5052
    %v5058 = vlaneseq
    %v5059 = vshrl.u32 %v5058, 7
    %v5060 = vsub.s32 %v2682, %v5059
    %v5061 = vrot.slane %v2009, %v5060
    %v5062 = vsel %vm2687, %v5061, %v5057
    %v5063 = vlaneseq
    %v5064 = vshrl.u32 %v5063, 7
    %v5065 = vsub.s32 %v2689, %v5064
    %v5066 = vrot.slane %v2012, %v5065
    %v5067 = vsel %vm2694, %v5066, %v5062
    %v5068 = vlaneseq
    %v5069 = vshrl.u32 %v5068, 7
    %v5070 = vsub.s32 %v2696, %v5069
    %v5071 = vrot.slane %v2015, %v5070
    %v5072 = vsel %vm2701, %v5071, %v5067
    %v5073 = vlaneseq
    %v5074 = vshrl.u32 %v5073, 7
    %v5075 = vsub.s32 %v2593, %v5074
    %v5076 = vrot.slane %v2018, %v5075
    %v5077 = vlaneseq
    %v5078 = vshrl.u32 %v5077, 7
    %v5079 = vsub.s32 %v2598, %v5078
    %v5080 = vrot.slane %v2021, %v5079
    %v5081 = vsel %vm2603, %v5080, %v5076
    %v5082 = vlaneseq
    %v5083 = vshrl.u32 %v5082, 7
    %v5084 = vsub.s32 %v2605, %v5083
    %v5085 = vrot.slane %v2024, %v5084
    %v5086 = vsel %vm2610, %v5085, %v5081
    %v5087 = vlaneseq
    %v5088 = vshrl.u32 %v5087, 7
    %v5089 = vsub.s32 %v2612, %v5088
    %v5090 = vrot.slane %v2027, %v5089
    %v5091 = vsel %vm2617, %v5090, %v5086
    %v5092 = vlaneseq
    %v5093 = vshrl.u32 %v5092, 7
    %v5094 = vsub.s32 %v2619, %v5093
    %v5095 = vrot.slane %v2030, %v5094
    %v5096 = vsel %vm2624, %v5095, %v5091
    %v5097 = vlaneseq
    %v5098 = vshrl.u32 %v5097, 7
    %v5099 = vsub.s32 %v2626, %v5098
    %v5100 = vrot.slane %v2033, %v5099
    %v5101 = vsel %vm2631, %v5100, %v5096
    %v5102 = vlaneseq
    %v5103 = vshrl.u32 %v5102, 7
    %v5104 = vsub.s32 %v2633, %v5103
    %v5105 = vrot.slane %v2036, %v5104
    %v5106 = vsel %vm2638, %v5105, %v5101
    %v5107 = vlaneseq
    %v5108 = vshrl.u32 %v5107, 7
    %v5109 = vsub.s32 %v2640, %v5108
    %v5110 = vrot.slane %v2039, %v5109
    %v5111 = vsel %vm2645, %v5110, %v5106
    %v5112 = vlaneseq
    %v5113 = vshrl.u32 %v5112, 7
    %v5114 = vsub.s32 %v2647, %v5113
    %v5115 = vrot.slane %v2042, %v5114
    %v5116 = vsel %vm2652, %v5115, %v5111
    %v5117 = vlaneseq
    %v5118 = vshrl.u32 %v5117, 7
    %v5119 = vsub.s32 %v2654, %v5118
    %v5120 = vrot.slane %v2045, %v5119
    %v5121 = vsel %vm2659, %v5120, %v5116
    %v5122 = vlaneseq
    %v5123 = vshrl.u32 %v5122, 7
    %v5124 = vsub.s32 %v2661, %v5123
    %v5125 = vrot.slane %v2048, %v5124
    %v5126 = vsel %vm2666, %v5125, %v5121
    %v5127 = vlaneseq
    %v5128 = vshrl.u32 %v5127, 7
    %v5129 = vsub.s32 %v2668, %v5128
    %v5130 = vrot.slane %v2051, %v5129
    %v5131 = vsel %vm2673, %v5130, %v5126
    %v5132 = vlaneseq
    %v5133 = vshrl.u32 %v5132, 7
    %v5134 = vsub.s32 %v2675, %v5133
    %v5135 = vrot.slane %v2054, %v5134
    %v5136 = vsel %vm2680, %v5135, %v5131
    %v5137 = vlaneseq
    %v5138 = vshrl.u32 %v5137, 7
    %v5139 = vsub.s32 %v2682, %v5138
    %v5140 = vrot.slane %v2057, %v5139
    %v5141 = vsel %vm2687, %v5140, %v5136
    %v5142 = vlaneseq
    %v5143 = vshrl.u32 %v5142, 7
    %v5144 = vsub.s32 %v2689, %v5143
    %v5145 = vrot.slane %v2060, %v5144
    %v5146 = vsel %vm2694, %v5145, %v5141
    %v5147 = vlaneseq
    %v5148 = vshrl.u32 %v5147, 7
    %v5149 = vsub.s32 %v2696, %v5148
    %v5150 = vrot.slane %v2063, %v5149
    %v5151 = vsel %vm2701, %v5150, %v5146
    %vm5152 = vcmask 1041409
    %v5153 = vsel %vm5152, %v3966, %v2702
    %v5154 = vsel %vm5152, %v4045, %v2781
    %v5155 = vsel %vm5152, %v4124, %v2860
    %v5156 = vsel %vm5152, %v4203, %v2939
    %v5157 = vsel %vm5152, %v4282, %v3018
    %v5158 = vsel %vm5152, %v4361, %v3097
    %v5159 = vsel %vm5152, %v4440, %v3176
    %v5160 = vsel %vm5152, %v4519, %v3255
    %v5161 = vsel %vm5152, %v4598, %v3334
    %v5162 = vsel %vm5152, %v4677, %v3413
    %v5163 = vsel %vm5152, %v4756, %v3492
    %v5164 = vsel %vm5152, %v4835, %v3571
    %v5165 = vsel %vm5152, %v4914, %v3650
    %v5166 = vsel %vm5152, %v4993, %v3729
    %v5167 = vsel %vm5152, %v5072, %v3808
    %v5168 = vsel %vm5152, %v5151, %v3887
    %5185 = vmatprep.subr.mxu0 %v2065
    %5186 = vmatpush1.xpose.msra.mxu0 %v2064
    %5187 = vmatprep.subr.mxu0 0.0
    %5188 = vmatpush1.xpose.msra.mxu0 0.0
    %5189 = vmatprep.subr.mxu0 0.0
    %5190 = vmatpush1.xpose.msra.mxu0 0.0
    %5191 = vmatprep.subr.mxu0 0.0
    %5192 = vmatpush1.xpose.msra.mxu0 0.0
    %5193 = vmatprep.subr.mxu0 0.0
    %5194 = vmatpush1.xpose.msra.mxu0 0.0
    %5195 = vmatprep.subr.mxu0 0.0
    %5196 = vmatpush1.xpose.msra.mxu0 0.0
    %5197 = vmatprep.subr.mxu0 0.0
    %5198 = vmatpush1.xpose.msra.mxu0 0.0
    %5199 = vmatprep.subr.mxu0 0.0
    %5200 = vmatpush1.xpose.msra.mxu0 0.0
    %5201 = vmatprep.subr.mxu0 0.0
    %5202 = vmatpush1.xpose.msra.mxu0 0.0
    %5203 = vmatprep.subr.mxu0 0.0
    %5204 = vmatpush1.xpose.msra.mxu0 0.0
    %5205 = vmatprep.subr.mxu0 0.0
    %5206 = vmatpush1.xpose.msra.mxu0 0.0
    %5207 = vmatprep.subr.mxu0 0.0
    %5208 = vmatpush1.xpose.msra.mxu0 0.0
    %5209 = vmatprep.subr.mxu0 0.0
    %5210 = vmatpush1.xpose.msra.mxu0 0.0
    %5211 = vmatprep.subr.mxu0 0.0
    %5212 = vmatpush1.xpose.msra.mxu0 0.0
    %5213 = vmatprep.subr.mxu0 0.0
    %5214 = vmatpush1.xpose.msra.mxu0 0.0
    %5215 = vmatprep.subr.mxu0 0.0
    %5216 = vmatpush1.xpose.msra.mxu0 0.0
    %5217 = vmatprep.subr.mxu0 0.0
    %5218 = vmatpush1.xpose.msra.mxu0 0.0
    %5219 = vmatprep.subr.mxu0 0.0
    %5220 = vmatpush1.xpose.msra.mxu0 0.0
    %5221 = vmatprep.subr.mxu0 0.0
    %5222 = vmatpush1.xpose.msra.mxu0 0.0
    %5223 = vmatprep.subr.mxu0 0.0
    %5224 = vmatpush1.xpose.msra.mxu0 0.0
    %5225 = vmatprep.subr.mxu0 0.0
    %5226 = vmatpush1.xpose.msra.mxu0 0.0
    %5227 = vmatprep.subr.mxu0 0.0
    %5228 = vmatpush1.xpose.msra.mxu0 0.0
    %5229 = vmatprep.subr.mxu0 0.0
    %5230 = vmatpush1.xpose.msra.mxu0 0.0
    %5231 = vmatprep.subr.mxu0 0.0
    %5232 = vmatpush1.xpose.msra.mxu0 0.0
    %5233 = vmatprep.subr.mxu0 0.0
    %5234 = vmatpush1.xpose.msra.mxu0 0.0
    %5235 = vmatprep.subr.mxu0 0.0
    %5236 = vmatpush1.xpose.msra.mxu0 0.0
    %5237 = vmatprep.subr.mxu0 0.0
    %5238 = vmatpush1.xpose.msra.mxu0 0.0
    %5239 = vmatprep.subr.mxu0 0.0
    %5240 = vmatpush1.xpose.msra.mxu0 0.0
    %5241 = vmatprep.subr.mxu0 0.0
    %5242 = vmatpush1.xpose.msra.mxu0 0.0
    %5243 = vmatprep.subr.mxu0 0.0
    %5244 = vmatpush1.xpose.msra.mxu0 0.0
    %5245 = vmatprep.subr.mxu0 0.0
    %5246 = vmatpush1.xpose.msra.mxu0 0.0
    %5247 = vmatprep.subr.mxu0 0.0
    %5248 = vmatpush1.xpose.msra.mxu0 0.0
    %5249 = vmatprep.mubr.f32.mxu0 %v5154
    %5250 = vmatmul.mubr.f32.gmra.mrb[0].mxu0 %v5153
    %v5251 = vpop.f32.mrb[0].mxu0
    %v5252 = vadd.f32 0.0, %v5251
    %v5253 = vpop.f32.mrb[0].mxu0
    %5254 = vdwg.mxu0
    %5255 = vmatprep.subr.mxu0 %v2067
    %5256 = vmatpush1.xpose.msra.mxu0 %v2066
    %5257 = vmatprep.subr.mxu0 0.0
    %5258 = vmatpush1.xpose.msra.mxu0 0.0
    %5259 = vmatprep.subr.mxu0 0.0
    %5260 = vmatpush1.xpose.msra.mxu0 0.0
    %5261 = vmatprep.subr.mxu0 0.0
    %5262 = vmatpush1.xpose.msra.mxu0 0.0
    %5263 = vmatprep.subr.mxu0 0.0
    %5264 = vmatpush1.xpose.msra.mxu0 0.0
    %5265 = vmatprep.subr.mxu0 0.0
    %5266 = vmatpush1.xpose.msra.mxu0 0.0
    %5267 = vmatprep.subr.mxu0 0.0
    %5268 = vmatpush1.xpose.msra.mxu0 0.0
    %5269 = vmatprep.subr.mxu0 0.0
    %5270 = vmatpush1.xpose.msra.mxu0 0.0
    %5271 = vmatprep.subr.mxu0 0.0
    %5272 = vmatpush1.xpose.msra.mxu0 0.0
    %5273 = vmatprep.subr.mxu0 0.0
    %5274 = vmatpush1.xpose.msra.mxu0 0.0
    %5275 = vmatprep.subr.mxu0 0.0
    %5276 = vmatpush1.xpose.msra.mxu0 0.0
    %5277 = vmatprep.subr.mxu0 0.0
    %5278 = vmatpush1.xpose.msra.mxu0 0.0
    %5279 = vmatprep.subr.mxu0 0.0
    %5280 = vmatpush1.xpose.msra.mxu0 0.0
    %5281 = vmatprep.subr.mxu0 0.0
    %5282 = vmatpush1.xpose.msra.mxu0 0.0
    %5283 = vmatprep.subr.mxu0 0.0
    %5284 = vmatpush1.xpose.msra.mxu0 0.0
    %5285 = vmatprep.subr.mxu0 0.0
    %5286 = vmatpush1.xpose.msra.mxu0 0.0
    %5287 = vmatprep.subr.mxu0 0.0
    %5288 = vmatpush1.xpose.msra.mxu0 0.0
    %5289 = vmatprep.subr.mxu0 0.0
    %5290 = vmatpush1.xpose.msra.mxu0 0.0
    %5291 = vmatprep.subr.mxu0 0.0
    %5292 = vmatpush1.xpose.msra.mxu0 0.0
    %5293 = vmatprep.subr.mxu0 0.0
    %5294 = vmatpush1.xpose.msra.mxu0 0.0
    %5295 = vmatprep.subr.mxu0 0.0
    %5296 = vmatpush1.xpose.msra.mxu0 0.0
    %5297 = vmatprep.subr.mxu0 0.0
    %5298 = vmatpush1.xpose.msra.mxu0 0.0
    %5299 = vmatprep.subr.mxu0 0.0
    %5300 = vmatpush1.xpose.msra.mxu0 0.0
    %5301 = vmatprep.subr.mxu0 0.0
    %5302 = vmatpush1.xpose.msra.mxu0 0.0
    %5303 = vmatprep.subr.mxu0 0.0
    %5304 = vmatpush1.xpose.msra.mxu0 0.0
    %5305 = vmatprep.subr.mxu0 0.0
    %5306 = vmatpush1.xpose.msra.mxu0 0.0
    %5307 = vmatprep.subr.mxu0 0.0
    %5308 = vmatpush1.xpose.msra.mxu0 0.0
    %5309 = vmatprep.subr.mxu0 0.0
    %5310 = vmatpush1.xpose.msra.mxu0 0.0
    %5311 = vmatprep.subr.mxu0 0.0
    %5312 = vmatpush1.xpose.msra.mxu0 0.0
    %5313 = vmatprep.subr.mxu0 0.0
    %5314 = vmatpush1.xpose.msra.mxu0 0.0
    %5315 = vmatprep.subr.mxu0 0.0
    %5316 = vmatpush1.xpose.msra.mxu0 0.0
    %5317 = vmatprep.subr.mxu0 0.0
    %5318 = vmatpush1.xpose.msra.mxu0 0.0
    %5319 = vmatprep.mubr.f32.mxu0 %v5156
    %5320 = vmatmul.mubr.f32.gmra.mrb[0].mxu0 %v5155
    %v5321 = vpop.f32.mrb[0].mxu0
    %v5322 = vadd.f32 %v5252, %v5321
    %v5323 = vpop.f32.mrb[0].mxu0
    %5324 = vdwg.mxu0
    %5325 = vmatprep.subr.mxu0 %v2069
    %5326 = vmatpush1.xpose.msra.mxu0 %v2068
    %5327 = vmatprep.subr.mxu0 0.0
    %5328 = vmatpush1.xpose.msra.mxu0 0.0
    %5329 = vmatprep.subr.mxu0 0.0
    %5330 = vmatpush1.xpose.msra.mxu0 0.0
    %5331 = vmatprep.subr.mxu0 0.0
    %5332 = vmatpush1.xpose.msra.mxu0 0.0
    %5333 = vmatprep.subr.mxu0 0.0
    %5334 = vmatpush1.xpose.msra.mxu0 0.0
    %5335 = vmatprep.subr.mxu0 0.0
    %5336 = vmatpush1.xpose.msra.mxu0 0.0
    %5337 = vmatprep.subr.mxu0 0.0
    %5338 = vmatpush1.xpose.msra.mxu0 0.0
    %5339 = vmatprep.subr.mxu0 0.0
    %5340 = vmatpush1.xpose.msra.mxu0 0.0
    %5341 = vmatprep.subr.mxu0 0.0
    %5342 = vmatpush1.xpose.msra.mxu0 0.0
    %5343 = vmatprep.subr.mxu0 0.0
    %5344 = vmatpush1.xpose.msra.mxu0 0.0
    %5345 = vmatprep.subr.mxu0 0.0
    %5346 = vmatpush1.xpose.msra.mxu0 0.0
    %5347 = vmatprep.subr.mxu0 0.0
    %5348 = vmatpush1.xpose.msra.mxu0 0.0
    %5349 = vmatprep.subr.mxu0 0.0
    %5350 = vmatpush1.xpose.msra.mxu0 0.0
    %5351 = vmatprep.subr.mxu0 0.0
    %5352 = vmatpush1.xpose.msra.mxu0 0.0
    %5353 = vmatprep.subr.mxu0 0.0
    %5354 = vmatpush1.xpose.msra.mxu0 0.0
    %5355 = vmatprep.subr.mxu0 0.0
    %5356 = vmatpush1.xpose.msra.mxu0 0.0
    %5357 = vmatprep.subr.mxu0 0.0
    %5358 = vmatpush1.xpose.msra.mxu0 0.0
    %5359 = vmatprep.subr.mxu0 0.0
    %5360 = vmatpush1.xpose.msra.mxu0 0.0
    %5361 = vmatprep.subr.mxu0 0.0
    %5362 = vmatpush1.xpose.msra.mxu0 0.0
    %5363 = vmatprep.subr.mxu0 0.0
    %5364 = vmatpush1.xpose.msra.mxu0 0.0
    %5365 = vmatprep.subr.mxu0 0.0
    %5366 = vmatpush1.xpose.msra.mxu0 0.0
    %5367 = vmatprep.subr.mxu0 0.0
    %5368 = vmatpush1.xpose.msra.mxu0 0.0
    %5369 = vmatprep.subr.mxu0 0.0
    %5370 = vmatpush1.xpose.msra.mxu0 0.0
    %5371 = vmatprep.subr.mxu0 0.0
    %5372 = vmatpush1.xpose.msra.mxu0 0.0
    %5373 = vmatprep.subr.mxu0 0.0
    %5374 = vmatpush1.xpose.msra.mxu0 0.0
    %5375 = vmatprep.subr.mxu0 0.0
    %5376 = vmatpush1.xpose.msra.mxu0 0.0
    %5377 = vmatprep.subr.mxu0 0.0
    %5378 = vmatpush1.xpose.msra.mxu0 0.0
    %5379 = vmatprep.subr.mxu0 0.0
    %5380 = vmatpush1.xpose.msra.mxu0 0.0
    %5381 = vmatprep.subr.mxu0 0.0
    %5382 = vmatpush1.xpose.msra.mxu0 0.0
    %5383 = vmatprep.subr.mxu0 0.0
    %5384 = vmatpush1.xpose.msra.mxu0 0.0
    %5385 = vmatprep.subr.mxu0 0.0
    %5386 = vmatpush1.xpose.msra.mxu0 0.0
    %5387 = vmatprep.subr.mxu0 0.0
    %5388 = vmatpush1.xpose.msra.mxu0 0.0
    %5389 = vmatprep.mubr.f32.mxu0 %v5158
    %5390 = vmatmul.mubr.f32.gmra.mrb[0].mxu0 %v5157
    %v5391 = vpop.f32.mrb[0].mxu0
    %v5392 = vadd.f32 %v5322, %v5391
    %v5393 = vpop.f32.mrb[0].mxu0
    %5394 = vdwg.mxu0
    %5395 = vmatprep.subr.mxu0 %v2071
    %5396 = vmatpush1.xpose.msra.mxu0 %v2070
    %5397 = vmatprep.subr.mxu0 0.0
    %5398 = vmatpush1.xpose.msra.mxu0 0.0
    %5399 = vmatprep.subr.mxu0 0.0
    %5400 = vmatpush1.xpose.msra.mxu0 0.0
    %5401 = vmatprep.subr.mxu0 0.0
    %5402 = vmatpush1.xpose.msra.mxu0 0.0
    %5403 = vmatprep.subr.mxu0 0.0
    %5404 = vmatpush1.xpose.msra.mxu0 0.0
    %5405 = vmatprep.subr.mxu0 0.0
    %5406 = vmatpush1.xpose.msra.mxu0 0.0
    %5407 = vmatprep.subr.mxu0 0.0
    %5408 = vmatpush1.xpose.msra.mxu0 0.0
    %5409 = vmatprep.subr.mxu0 0.0
    %5410 = vmatpush1.xpose.msra.mxu0 0.0
    %5411 = vmatprep.subr.mxu0 0.0
    %5412 = vmatpush1.xpose.msra.mxu0 0.0
    %5413 = vmatprep.subr.mxu0 0.0
    %5414 = vmatpush1.xpose.msra.mxu0 0.0
    %5415 = vmatprep.subr.mxu0 0.0
    %5416 = vmatpush1.xpose.msra.mxu0 0.0
    %5417 = vmatprep.subr.mxu0 0.0
    %5418 = vmatpush1.xpose.msra.mxu0 0.0
    %5419 = vmatprep.subr.mxu0 0.0
    %5420 = vmatpush1.xpose.msra.mxu0 0.0
    %5421 = vmatprep.subr.mxu0 0.0
    %5422 = vmatpush1.xpose.msra.mxu0 0.0
    %5423 = vmatprep.subr.mxu0 0.0
    %5424 = vmatpush1.xpose.msra.mxu0 0.0
    %5425 = vmatprep.subr.mxu0 0.0
    %5426 = vmatpush1.xpose.msra.mxu0 0.0
    %5427 = vmatprep.subr.mxu0 0.0
    %5428 = vmatpush1.xpose.msra.mxu0 0.0
    %5429 = vmatprep.subr.mxu0 0.0
    %5430 = vmatpush1.xpose.msra.mxu0 0.0
    %5431 = vmatprep.subr.mxu0 0.0
    %5432 = vmatpush1.xpose.msra.mxu0 0.0
    %5433 = vmatprep.subr.mxu0 0.0
    %5434 = vmatpush1.xpose.msra.mxu0 0.0
    %5435 = vmatprep.subr.mxu0 0.0
    %5436 = vmatpush1.xpose.msra.mxu0 0.0
    %5437 = vmatprep.subr.mxu0 0.0
    %5438 = vmatpush1.xpose.msra.mxu0 0.0
    %5439 = vmatprep.subr.mxu0 0.0
    %5440 = vmatpush1.xpose.msra.mxu0 0.0
    %5441 = vmatprep.subr.mxu0 0.0
    %5442 = vmatpush1.xpose.msra.mxu0 0.0
    %5443 = vmatprep.subr.mxu0 0.0
    %5444 = vmatpush1.xpose.msra.mxu0 0.0
    %5445 = vmatprep.subr.mxu0 0.0
    %5446 = vmatpush1.xpose.msra.mxu0 0.0
    %5447 = vmatprep.subr.mxu0 0.0
    %5448 = vmatpush1.xpose.msra.mxu0 0.0
    %5449 = vmatprep.subr.mxu0 0.0
    %5450 = vmatpush1.xpose.msra.mxu0 0.0
    %5451 = vmatprep.subr.mxu0 0.0
    %5452 = vmatpush1.xpose.msra.mxu0 0.0
    %5453 = vmatprep.subr.mxu0 0.0
    %5454 = vmatpush1.xpose.msra.mxu0 0.0
    %5455 = vmatprep.subr.mxu0 0.0
    %5456 = vmatpush1.xpose.msra.mxu0 0.0
    %5457 = vmatprep.subr.mxu0 0.0
    %5458 = vmatpush1.xpose.msra.mxu0 0.0
    %5459 = vmatprep.mubr.f32.mxu0 %v5160
    %5460 = vmatmul.mubr.f32.gmra.mrb[0].mxu0 %v5159
    %v5461 = vpop.f32.mrb[0].mxu0
    %v5462 = vadd.f32 %v5392, %v5461
    %v5463 = vpop.f32.mrb[0].mxu0
    %5464 = vdwg.mxu0
    %5465 = vmatprep.subr.mxu0 %v2073
    %5466 = vmatpush1.xpose.msra.mxu0 %v2072
    %5467 = vmatprep.subr.mxu0 0.0
    %5468 = vmatpush1.xpose.msra.mxu0 0.0
    %5469 = vmatprep.subr.mxu0 0.0
    %5470 = vmatpush1.xpose.msra.mxu0 0.0
    %5471 = vmatprep.subr.mxu0 0.0
    %5472 = vmatpush1.xpose.msra.mxu0 0.0
    %5473 = vmatprep.subr.mxu0 0.0
    %5474 = vmatpush1.xpose.msra.mxu0 0.0
    %5475 = vmatprep.subr.mxu0 0.0
    %5476 = vmatpush1.xpose.msra.mxu0 0.0
    %5477 = vmatprep.subr.mxu0 0.0
    %5478 = vmatpush1.xpose.msra.mxu0 0.0
    %5479 = vmatprep.subr.mxu0 0.0
    %5480 = vmatpush1.xpose.msra.mxu0 0.0
    %5481 = vmatprep.subr.mxu0 0.0
    %5482 = vmatpush1.xpose.msra.mxu0 0.0
    %5483 = vmatprep.subr.mxu0 0.0
    %5484 = vmatpush1.xpose.msra.mxu0 0.0
    %5485 = vmatprep.subr.mxu0 0.0
    %5486 = vmatpush1.xpose.msra.mxu0 0.0
    %5487 = vmatprep.subr.mxu0 0.0
    %5488 = vmatpush1.xpose.msra.mxu0 0.0
    %5489 = vmatprep.subr.mxu0 0.0
    %5490 = vmatpush1.xpose.msra.mxu0 0.0
    %5491 = vmatprep.subr.mxu0 0.0
    %5492 = vmatpush1.xpose.msra.mxu0 0.0
    %5493 = vmatprep.subr.mxu0 0.0
    %5494 = vmatpush1.xpose.msra.mxu0 0.0
    %5495 = vmatprep.subr.mxu0 0.0
    %5496 = vmatpush1.xpose.msra.mxu0 0.0
    %5497 = vmatprep.subr.mxu0 0.0
    %5498 = vmatpush1.xpose.msra.mxu0 0.0
    %5499 = vmatprep.subr.mxu0 0.0
    %5500 = vmatpush1.xpose.msra.mxu0 0.0
    %5501 = vmatprep.subr.mxu0 0.0
    %5502 = vmatpush1.xpose.msra.mxu0 0.0
    %5503 = vmatprep.subr.mxu0 0.0
    %5504 = vmatpush1.xpose.msra.mxu0 0.0
    %5505 = vmatprep.subr.mxu0 0.0
    %5506 = vmatpush1.xpose.msra.mxu0 0.0
    %5507 = vmatprep.subr.mxu0 0.0
    %5508 = vmatpush1.xpose.msra.mxu0 0.0
    %5509 = vmatprep.subr.mxu0 0.0
    %5510 = vmatpush1.xpose.msra.mxu0 0.0
    %5511 = vmatprep.subr.mxu0 0.0
    %5512 = vmatpush1.xpose.msra.mxu0 0.0
    %5513 = vmatprep.subr.mxu0 0.0
    %5514 = vmatpush1.xpose.msra.mxu0 0.0
    %5515 = vmatprep.subr.mxu0 0.0
    %5516 = vmatpush1.xpose.msra.mxu0 0.0
    %5517 = vmatprep.subr.mxu0 0.0
    %5518 = vmatpush1.xpose.msra.mxu0 0.0
    %5519 = vmatprep.subr.mxu0 0.0
    %5520 = vmatpush1.xpose.msra.mxu0 0.0
    %5521 = vmatprep.subr.mxu0 0.0
    %5522 = vmatpush1.xpose.msra.mxu0 0.0
    %5523 = vmatprep.subr.mxu0 0.0
    %5524 = vmatpush1.xpose.msra.mxu0 0.0
    %5525 = vmatprep.subr.mxu0 0.0
    %5526 = vmatpush1.xpose.msra.mxu0 0.0
    %5527 = vmatprep.subr.mxu0 0.0
    %5528 = vmatpush1.xpose.msra.mxu0 0.0
    %5529 = vmatprep.mubr.f32.mxu0 %v5162
    %5530 = vmatmul.mubr.f32.gmra.mrb[0].mxu0 %v5161
    %v5531 = vpop.f32.mrb[0].mxu0
    %v5532 = vadd.f32 %v5462, %v5531
    %v5533 = vpop.f32.mrb[0].mxu0
    %5534 = vdwg.mxu0
    %5535 = vmatprep.subr.mxu0 %v2075
    %5536 = vmatpush1.xpose.msra.mxu0 %v2074
    %5537 = vmatprep.subr.mxu0 0.0
    %5538 = vmatpush1.xpose.msra.mxu0 0.0
    %5539 = vmatprep.subr.mxu0 0.0
    %5540 = vmatpush1.xpose.msra.mxu0 0.0
    %5541 = vmatprep.subr.mxu0 0.0
    %5542 = vmatpush1.xpose.msra.mxu0 0.0
    %5543 = vmatprep.subr.mxu0 0.0
    %5544 = vmatpush1.xpose.msra.mxu0 0.0
    %5545 = vmatprep.subr.mxu0 0.0
    %5546 = vmatpush1.xpose.msra.mxu0 0.0
    %5547 = vmatprep.subr.mxu0 0.0
    %5548 = vmatpush1.xpose.msra.mxu0 0.0
    %5549 = vmatprep.subr.mxu0 0.0
    %5550 = vmatpush1.xpose.msra.mxu0 0.0
    %5551 = vmatprep.subr.mxu0 0.0
    %5552 = vmatpush1.xpose.msra.mxu0 0.0
    %5553 = vmatprep.subr.mxu0 0.0
    %5554 = vmatpush1.xpose.msra.mxu0 0.0
    %5555 = vmatprep.subr.mxu0 0.0
    %5556 = vmatpush1.xpose.msra.mxu0 0.0
    %5557 = vmatprep.subr.mxu0 0.0
    %5558 = vmatpush1.xpose.msra.mxu0 0.0
    %5559 = vmatprep.subr.mxu0 0.0
    %5560 = vmatpush1.xpose.msra.mxu0 0.0
    %5561 = vmatprep.subr.mxu0 0.0
    %5562 = vmatpush1.xpose.msra.mxu0 0.0
    %5563 = vmatprep.subr.mxu0 0.0
    %5564 = vmatpush1.xpose.msra.mxu0 0.0
    %5565 = vmatprep.subr.mxu0 0.0
    %5566 = vmatpush1.xpose.msra.mxu0 0.0
    %5567 = vmatprep.subr.mxu0 0.0
    %5568 = vmatpush1.xpose.msra.mxu0 0.0
    %5569 = vmatprep.subr.mxu0 0.0
    %5570 = vmatpush1.xpose.msra.mxu0 0.0
    %5571 = vmatprep.subr.mxu0 0.0
    %5572 = vmatpush1.xpose.msra.mxu0 0.0
    %5573 = vmatprep.subr.mxu0 0.0
    %5574 = vmatpush1.xpose.msra.mxu0 0.0
    %5575 = vmatprep.subr.mxu0 0.0
    %5576 = vmatpush1.xpose.msra.mxu0 0.0
    %5577 = vmatprep.subr.mxu0 0.0
    %5578 = vmatpush1.xpose.msra.mxu0 0.0
    %5579 = vmatprep.subr.mxu0 0.0
    %5580 = vmatpush1.xpose.msra.mxu0 0.0
    %5581 = vmatprep.subr.mxu0 0.0
    %5582 = vmatpush1.xpose.msra.mxu0 0.0
    %5583 = vmatprep.subr.mxu0 0.0
    %5584 = vmatpush1.xpose.msra.mxu0 0.0
    %5585 = vmatprep.subr.mxu0 0.0
    %5586 = vmatpush1.xpose.msra.mxu0 0.0
    %5587 = vmatprep.subr.mxu0 0.0
    %5588 = vmatpush1.xpose.msra.mxu0 0.0
    %5589 = vmatprep.subr.mxu0 0.0
    %5590 = vmatpush1.xpose.msra.mxu0 0.0
    %5591 = vmatprep.subr.mxu0 0.0
    %5592 = vmatpush1.xpose.msra.mxu0 0.0
    %5593 = vmatprep.subr.mxu0 0.0
    %5594 = vmatpush1.xpose.msra.mxu0 0.0
    %5595 = vmatprep.subr.mxu0 0.0
    %5596 = vmatpush1.xpose.msra.mxu0 0.0
    %5597 = vmatprep.subr.mxu0 0.0
    %5598 = vmatpush1.xpose.msra.mxu0 0.0
    %5599 = vmatprep.mubr.f32.mxu0 %v5164
    %5600 = vmatmul.mubr.f32.gmra.mrb[0].mxu0 %v5163
    %v5601 = vpop.f32.mrb[0].mxu0
    %v5602 = vadd.f32 %v5532, %v5601
    %v5603 = vpop.f32.mrb[0].mxu0
    %5604 = vdwg.mxu0
    %5605 = vmatprep.subr.mxu0 %v2077
    %5606 = vmatpush1.xpose.msra.mxu0 %v2076
    %5607 = vmatprep.subr.mxu0 0.0
    %5608 = vmatpush1.xpose.msra.mxu0 0.0
    %5609 = vmatprep.subr.mxu0 0.0
    %5610 = vmatpush1.xpose.msra.mxu0 0.0
    %5611 = vmatprep.subr.mxu0 0.0
    %5612 = vmatpush1.xpose.msra.mxu0 0.0
    %5613 = vmatprep.subr.mxu0 0.0
    %5614 = vmatpush1.xpose.msra.mxu0 0.0
    %5615 = vmatprep.subr.mxu0 0.0
    %5616 = vmatpush1.xpose.msra.mxu0 0.0
    %5617 = vmatprep.subr.mxu0 0.0
    %5618 = vmatpush1.xpose.msra.mxu0 0.0
    %5619 = vmatprep.subr.mxu0 0.0
    %5620 = vmatpush1.xpose.msra.mxu0 0.0
    %5621 = vmatprep.subr.mxu0 0.0
    %5622 = vmatpush1.xpose.msra.mxu0 0.0
    %5623 = vmatprep.subr.mxu0 0.0
    %5624 = vmatpush1.xpose.msra.mxu0 0.0
    %5625 = vmatprep.subr.mxu0 0.0
    %5626 = vmatpush1.xpose.msra.mxu0 0.0
    %5627 = vmatprep.subr.mxu0 0.0
    %5628 = vmatpush1.xpose.msra.mxu0 0.0
    %5629 = vmatprep.subr.mxu0 0.0
    %5630 = vmatpush1.xpose.msra.mxu0 0.0
    %5631 = vmatprep.subr.mxu0 0.0
    %5632 = vmatpush1.xpose.msra.mxu0 0.0
    %5633 = vmatprep.subr.mxu0 0.0
    %5634 = vmatpush1.xpose.msra.mxu0 0.0
    %5635 = vmatprep.subr.mxu0 0.0
    %5636 = vmatpush1.xpose.msra.mxu0 0.0
    %5637 = vmatprep.subr.mxu0 0.0
    %5638 = vmatpush1.xpose.msra.mxu0 0.0
    %5639 = vmatprep.subr.mxu0 0.0
    %5640 = vmatpush1.xpose.msra.mxu0 0.0
    %5641 = vmatprep.subr.mxu0 0.0
    %5642 = vmatpush1.xpose.msra.mxu0 0.0
    %5643 = vmatprep.subr.mxu0 0.0
    %5644 = vmatpush1.xpose.msra.mxu0 0.0
    %5645 = vmatprep.subr.mxu0 0.0
    %5646 = vmatpush1.xpose.msra.mxu0 0.0
    %5647 = vmatprep.subr.mxu0 0.0
    %5648 = vmatpush1.xpose.msra.mxu0 0.0
    %5649 = vmatprep.subr.mxu0 0.0
    %5650 = vmatpush1.xpose.msra.mxu0 0.0
    %5651 = vmatprep.subr.mxu0 0.0
    %5652 = vmatpush1.xpose.msra.mxu0 0.0
    %5653 = vmatprep.subr.mxu0 0.0
    %5654 = vmatpush1.xpose.msra.mxu0 0.0
    %5655 = vmatprep.subr.mxu0 0.0
    %5656 = vmatpush1.xpose.msra.mxu0 0.0
    %5657 = vmatprep.subr.mxu0 0.0
    %5658 = vmatpush1.xpose.msra.mxu0 0.0
    %5659 = vmatprep.subr.mxu0 0.0
    %5660 = vmatpush1.xpose.msra.mxu0 0.0
    %5661 = vmatprep.subr.mxu0 0.0
    %5662 = vmatpush1.xpose.msra.mxu0 0.0
    %5663 = vmatprep.subr.mxu0 0.0
    %5664 = vmatpush1.xpose.msra.mxu0 0.0
    %5665 = vmatprep.subr.mxu0 0.0
    %5666 = vmatpush1.xpose.msra.mxu0 0.0
    %5667 = vmatprep.subr.mxu0 0.0
    %5668 = vmatpush1.xpose.msra.mxu0 0.0
    %5669 = vmatprep.mubr.f32.mxu0 %v5166
    %5670 = vmatmul.mubr.f32.gmra.mrb[0].mxu0 %v5165
    %v5671 = vpop.f32.mrb[0].mxu0
    %v5672 = vadd.f32 %v5602, %v5671
    %v5673 = vpop.f32.mrb[0].mxu0
    %5674 = vdwg.mxu0
    %5675 = vmatprep.subr.mxu0 %v2079
    %5676 = vmatpush1.xpose.msra.mxu0 %v2078
    %5677 = vmatprep.subr.mxu0 0.0
    %5678 = vmatpush1.xpose.msra.mxu0 0.0
    %5679 = vmatprep.subr.mxu0 0.0
    %5680 = vmatpush1.xpose.msra.mxu0 0.0
    %5681 = vmatprep.subr.mxu0 0.0
    %5682 = vmatpush1.xpose.msra.mxu0 0.0
    %5683 = vmatprep.subr.mxu0 0.0
    %5684 = vmatpush1.xpose.msra.mxu0 0.0
    %5685 = vmatprep.subr.mxu0 0.0
    %5686 = vmatpush1.xpose.msra.mxu0 0.0
    %5687 = vmatprep.subr.mxu0 0.0
    %5688 = vmatpush1.xpose.msra.mxu0 0.0
    %5689 = vmatprep.subr.mxu0 0.0
    %5690 = vmatpush1.xpose.msra.mxu0 0.0
    %5691 = vmatprep.subr.mxu0 0.0
    %5692 = vmatpush1.xpose.msra.mxu0 0.0
    %5693 = vmatprep.subr.mxu0 0.0
    %5694 = vmatpush1.xpose.msra.mxu0 0.0
    %5695 = vmatprep.subr.mxu0 0.0
    %5696 = vmatpush1.xpose.msra.mxu0 0.0
    %5697 = vmatprep.subr.mxu0 0.0
    %5698 = vmatpush1.xpose.msra.mxu0 0.0
    %5699 = vmatprep.subr.mxu0 0.0
    %5700 = vmatpush1.xpose.msra.mxu0 0.0
    %5701 = vmatprep.subr.mxu0 0.0
    %5702 = vmatpush1.xpose.msra.mxu0 0.0
    %5703 = vmatprep.subr.mxu0 0.0
    %5704 = vmatpush1.xpose.msra.mxu0 0.0
    %5705 = vmatprep.subr.mxu0 0.0
    %5706 = vmatpush1.xpose.msra.mxu0 0.0
    %5707 = vmatprep.subr.mxu0 0.0
    %5708 = vmatpush1.xpose.msra.mxu0 0.0
    %5709 = vmatprep.subr.mxu0 0.0
    %5710 = vmatpush1.xpose.msra.mxu0 0.0
    %5711 = vmatprep.subr.mxu0 0.0
    %5712 = vmatpush1.xpose.msra.mxu0 0.0
    %5713 = vmatprep.subr.mxu0 0.0
    %5714 = vmatpush1.xpose.msra.mxu0 0.0
    %5715 = vmatprep.subr.mxu0 0.0
    %5716 = vmatpush1.xpose.msra.mxu0 0.0
    %5717 = vmatprep.subr.mxu0 0.0
    %5718 = vmatpush1.xpose.msra.mxu0 0.0
    %5719 = vmatprep.subr.mxu0 0.0
    %5720 = vmatpush1.xpose.msra.mxu0 0.0
    %5721 = vmatprep.subr.mxu0 0.0
    %5722 = vmatpush1.xpose.msra.mxu0 0.0
    %5723 = vmatprep.subr.mxu0 0.0
    %5724 = vmatpush1.xpose.msra.mxu0 0.0
    %5725 = vmatprep.subr.mxu0 0.0
    %5726 = vmatpush1.xpose.msra.mxu0 0.0
    %5727 = vmatprep.subr.mxu0 0.0
    %5728 = vmatpush1.xpose.msra.mxu0 0.0
    %5729 = vmatprep.subr.mxu0 0.0
    %5730 = vmatpush1.xpose.msra.mxu0 0.0
    %5731 = vmatprep.subr.mxu0 0.0
    %5732 = vmatpush1.xpose.msra.mxu0 0.0
    %5733 = vmatprep.subr.mxu0 0.0
    %5734 = vmatpush1.xpose.msra.mxu0 0.0
    %5735 = vmatprep.subr.mxu0 0.0
    %5736 = vmatpush1.xpose.msra.mxu0 0.0
    %5737 = vmatprep.subr.mxu0 0.0
    %5738 = vmatpush1.xpose.msra.mxu0 0.0
    %5739 = vmatprep.mubr.f32.mxu0 %v5168
    %5740 = vmatmul.mubr.f32.gmra.mrb[0].mxu0 %v5167
    %v5741 = vpop.f32.mrb[0].mxu0
    %v5742 = vadd.f32 %v5672, %v5741
    %v5743 = vpop.f32.mrb[0].mxu0
    %5744 = vdwg.mxu0
    %v5745 = vmul.f32 %v5742, 0.015625
    %v5746 = vld [vmem:[%s2] sm:$0x1]
    %v5748 = vlaneseq
    %v5749 = vshrl.u32 %v5748, 7
    %v5750 = vsub.s32 0, %v5749
    %v5751 = vrot.slane %v5746, %v5750
    %v5753 = vadd.f32 %v5745, %v5751
    %v5754 = vxor.u32 %v5753, 2147483648
    %v5755 = vmul.f32 %v5754, 1.442695
    %v5756 = vpow.pop %v5755
    %v5757 = vadd.f32 %v5756, 1.0
    %v5758 = vrcp.pop %v5757
    %v5759 = vmul.f32 1.0, %v5758
    %vm5760 = vcmask 58368
    %5761 = vst.msk [vmem:[#allocation2] sm:$0x3] %vm5760, %v5759
    // Predicated region
    $region14: #{tpu_custom_call.1} parent=1 // pred_check
      _
    $region15: #{tpu_custom_call.1} parent=1 // pred_check_branch
      %5763 = sbr.rel (0) target = $region17
    $region16: #{tpu_custom_call.1} parent=1 // pred_region
      %s5765 = ssub.s32 32, 32
      %5766 = vsyncadd [#allocation3], %s5765
      %s5768 = sshll.u32 [#allocation2], 4
      %s5769 = int_to_ptr.vmem [resolvable:$true] %s5768
      %5771 = dma.vmem_to_hbm [thread:$0]  %s5769, 32, %s3, [#allocation3]
    $region17: #{tpu_custom_call.1} parent=1 // pred_fallthru
      _
    // Predicated region
    $region18: #{tpu_custom_call.1} parent=1 // pred_check
      _
    $region19: #{tpu_custom_call.1} parent=1 // pred_check_branch
      %5773 = sbr.rel (0) target = $region21
    $region20: #{tpu_custom_call.1} parent=1 // pred_region
      %5774 = dma.done [#allocation3], 32
    $region21: #{tpu_custom_call.1} parent=1 // pred_fallthru
      _
    %5775 = vsyncpa [#allocation3], 1

</llo_original>
